<compile_context>
chip_gen: v7x
topology: tpu7x:2x2x1
jax: 0.10.0
libtpu: 0.0.40
codegen_flags: <defaults>
</compile_context>

<pallas_src>
import functools
import math

import jax
import jax.numpy as jnp
from jax import lax
from jax.experimental import pallas as pl
from jax.experimental.pallas import tpu as pltpu


# ---------------------------------------------------------------------------
# Fused kernel: all LSTM layers (wavefront) + attention + fc in one invocation.
# ---------------------------------------------------------------------------
def _fused_lstm_attn_kernel(*refs, num_layers, T, B, H, O):
    """Whole forward pass, everything resident in VMEM.

    refs layout (in order):
      inputs : x_flat (T*B, D) f32,
               per layer l:
                 wih (D,4H) bf16 if l==0 else (4H,4H) bf16 zero-padded rows,
                 whh (4H,4H) bf16 zero-padded rows,
                 bias (1,4H) f32 (= b_ih + b_hh),
               wa (1,4H) f32 zero-padded, ba (1,1) f32,
               wf (1,4H) f32 zero-padded if O==1 else (H,O) f32, bf (1,O) f32
      outputs: o_ref (B, O) f32
      scratch: xp_scr (T*B, 4H) f32, seq_scr (T, B, 4H) f32
    """
    x_ref = refs[0]
    layer_refs = [refs[1 + 3 * l: 4 + 3 * l] for l in range(num_layers)]
    base = 1 + 3 * num_layers
    wa_ref, ba_ref, wf_ref, bf_ref = refs[base: base + 4]
    o_ref = refs[base + 4]
    xp_scr, seq_scr = refs[base + 5], refs[base + 6]

    G = 4 * H
    # Constant lane mask for the cell (g) gate quarter — hoisted, built once.
    lane = lax.broadcasted_iota(jnp.int32, (B, G), 1)
    g_mask = (lane >= 2 * H) & (lane < 3 * H)

    wih0_ref, whh0_ref, b0_ref = layer_refs[0]

    # Hoisted layer-0 input projection: one batched (T*B, D) x (D, 4H) GEMM
    # with the folded (b_ih + b_hh) bias.  Row ordering is t*B + b.
    xp_scr[...] = (
        jnp.dot(x_ref[...].astype(jnp.bfloat16), wih0_ref[...],
                preferred_element_type=jnp.float32)
        + b0_ref[...])

    def lstm_cell(gates, h_prev_full, c_prev_full):
        # One full-width EUP pass over the (B, 4H) gates vreg:
        #   sigmoid(x) = 0.5 * tanh(x / 2) + 0.5   (i/f/o lanes)
        #   tanh(x)                                 (g lanes)
        t_in = jnp.where(g_mask, gates, gates * 0.5)
        t_out = jnp.tanh(t_in)
        act = jnp.where(g_mask, t_out, 0.5 * t_out + 0.5)   # [ i | f | g | o ]
        # Align the f/g/o quarters onto the i quarter's lanes via XLU rolls
        # (roll(x, s): out[j] = in[(j - s) mod 4H]).
        f_al = pltpu.roll(act, shift=3 * H, axis=1)
        g_al = pltpu.roll(act, shift=2 * H, axis=1)
        o_al = pltpu.roll(act, shift=1 * H, axis=1)
        # Only lanes [0, H) are meaningful; the rest are bounded garbage that
        # is killed by the zero-padded weight rows / attention weights later.
        c_new = f_al * c_prev_full + act * g_al
        h_new = o_al * jnp.tanh(c_new)
        return h_new, c_new

    zeros = jnp.zeros((B, G), jnp.float32)
    h = [zeros] * num_layers
    c = [zeros] * num_layers

    # Wavefront schedule: iteration s runs layer l on timestep t = s - l, so
    # layer-l step t and layer-(l+1) step t-1 share an iteration and their
    # matmul/EUP chains overlap.  Layers processed top-down so h[l-1] is still
    # the previous wavefront step's output when layer l consumes it.
    for s in range(T + num_layers - 1):
        for l in range(num_layers - 1, -1, -1):
            t = s - l
            if t < 0 or t >= T:
                continue
            if l == 0:
                gates = xp_scr[pl.ds(t * B, B), :] + jnp.dot(
                    h[0].astype(jnp.bfloat16), whh0_ref[...],
                    preferred_element_type=jnp.float32)
            else:
                wih_ref, whh_ref, b_ref = layer_refs[l]
                # Both dots are independent (overlap); zero-padded rows make
                # the full-width h usable directly (no lane extract).
                gates = (jnp.dot(h[l - 1].astype(jnp.bfloat16), wih_ref[...],
                                 preferred_element_type=jnp.float32)
                         + jnp.dot(h[l].astype(jnp.bfloat16), whh_ref[...],
                                   preferred_element_type=jnp.float32)
                         + b_ref[...])
            h[l], c[l] = lstm_cell(gates, h[l], c[l])
            if l == num_layers - 1:
                seq_scr[t] = h[l]        # (B, 4H) — one unmasked vreg store

    # ---- attention (softmax over time) + fc, full-width / padded weights ----
    h_seq = seq_scr[...]                                           # (T, B, 4H)
    scores = (jnp.sum(h_seq * wa_ref[...], axis=-1, keepdims=True)
              + ba_ref[...])                                       # (T, B, 1)
    m = jnp.max(scores, axis=0, keepdims=True)
    e = jnp.exp(scores - m)
    attn = e * pl.reciprocal(jnp.sum(e, axis=0, keepdims=True), approx=True)
    ctx = jnp.sum(attn * h_seq, axis=0)                            # (B, 4H)
    # dropout = identity (eval mode), then fc.
    if O == 1:
        # VPU multiply + lane reduce (w_fc zero-padded to 4H lanes): avoids a
        # tail N=1 MXU push/pop on the dependency chain.
        out = jnp.sum(ctx * wf_ref[...], axis=-1, keepdims=True) + bf_ref[...]
    else:
        out = (jnp.dot(ctx[:, :H], wf_ref[...],
                       preferred_element_type=jnp.float32) + bf_ref[...])
    o_ref[...] = out


# ---------------------------------------------------------------------------
# One-time parameter prep (hoisted out of the jitted forward): transposes,
# bias folding, zero-padding, bf16 casts.
# ---------------------------------------------------------------------------
def prepare_params(params):
    lstm = params["lstm"]
    H = lstm[0][1].shape[1]            # w_hh: (4H, H)
    G = 4 * H
    layers = []
    for layer, (w_ih, w_hh, b_ih, b_hh) in enumerate(lstm):
        in_dim = w_ih.shape[1]
        wih_t = jnp.transpose(w_ih).astype(jnp.bfloat16)          # (in, 4H)
        if layer > 0:
            # Zero-pad rows to (4H, 4H) so the full-width h feeds the dot.
            wih_t = jnp.zeros((G, G), jnp.bfloat16).at[:in_dim, :].set(wih_t)
        whh_pad = jnp.zeros((G, G), jnp.bfloat16).at[:H, :].set(
            jnp.transpose(w_hh).astype(jnp.bfloat16))
        bias = (b_ih + b_hh).reshape(1, G).astype(jnp.float32)
        layers.append((wih_t, whh_pad, bias))

    wa = jnp.zeros((1, G), jnp.float32).at[:, :H].set(
        params["w_attn"].reshape(1, H).astype(jnp.float32))
    ba = params["b_attn"].reshape(1, 1).astype(jnp.float32)
    w_fc = params["w_fc"]
    O = w_fc.shape[0]
    if O == 1:
        wf = jnp.zeros((1, G), jnp.float32).at[:, :H].set(
            w_fc.reshape(1, H).astype(jnp.float32))
    else:
        wf = jnp.transpose(w_fc).astype(jnp.float32)              # (H, O)
    bf = params["b_fc"].reshape(1, O).astype(jnp.float32)
    return {"layers": layers, "wa": wa, "ba": ba, "wf": wf, "bf": bf}


def lstm_with_attention_forward(x_btd, prepped, *, hidden_size):
    """Equivalent of LSTMWithAttention.forward (eval mode). x_btd: (B, T, D)."""
    B, T, D = x_btd.shape
    H = hidden_size
    G = 4 * H
    layers = prepped["layers"]
    num_layers = len(layers)
    O = prepped["bf"].shape[1]

    # Time-major, flattened rows (row = t*B + b) so the hoisted layer-0 input
    # projection is a single (T*B, D) x (D, 4H) GEMM.
    x_flat = jnp.transpose(x_btd, (1, 0, 2)).reshape(T * B, D)

    inputs = [x_flat]
    for lp in layers:
        inputs.extend(lp)
    inputs += [prepped["wa"], prepped["ba"], prepped["wf"], prepped["bf"]]

    kernel = functools.partial(_fused_lstm_attn_kernel,
                               num_layers=num_layers, T=T, B=B, H=H, O=O)
    vmem = pl.BlockSpec(memory_space=pltpu.MemorySpace.VMEM)

    return pl.pallas_call(
        kernel,
        out_shape=jax.ShapeDtypeStruct((B, O), jnp.float32),
        in_specs=[vmem] * len(inputs),       # whole arrays, no double-buffering
        out_specs=vmem,
        scratch_shapes=[
            pltpu.VMEM((T * B, G), jnp.float32),   # hoisted gate pre-activations
            pltpu.VMEM((T, B, G), jnp.float32),    # last-layer h sequence
        ],
    )(*inputs)


# ---------------------------------------------------------------------------
# Deterministic parameter init (xavier_uniform weights, zero biases,
# mirroring LSTMWithAttention.init_weights()).
# ---------------------------------------------------------------------------
def _xavier_uniform(key, shape):
    fan_out, fan_in = shape
    limit = math.sqrt(6.0 / (fan_in + fan_out))
    return jax.random.uniform(key, shape, jnp.float32, minval=-limit, maxval=limit)


def make_params(key, input_size, hidden_size, num_layers, output_size):
    keys = jax.random.split(key, 2 * num_layers + 2)
    lstm = []
    for layer in range(num_layers):
        in_dim = input_size if layer == 0 else hidden_size
        w_ih = _xavier_uniform(keys[2 * layer], (4 * hidden_size, in_dim))
        w_hh = _xavier_uniform(keys[2 * layer + 1], (4 * hidden_size, hidden_size))
        b_ih = jnp.zeros((4 * hidden_size,), jnp.float32)
        b_hh = jnp.zeros((4 * hidden_size,), jnp.float32)
        lstm.append((w_ih, w_hh, b_ih, b_hh))
    w_attn = _xavier_uniform(keys[-2], (1, hidden_size))
    b_attn = jnp.zeros((1,), jnp.float32)
    w_fc = _xavier_uniform(keys[-1], (output_size, hidden_size))
    b_fc = jnp.zeros((output_size,), jnp.float32)
    return {"lstm": lstm, "w_attn": w_attn, "b_attn": b_attn,
            "w_fc": w_fc, "b_fc": b_fc}


# ---------------------------------------------------------------------------
# Pure-JAX f32 reference (for correctness check only).
# ---------------------------------------------------------------------------
def reference_forward(x_btd, params):
    B = x_btd.shape[0]
    h_seq = jnp.transpose(x_btd, (1, 0, 2))
    for (w_ih, w_hh, b_ih, b_hh) in params["lstm"]:
        H = w_hh.shape[1]

        def step(carry, xt, w_ih=w_ih, w_hh=w_hh, b_ih=b_ih, b_hh=b_hh):
            h, c = carry
            gates = xt @ w_ih.T + h @ w_hh.T + b_ih + b_hh
            i, f, g, o = jnp.split(gates, 4, axis=-1)
            i, f, o = jax.nn.sigmoid(i), jax.nn.sigmoid(f), jax.nn.sigmoid(o)
            g = jnp.tanh(g)
            c = f * c + i * g
            h = o * jnp.tanh(c)
            return (h, c), h

        init = (jnp.zeros((B, H), jnp.float32), jnp.zeros((B, H), jnp.float32))
        _, h_seq = jax.lax.scan(step, init, h_seq)
    lstm_out = jnp.transpose(h_seq, (1, 0, 2))                    # (B, T, H)
    scores = lstm_out @ params["w_attn"].T + params["b_attn"]     # (B, T, 1)
    w = jax.nn.softmax(scores, axis=1)
    ctx = jnp.sum(w * lstm_out, axis=1)                           # (B, H)
    return ctx @ params["w_fc"].T + params["b_fc"]


if __name__ == "__main__":
    # Small shapes consistent with the module: batch=8, seq=8, features=16,
    # hidden=32, num_layers=2, output_size=1.
    B, T, D = 8, 8, 16
    HIDDEN, NUM_LAYERS, OUT = 32, 2, 1

    key = jax.random.PRNGKey(0)
    k_x, k_p = jax.random.split(key)
    x = jax.random.normal(k_x, (B, T, D), jnp.float32)
    params = make_params(k_p, D, HIDDEN, NUM_LAYERS, OUT)

    prepped = prepare_params(params)          # one-time layout / dtype prep
    fwd = jax.jit(functools.partial(lstm_with_attention_forward,
                                    hidden_size=HIDDEN))
    out = jax.block_until_ready(fwd(x, prepped))

    ref = jax.block_until_ready(reference_forward(x, params))
    assert out.shape == (B, OUT)
    # bf16 MXU operands + approx-reciprocal softmax -> relaxed tolerance
    # against the f32 reference (f32 accumulation keeps the recurrence stable).
    assert jnp.allclose(out, ref, atol=5e-2, rtol=5e-2), (out, ref)

    print("KERNEL_OK")
</pallas_src>

<mosaic_0001>
module attributes {stable_mosaic.version = 11 : i64} {
  func.func @_fused_lstm_attn_kernel(%arg0: memref<64x16xf32, #tpu.memory_space<vmem>>, %arg1: memref<16x128xbf16, #tpu.memory_space<vmem>>, %arg2: memref<128x128xbf16, #tpu.memory_space<vmem>>, %arg3: memref<1x128xf32, #tpu.memory_space<vmem>>, %arg4: memref<128x128xbf16, #tpu.memory_space<vmem>>, %arg5: memref<128x128xbf16, #tpu.memory_space<vmem>>, %arg6: memref<1x128xf32, #tpu.memory_space<vmem>>, %arg7: memref<1x128xf32, #tpu.memory_space<vmem>>, %arg8: memref<1x1xf32, #tpu.memory_space<vmem>>, %arg9: memref<1x128xf32, #tpu.memory_space<vmem>>, %arg10: memref<1x1xf32, #tpu.memory_space<vmem>>, %arg11: memref<8x1xf32, #tpu.memory_space<vmem>>, %arg12: memref<64x128xf32, #tpu.memory_space<vmem>>, %arg13: memref<8x8x128xf32, #tpu.memory_space<vmem>>) attributes {dimension_semantics = [], scalar_prefetch = 0 : i64, scratch_operands = 2 : i64, tpu.core_type = #tpu.core_type<tc>} {
    %0 = tpu.iota {dimensions = array<i32: 1>} : vector<8x128xi32>
    %c64_i32 = arith.constant 64 : i32
    %1 = vector.broadcast %c64_i32 : i32 to vector<8x128xi32>
    %2 = arith.cmpi sge, %0, %1 : vector<8x128xi32>
    %c96_i32 = arith.constant 96 : i32
    %3 = vector.broadcast %c96_i32 : i32 to vector<8x128xi32>
    %4 = arith.cmpi slt, %0, %3 : vector<8x128xi32>
    %5 = arith.andi %2, %4 : vector<8x128xi1>
    %c0 = arith.constant 0 : index
    %c0_0 = arith.constant 0 : index
    %6 = vector.load %arg0[%c0, %c0_0] : memref<64x16xf32, #tpu.memory_space<vmem>>, vector<64x16xf32>
    %7 = arith.truncf %6 : vector<64x16xf32> to vector<64x16xbf16>
    %c0_1 = arith.constant 0 : index
    %c0_2 = arith.constant 0 : index
    %8 = vector.load %arg1[%c0_1, %c0_2] : memref<16x128xbf16, #tpu.memory_space<vmem>>, vector<16x128xbf16>
    %cst = arith.constant dense<0.000000e+00> : vector<64x128xf32>
    %9 = tpu.matmul %7, %8, %cst {dimension_numbers = #tpu.dot_dimension_numbers<[1], [0], [0], [1], [0, 0, 1, 1], [], []>} : vector<64x16xbf16>, vector<16x128xbf16>, vector<64x128xf32> -> vector<64x128xf32>
    %c0_3 = arith.constant 0 : index
    %c0_4 = arith.constant 0 : index
    %10 = vector.load %arg3[%c0_3, %c0_4] : memref<1x128xf32, #tpu.memory_space<vmem>>, vector<1x128xf32>
    %11 = vector.broadcast %10 : vector<1x128xf32> to vector<64x128xf32>
    %12 = arith.addf %9, %11 : vector<64x128xf32>
    %c0_5 = arith.constant 0 : index
    %c0_6 = arith.constant 0 : index
    %13 = vector.load %arg12[%c0_5, %c0_6] : memref<64x128xf32, #tpu.memory_space<vmem>>, vector<64x128xf32>
    tpu.vector_store %arg12[%c0_5, %c0_6], %12 {strides = array<i32>} : memref<64x128xf32, #tpu.memory_space<vmem>>, vector<64x128xf32>,
    %cst_7 = arith.constant 0.000000e+00 : f32
    %14 = vector.broadcast %cst_7 : f32 to vector<8x128xf32>
    %c0_8 = arith.constant 0 : index
    %c0_9 = arith.constant 0 : index
    %15 = vector.load %arg12[%c0_8, %c0_9] : memref<64x128xf32, #tpu.memory_space<vmem>>, vector<8x128xf32>
    %16 = arith.truncf %14 : vector<8x128xf32> to vector<8x128xbf16>
    %c0_10 = arith.constant 0 : index
    %c0_11 = arith.constant 0 : index
    %17 = vector.load %arg2[%c0_10, %c0_11] : memref<128x128xbf16, #tpu.memory_space<vmem>>, vector<128x128xbf16>
    %cst_12 = arith.constant dense<0.000000e+00> : vector<8x128xf32>
    %18 = tpu.matmul %16, %17, %cst_12 {dimension_numbers = #tpu.dot_dimension_numbers<[1], [0], [0], [1], [0, 0, 1, 1], [], []>} : vector<8x128xbf16>, vector<128x128xbf16>, vector<8x128xf32> -> vector<8x128xf32>
    %19 = arith.addf %15, %18 : vector<8x128xf32>
    %cst_13 = arith.constant 5.000000e-01 : f32
    %20 = vector.broadcast %cst_13 : f32 to vector<8x128xf32>
    %21 = arith.mulf %19, %20 : vector<8x128xf32>
    %22 = arith.select %5, %19, %21 : vector<8x128xi1>, vector<8x128xf32>
    %23 = math.tanh %22 : vector<8x128xf32>
    %cst_14 = arith.constant 5.000000e-01 : f32
    %24 = vector.broadcast %cst_14 : f32 to vector<8x128xf32>
    %25 = arith.mulf %24, %23 : vector<8x128xf32>
    %cst_15 = arith.constant 5.000000e-01 : f32
    %26 = vector.broadcast %cst_15 : f32 to vector<8x128xf32>
    %27 = arith.addf %25, %26 : vector<8x128xf32>
    %28 = arith.select %5, %23, %27 : vector<8x128xi1>, vector<8x128xf32>
    %c96_i32_16 = arith.constant 96 : i32
    %29 = tpu.dynamic_rotate %28 by %c96_i32_16 dim 1 : vector<8x128xf32>, i32 -> vector<8x128xf32>
    %c64_i32_17 = arith.constant 64 : i32
    %30 = tpu.dynamic_rotate %28 by %c64_i32_17 dim 1 : vector<8x128xf32>, i32 -> vector<8x128xf32>
    %c32_i32 = arith.constant 32 : i32
    %31 = tpu.dynamic_rotate %28 by %c32_i32 dim 1 : vector<8x128xf32>, i32 -> vector<8x128xf32>
    %32 = arith.mulf %29, %14 : vector<8x128xf32>
    %33 = arith.mulf %28, %30 : vector<8x128xf32>
    %34 = arith.addf %32, %33 : vector<8x128xf32>
    %35 = math.tanh %34 : vector<8x128xf32>
    %36 = arith.mulf %31, %35 : vector<8x128xf32>
    %37 = arith.truncf %36 : vector<8x128xf32> to vector<8x128xbf16>
    %c0_18 = arith.constant 0 : index
    %c0_19 = arith.constant 0 : index
    %38 = vector.load %arg4[%c0_18, %c0_19] : memref<128x128xbf16, #tpu.memory_space<vmem>>, vector<128x128xbf16>
    %cst_20 = arith.constant dense<0.000000e+00> : vector<8x128xf32>
    %39 = tpu.matmul %37, %38, %cst_20 {dimension_numbers = #tpu.dot_dimension_numbers<[1], [0], [0], [1], [0, 0, 1, 1], [], []>} : vector<8x128xbf16>, vector<128x128xbf16>, vector<8x128xf32> -> vector<8x128xf32>
    %40 = arith.truncf %14 : vector<8x128xf32> to vector<8x128xbf16>
    %c0_21 = arith.constant 0 : index
    %c0_22 = arith.constant 0 : index
    %41 = vector.load %arg5[%c0_21, %c0_22] : memref<128x128xbf16, #tpu.memory_space<vmem>>, vector<128x128xbf16>
    %cst_23 = arith.constant dense<0.000000e+00> : vector<8x128xf32>
    %42 = tpu.matmul %40, %41, %cst_23 {dimension_numbers = #tpu.dot_dimension_numbers<[1], [0], [0], [1], [0, 0, 1, 1], [], []>} : vector<8x128xbf16>, vector<128x128xbf16>, vector<8x128xf32> -> vector<8x128xf32>
    %43 = arith.addf %39, %42 : vector<8x128xf32>
    %c0_24 = arith.constant 0 : index
    %c0_25 = arith.constant 0 : index
    %44 = vector.load %arg6[%c0_24, %c0_25] : memref<1x128xf32, #tpu.memory_space<vmem>>, vector<1x128xf32>
    %45 = vector.broadcast %44 : vector<1x128xf32> to vector<8x128xf32>
    %46 = arith.addf %43, %45 : vector<8x128xf32>
    %cst_26 = arith.constant 5.000000e-01 : f32
    %47 = vector.broadcast %cst_26 : f32 to vector<8x128xf32>
    %48 = arith.mulf %46, %47 : vector<8x128xf32>
    %49 = arith.select %5, %46, %48 : vector<8x128xi1>, vector<8x128xf32>
    %50 = math.tanh %49 : vector<8x128xf32>
    %cst_27 = arith.constant 5.000000e-01 : f32
    %51 = vector.broadcast %cst_27 : f32 to vector<8x128xf32>
    %52 = arith.mulf %51, %50 : vector<8x128xf32>
    %cst_28 = arith.constant 5.000000e-01 : f32
    %53 = vector.broadcast %cst_28 : f32 to vector<8x128xf32>
    %54 = arith.addf %52, %53 : vector<8x128xf32>
    %55 = arith.select %5, %50, %54 : vector<8x128xi1>, vector<8x128xf32>
    %c96_i32_29 = arith.constant 96 : i32
    %56 = tpu.dynamic_rotate %55 by %c96_i32_29 dim 1 : vector<8x128xf32>, i32 -> vector<8x128xf32>
    %c64_i32_30 = arith.constant 64 : i32
    %57 = tpu.dynamic_rotate %55 by %c64_i32_30 dim 1 : vector<8x128xf32>, i32 -> vector<8x128xf32>
    %c32_i32_31 = arith.constant 32 : i32
    %58 = tpu.dynamic_rotate %55 by %c32_i32_31 dim 1 : vector<8x128xf32>, i32 -> vector<8x128xf32>
    %59 = arith.mulf %56, %14 : vector<8x128xf32>
    %60 = arith.mulf %55, %57 : vector<8x128xf32>
    %61 = arith.addf %59, %60 : vector<8x128xf32>
    %62 = math.tanh %61 : vector<8x128xf32>
    %63 = arith.mulf %58, %62 : vector<8x128xf32>
    %c0_32 = arith.constant 0 : index
    %c0_33 = arith.constant 0 : index
    %c0_34 = arith.constant 0 : index
    %64 = vector.load %arg13[%c0_32, %c0_33, %c0_34] : memref<8x8x128xf32, #tpu.memory_space<vmem>>, vector<1x8x128xf32>
    %65 = vector.shape_cast %64 : vector<1x8x128xf32> to vector<8x128xf32>
    %66 = vector.shape_cast %63 : vector<8x128xf32> to vector<1x8x128xf32>
    tpu.vector_store %arg13[%c0_32, %c0_33, %c0_34], %66 {strides = array<i32>} : memref<8x8x128xf32, #tpu.memory_space<vmem>>, vector<1x8x128xf32>,
    %c8 = arith.constant 8 : index
    %c0_35 = arith.constant 0 : index
    %67 = vector.load %arg12[%c8, %c0_35] : memref<64x128xf32, #tpu.memory_space<vmem>>, vector<8x128xf32>
    %68 = arith.truncf %36 : vector<8x128xf32> to vector<8x128xbf16>
    %c0_36 = arith.constant 0 : index
    %c0_37 = arith.constant 0 : index
    %69 = vector.load %arg2[%c0_36, %c0_37] : memref<128x128xbf16, #tpu.memory_space<vmem>>, vector<128x128xbf16>
    %cst_38 = arith.constant dense<0.000000e+00> : vector<8x128xf32>
    %70 = tpu.matmul %68, %69, %cst_38 {dimension_numbers = #tpu.dot_dimension_numbers<[1], [0], [0], [1], [0, 0, 1, 1], [], []>} : vector<8x128xbf16>, vector<128x128xbf16>, vector<8x128xf32> -> vector<8x128xf32>
    %71 = arith.addf %67, %70 : vector<8x128xf32>
    %cst_39 = arith.constant 5.000000e-01 : f32
    %72 = vector.broadcast %cst_39 : f32 to vector<8x128xf32>
    %73 = arith.mulf %71, %72 : vector<8x128xf32>
    %74 = arith.select %5, %71, %73 : vector<8x128xi1>, vector<8x128xf32>
    %75 = math.tanh %74 : vector<8x128xf32>
    %cst_40 = arith.constant 5.000000e-01 : f32
    %76 = vector.broadcast %cst_40 : f32 to vector<8x128xf32>
    %77 = arith.mulf %76, %75 : vector<8x128xf32>
    %cst_41 = arith.constant 5.000000e-01 : f32
    %78 = vector.broadcast %cst_41 : f32 to vector<8x128xf32>
    %79 = arith.addf %77, %78 : vector<8x128xf32>
    %80 = arith.select %5, %75, %79 : vector<8x128xi1>, vector<8x128xf32>
    %c96_i32_42 = arith.constant 96 : i32
    %81 = tpu.dynamic_rotate %80 by %c96_i32_42 dim 1 : vector<8x128xf32>, i32 -> vector<8x128xf32>
    %c64_i32_43 = arith.constant 64 : i32
    %82 = tpu.dynamic_rotate %80 by %c64_i32_43 dim 1 : vector<8x128xf32>, i32 -> vector<8x128xf32>
    %c32_i32_44 = arith.constant 32 : i32
    %83 = tpu.dynamic_rotate %80 by %c32_i32_44 dim 1 : vector<8x128xf32>, i32 -> vector<8x128xf32>
    %84 = arith.mulf %81, %34 : vector<8x128xf32>
    %85 = arith.mulf %80, %82 : vector<8x128xf32>
    %86 = arith.addf %84, %85 : vector<8x128xf32>
    %87 = math.tanh %86 : vector<8x128xf32>
    %88 = arith.mulf %83, %87 : vector<8x128xf32>
    %89 = arith.truncf %88 : vector<8x128xf32> to vector<8x128xbf16>
    %c0_45 = arith.constant 0 : index
    %c0_46 = arith.constant 0 : index
    %90 = vector.load %arg4[%c0_45, %c0_46] : memref<128x128xbf16, #tpu.memory_space<vmem>>, vector<128x128xbf16>
    %cst_47 = arith.constant dense<0.000000e+00> : vector<8x128xf32>
    %91 = tpu.matmul %89, %90, %cst_47 {dimension_numbers = #tpu.dot_dimension_numbers<[1], [0], [0], [1], [0, 0, 1, 1], [], []>} : vector<8x128xbf16>, vector<128x128xbf16>, vector<8x128xf32> -> vector<8x128xf32>
    %92 = arith.truncf %63 : vector<8x128xf32> to vector<8x128xbf16>
    %c0_48 = arith.constant 0 : index
    %c0_49 = arith.constant 0 : index
    %93 = vector.load %arg5[%c0_48, %c0_49] : memref<128x128xbf16, #tpu.memory_space<vmem>>, vector<128x128xbf16>
    %cst_50 = arith.constant dense<0.000000e+00> : vector<8x128xf32>
    %94 = tpu.matmul %92, %93, %cst_50 {dimension_numbers = #tpu.dot_dimension_numbers<[1], [0], [0], [1], [0, 0, 1, 1], [], []>} : vector<8x128xbf16>, vector<128x128xbf16>, vector<8x128xf32> -> vector<8x128xf32>
    %95 = arith.addf %91, %94 : vector<8x128xf32>
    %c0_51 = arith.constant 0 : index
    %c0_52 = arith.constant 0 : index
    %96 = vector.load %arg6[%c0_51, %c0_52] : memref<1x128xf32, #tpu.memory_space<vmem>>, vector<1x128xf32>
    %97 = vector.broadcast %96 : vector<1x128xf32> to vector<8x128xf32>
    %98 = arith.addf %95, %97 : vector<8x128xf32>
    %cst_53 = arith.constant 5.000000e-01 : f32
    %99 = vector.broadcast %cst_53 : f32 to vector<8x128xf32>
    %100 = arith.mulf %98, %99 : vector<8x128xf32>
    %101 = arith.select %5, %98, %100 : vector<8x128xi1>, vector<8x128xf32>
    %102 = math.tanh %101 : vector<8x128xf32>
    %cst_54 = arith.constant 5.000000e-01 : f32
    %103 = vector.broadcast %cst_54 : f32 to vector<8x128xf32>
    %104 = arith.mulf %103, %102 : vector<8x128xf32>
    %cst_55 = arith.constant 5.000000e-01 : f32
    %105 = vector.broadcast %cst_55 : f32 to vector<8x128xf32>
    %106 = arith.addf %104, %105 : vector<8x128xf32>
    %107 = arith.select %5, %102, %106 : vector<8x128xi1>, vector<8x128xf32>
    %c96_i32_56 = arith.constant 96 : i32
    %108 = tpu.dynamic_rotate %107 by %c96_i32_56 dim 1 : vector<8x128xf32>, i32 -> vector<8x128xf32>
    %c64_i32_57 = arith.constant 64 : i32
    %109 = tpu.dynamic_rotate %107 by %c64_i32_57 dim 1 : vector<8x128xf32>, i32 -> vector<8x128xf32>
    %c32_i32_58 = arith.constant 32 : i32
    %110 = tpu.dynamic_rotate %107 by %c32_i32_58 dim 1 : vector<8x128xf32>, i32 -> vector<8x128xf32>
    %111 = arith.mulf %108, %61 : vector<8x128xf32>
    %112 = arith.mulf %107, %109 : vector<8x128xf32>
    %113 = arith.addf %111, %112 : vector<8x128xf32>
    %114 = math.tanh %113 : vector<8x128xf32>
    %115 = arith.mulf %110, %114 : vector<8x128xf32>
    %c1 = arith.constant 1 : index
    %c0_59 = arith.constant 0 : index
    %c0_60 = arith.constant 0 : index
    %116 = vector.load %arg13[%c1, %c0_59, %c0_60] : memref<8x8x128xf32, #tpu.memory_space<vmem>>, vector<1x8x128xf32>
    %117 = vector.shape_cast %116 : vector<1x8x128xf32> to vector<8x128xf32>
    %118 = vector.shape_cast %115 : vector<8x128xf32> to vector<1x8x128xf32>
    tpu.vector_store %arg13[%c1, %c0_59, %c0_60], %118 {strides = array<i32>} : memref<8x8x128xf32, #tpu.memory_space<vmem>>, vector<1x8x128xf32>,
    %c16 = arith.constant 16 : index
    %c0_61 = arith.constant 0 : index
    %119 = vector.load %arg12[%c16, %c0_61] : memref<64x128xf32, #tpu.memory_space<vmem>>, vector<8x128xf32>
    %120 = arith.truncf %88 : vector<8x128xf32> to vector<8x128xbf16>
    %c0_62 = arith.constant 0 : index
    %c0_63 = arith.constant 0 : index
    %121 = vector.load %arg2[%c0_62, %c0_63] : memref<128x128xbf16, #tpu.memory_space<vmem>>, vector<128x128xbf16>
    %cst_64 = arith.constant dense<0.000000e+00> : vector<8x128xf32>
    %122 = tpu.matmul %120, %121, %cst_64 {dimension_numbers = #tpu.dot_dimension_numbers<[1], [0], [0], [1], [0, 0, 1, 1], [], []>} : vector<8x128xbf16>, vector<128x128xbf16>, vector<8x128xf32> -> vector<8x128xf32>
    %123 = arith.addf %119, %122 : vector<8x128xf32>
    %cst_65 = arith.constant 5.000000e-01 : f32
    %124 = vector.broadcast %cst_65 : f32 to vector<8x128xf32>
    %125 = arith.mulf %123, %124 : vector<8x128xf32>
    %126 = arith.select %5, %123, %125 : vector<8x128xi1>, vector<8x128xf32>
    %127 = math.tanh %126 : vector<8x128xf32>
    %cst_66 = arith.constant 5.000000e-01 : f32
    %128 = vector.broadcast %cst_66 : f32 to vector<8x128xf32>
    %129 = arith.mulf %128, %127 : vector<8x128xf32>
    %cst_67 = arith.constant 5.000000e-01 : f32
    %130 = vector.broadcast %cst_67 : f32 to vector<8x128xf32>
    %131 = arith.addf %129, %130 : vector<8x128xf32>
    %132 = arith.select %5, %127, %131 : vector<8x128xi1>, vector<8x128xf32>
    %c96_i32_68 = arith.constant 96 : i32
    %133 = tpu.dynamic_rotate %132 by %c96_i32_68 dim 1 : vector<8x128xf32>, i32 -> vector<8x128xf32>
    %c64_i32_69 = arith.constant 64 : i32
    %134 = tpu.dynamic_rotate %132 by %c64_i32_69 dim 1 : vector<8x128xf32>, i32 -> vector<8x128xf32>
    %c32_i32_70 = arith.constant 32 : i32
    %135 = tpu.dynamic_rotate %132 by %c32_i32_70 dim 1 : vector<8x128xf32>, i32 -> vector<8x128xf32>
    %136 = arith.mulf %133, %86 : vector<8x128xf32>
    %137 = arith.mulf %132, %134 : vector<8x128xf32>
    %138 = arith.addf %136, %137 : vector<8x128xf32>
    %139 = math.tanh %138 : vector<8x128xf32>
    %140 = arith.mulf %135, %139 : vector<8x128xf32>
    %141 = arith.truncf %140 : vector<8x128xf32> to vector<8x128xbf16>
    %c0_71 = arith.constant 0 : index
    %c0_72 = arith.constant 0 : index
    %142 = vector.load %arg4[%c0_71, %c0_72] : memref<128x128xbf16, #tpu.memory_space<vmem>>, vector<128x128xbf16>
    %cst_73 = arith.constant dense<0.000000e+00> : vector<8x128xf32>
    %143 = tpu.matmul %141, %142, %cst_73 {dimension_numbers = #tpu.dot_dimension_numbers<[1], [0], [0], [1], [0, 0, 1, 1], [], []>} : vector<8x128xbf16>, vector<128x128xbf16>, vector<8x128xf32> -> vector<8x128xf32>
    %144 = arith.truncf %115 : vector<8x128xf32> to vector<8x128xbf16>
    %c0_74 = arith.constant 0 : index
    %c0_75 = arith.constant 0 : index
    %145 = vector.load %arg5[%c0_74, %c0_75] : memref<128x128xbf16, #tpu.memory_space<vmem>>, vector<128x128xbf16>
    %cst_76 = arith.constant dense<0.000000e+00> : vector<8x128xf32>
    %146 = tpu.matmul %144, %145, %cst_76 {dimension_numbers = #tpu.dot_dimension_numbers<[1], [0], [0], [1], [0, 0, 1, 1], [], []>} : vector<8x128xbf16>, vector<128x128xbf16>, vector<8x128xf32> -> vector<8x128xf32>
    %147 = arith.addf %143, %146 : vector<8x128xf32>
    %c0_77 = arith.constant 0 : index
    %c0_78 = arith.constant 0 : index
    %148 = vector.load %arg6[%c0_77, %c0_78] : memref<1x128xf32, #tpu.memory_space<vmem>>, vector<1x128xf32>
    %149 = vector.broadcast %148 : vector<1x128xf32> to vector<8x128xf32>
    %150 = arith.addf %147, %149 : vector<8x128xf32>
    %cst_79 = arith.constant 5.000000e-01 : f32
    %151 = vector.broadcast %cst_79 : f32 to vector<8x128xf32>
    %152 = arith.mulf %150, %151 : vector<8x128xf32>
    %153 = arith.select %5, %150, %152 : vector<8x128xi1>, vector<8x128xf32>
    %154 = math.tanh %153 : vector<8x128xf32>
    %cst_80 = arith.constant 5.000000e-01 : f32
    %155 = vector.broadcast %cst_80 : f32 to vector<8x128xf32>
    %156 = arith.mulf %155, %154 : vector<8x128xf32>
    %cst_81 = arith.constant 5.000000e-01 : f32
    %157 = vector.broadcast %cst_81 : f32 to vector<8x128xf32>
    %158 = arith.addf %156, %157 : vector<8x128xf32>
    %159 = arith.select %5, %154, %158 : vector<8x128xi1>, vector<8x128xf32>
    %c96_i32_82 = arith.constant 96 : i32
    %160 = tpu.dynamic_rotate %159 by %c96_i32_82 dim 1 : vector<8x128xf32>, i32 -> vector<8x128xf32>
    %c64_i32_83 = arith.constant 64 : i32
    %161 = tpu.dynamic_rotate %159 by %c64_i32_83 dim 1 : vector<8x128xf32>, i32 -> vector<8x128xf32>
    %c32_i32_84 = arith.constant 32 : i32
    %162 = tpu.dynamic_rotate %159 by %c32_i32_84 dim 1 : vector<8x128xf32>, i32 -> vector<8x128xf32>
    %163 = arith.mulf %160, %113 : vector<8x128xf32>
    %164 = arith.mulf %159, %161 : vector<8x128xf32>
    %165 = arith.addf %163, %164 : vector<8x128xf32>
    %166 = math.tanh %165 : vector<8x128xf32>
    %167 = arith.mulf %162, %166 : vector<8x128xf32>
    %c2 = arith.constant 2 : index
    %c0_85 = arith.constant 0 : index
    %c0_86 = arith.constant 0 : index
    %168 = vector.load %arg13[%c2, %c0_85, %c0_86] : memref<8x8x128xf32, #tpu.memory_space<vmem>>, vector<1x8x128xf32>
    %169 = vector.shape_cast %168 : vector<1x8x128xf32> to vector<8x128xf32>
    %170 = vector.shape_cast %167 : vector<8x128xf32> to vector<1x8x128xf32>
    tpu.vector_store %arg13[%c2, %c0_85, %c0_86], %170 {strides = array<i32>} : memref<8x8x128xf32, #tpu.memory_space<vmem>>, vector<1x8x128xf32>,
    %c24 = arith.constant 24 : index
    %c0_87 = arith.constant 0 : index
    %171 = vector.load %arg12[%c24, %c0_87] : memref<64x128xf32, #tpu.memory_space<vmem>>, vector<8x128xf32>
    %172 = arith.truncf %140 : vector<8x128xf32> to vector<8x128xbf16>
    %c0_88 = arith.constant 0 : index
    %c0_89 = arith.constant 0 : index
    %173 = vector.load %arg2[%c0_88, %c0_89] : memref<128x128xbf16, #tpu.memory_space<vmem>>, vector<128x128xbf16>
    %cst_90 = arith.constant dense<0.000000e+00> : vector<8x128xf32>
    %174 = tpu.matmul %172, %173, %cst_90 {dimension_numbers = #tpu.dot_dimension_numbers<[1], [0], [0], [1], [0, 0, 1, 1], [], []>} : vector<8x128xbf16>, vector<128x128xbf16>, vector<8x128xf32> -> vector<8x128xf32>
    %175 = arith.addf %171, %174 : vector<8x128xf32>
    %cst_91 = arith.constant 5.000000e-01 : f32
    %176 = vector.broadcast %cst_91 : f32 to vector<8x128xf32>
    %177 = arith.mulf %175, %176 : vector<8x128xf32>
    %178 = arith.select %5, %175, %177 : vector<8x128xi1>, vector<8x128xf32>
    %179 = math.tanh %178 : vector<8x128xf32>
    %cst_92 = arith.constant 5.000000e-01 : f32
    %180 = vector.broadcast %cst_92 : f32 to vector<8x128xf32>
    %181 = arith.mulf %180, %179 : vector<8x128xf32>
    %cst_93 = arith.constant 5.000000e-01 : f32
    %182 = vector.broadcast %cst_93 : f32 to vector<8x128xf32>
    %183 = arith.addf %181, %182 : vector<8x128xf32>
    %184 = arith.select %5, %179, %183 : vector<8x128xi1>, vector<8x128xf32>
    %c96_i32_94 = arith.constant 96 : i32
    %185 = tpu.dynamic_rotate %184 by %c96_i32_94 dim 1 : vector<8x128xf32>, i32 -> vector<8x128xf32>
    %c64_i32_95 = arith.constant 64 : i32
    %186 = tpu.dynamic_rotate %184 by %c64_i32_95 dim 1 : vector<8x128xf32>, i32 -> vector<8x128xf32>
    %c32_i32_96 = arith.constant 32 : i32
    %187 = tpu.dynamic_rotate %184 by %c32_i32_96 dim 1 : vector<8x128xf32>, i32 -> vector<8x128xf32>
    %188 = arith.mulf %185, %138 : vector<8x128xf32>
    %189 = arith.mulf %184, %186 : vector<8x128xf32>
    %190 = arith.addf %188, %189 : vector<8x128xf32>
    %191 = math.tanh %190 : vector<8x128xf32>
    %192 = arith.mulf %187, %191 : vector<8x128xf32>
    %193 = arith.truncf %192 : vector<8x128xf32> to vector<8x128xbf16>
    %c0_97 = arith.constant 0 : index
    %c0_98 = arith.constant 0 : index
    %194 = vector.load %arg4[%c0_97, %c0_98] : memref<128x128xbf16, #tpu.memory_space<vmem>>, vector<128x128xbf16>
    %cst_99 = arith.constant dense<0.000000e+00> : vector<8x128xf32>
    %195 = tpu.matmul %193, %194, %cst_99 {dimension_numbers = #tpu.dot_dimension_numbers<[1], [0], [0], [1], [0, 0, 1, 1], [], []>} : vector<8x128xbf16>, vector<128x128xbf16>, vector<8x128xf32> -> vector<8x128xf32>
    %196 = arith.truncf %167 : vector<8x128xf32> to vector<8x128xbf16>
    %c0_100 = arith.constant 0 : index
    %c0_101 = arith.constant 0 : index
    %197 = vector.load %arg5[%c0_100, %c0_101] : memref<128x128xbf16, #tpu.memory_space<vmem>>, vector<128x128xbf16>
    %cst_102 = arith.constant dense<0.000000e+00> : vector<8x128xf32>
    %198 = tpu.matmul %196, %197, %cst_102 {dimension_numbers = #tpu.dot_dimension_numbers<[1], [0], [0], [1], [0, 0, 1, 1], [], []>} : vector<8x128xbf16>, vector<128x128xbf16>, vector<8x128xf32> -> vector<8x128xf32>
    %199 = arith.addf %195, %198 : vector<8x128xf32>
    %c0_103 = arith.constant 0 : index
    %c0_104 = arith.constant 0 : index
    %200 = vector.load %arg6[%c0_103, %c0_104] : memref<1x128xf32, #tpu.memory_space<vmem>>, vector<1x128xf32>
    %201 = vector.broadcast %200 : vector<1x128xf32> to vector<8x128xf32>
    %202 = arith.addf %199, %201 : vector<8x128xf32>
    %cst_105 = arith.constant 5.000000e-01 : f32
    %203 = vector.broadcast %cst_105 : f32 to vector<8x128xf32>
    %204 = arith.mulf %202, %203 : vector<8x128xf32>
    %205 = arith.select %5, %202, %204 : vector<8x128xi1>, vector<8x128xf32>
    %206 = math.tanh %205 : vector<8x128xf32>
    %cst_106 = arith.constant 5.000000e-01 : f32
    %207 = vector.broadcast %cst_106 : f32 to vector<8x128xf32>
    %208 = arith.mulf %207, %206 : vector<8x128xf32>
    %cst_107 = arith.constant 5.000000e-01 : f32
    %209 = vector.broadcast %cst_107 : f32 to vector<8x128xf32>
    %210 = arith.addf %208, %209 : vector<8x128xf32>
    %211 = arith.select %5, %206, %210 : vector<8x128xi1>, vector<8x128xf32>
    %c96_i32_108 = arith.constant 96 : i32
    %212 = tpu.dynamic_rotate %211 by %c96_i32_108 dim 1 : vector<8x128xf32>, i32 -> vector<8x128xf32>
    %c64_i32_109 = arith.constant 64 : i32
    %213 = tpu.dynamic_rotate %211 by %c64_i32_109 dim 1 : vector<8x128xf32>, i32 -> vector<8x128xf32>
    %c32_i32_110 = arith.constant 32 : i32
    %214 = tpu.dynamic_rotate %211 by %c32_i32_110 dim 1 : vector<8x128xf32>, i32 -> vector<8x128xf32>
    %215 = arith.mulf %212, %165 : vector<8x128xf32>
    %216 = arith.mulf %211, %213 : vector<8x128xf32>
    %217 = arith.addf %215, %216 : vector<8x128xf32>
    %218 = math.tanh %217 : vector<8x128xf32>
    %219 = arith.mulf %214, %218 : vector<8x128xf32>
    %c3 = arith.constant 3 : index
    %c0_111 = arith.constant 0 : index
    %c0_112 = arith.constant 0 : index
    %220 = vector.load %arg13[%c3, %c0_111, %c0_112] : memref<8x8x128xf32, #tpu.memory_space<vmem>>, vector<1x8x128xf32>
    %221 = vector.shape_cast %220 : vector<1x8x128xf32> to vector<8x128xf32>
    %222 = vector.shape_cast %219 : vector<8x128xf32> to vector<1x8x128xf32>
    tpu.vector_store %arg13[%c3, %c0_111, %c0_112], %222 {strides = array<i32>} : memref<8x8x128xf32, #tpu.memory_space<vmem>>, vector<1x8x128xf32>,
    %c32 = arith.constant 32 : index
    %c0_113 = arith.constant 0 : index
    %223 = vector.load %arg12[%c32, %c0_113] : memref<64x128xf32, #tpu.memory_space<vmem>>, vector<8x128xf32>
    %224 = arith.truncf %192 : vector<8x128xf32> to vector<8x128xbf16>
    %c0_114 = arith.constant 0 : index
    %c0_115 = arith.constant 0 : index
    %225 = vector.load %arg2[%c0_114, %c0_115] : memref<128x128xbf16, #tpu.memory_space<vmem>>, vector<128x128xbf16>
    %cst_116 = arith.constant dense<0.000000e+00> : vector<8x128xf32>
    %226 = tpu.matmul %224, %225, %cst_116 {dimension_numbers = #tpu.dot_dimension_numbers<[1], [0], [0], [1], [0, 0, 1, 1], [], []>} : vector<8x128xbf16>, vector<128x128xbf16>, vector<8x128xf32> -> vector<8x128xf32>
    %227 = arith.addf %223, %226 : vector<8x128xf32>
    %cst_117 = arith.constant 5.000000e-01 : f32
    %228 = vector.broadcast %cst_117 : f32 to vector<8x128xf32>
    %229 = arith.mulf %227, %228 : vector<8x128xf32>
    %230 = arith.select %5, %227, %229 : vector<8x128xi1>, vector<8x128xf32>
    %231 = math.tanh %230 : vector<8x128xf32>
    %cst_118 = arith.constant 5.000000e-01 : f32
    %232 = vector.broadcast %cst_118 : f32 to vector<8x128xf32>
    %233 = arith.mulf %232, %231 : vector<8x128xf32>
    %cst_119 = arith.constant 5.000000e-01 : f32
    %234 = vector.broadcast %cst_119 : f32 to vector<8x128xf32>
    %235 = arith.addf %233, %234 : vector<8x128xf32>
    %236 = arith.select %5, %231, %235 : vector<8x128xi1>, vector<8x128xf32>
    %c96_i32_120 = arith.constant 96 : i32
    %237 = tpu.dynamic_rotate %236 by %c96_i32_120 dim 1 : vector<8x128xf32>, i32 -> vector<8x128xf32>
    %c64_i32_121 = arith.constant 64 : i32
    %238 = tpu.dynamic_rotate %236 by %c64_i32_121 dim 1 : vector<8x128xf32>, i32 -> vector<8x128xf32>
    %c32_i32_122 = arith.constant 32 : i32
    %239 = tpu.dynamic_rotate %236 by %c32_i32_122 dim 1 : vector<8x128xf32>, i32 -> vector<8x128xf32>
    %240 = arith.mulf %237, %190 : vector<8x128xf32>
    %241 = arith.mulf %236, %238 : vector<8x128xf32>
    %242 = arith.addf %240, %241 : vector<8x128xf32>
    %243 = math.tanh %242 : vector<8x128xf32>
    %244 = arith.mulf %239, %243 : vector<8x128xf32>
    %245 = arith.truncf %244 : vector<8x128xf32> to vector<8x128xbf16>
    %c0_123 = arith.constant 0 : index
    %c0_124 = arith.constant 0 : index
    %246 = vector.load %arg4[%c0_123, %c0_124] : memref<128x128xbf16, #tpu.memory_space<vmem>>, vector<128x128xbf16>
    %cst_125 = arith.constant dense<0.000000e+00> : vector<8x128xf32>
    %247 = tpu.matmul %245, %246, %cst_125 {dimension_numbers = #tpu.dot_dimension_numbers<[1], [0], [0], [1], [0, 0, 1, 1], [], []>} : vector<8x128xbf16>, vector<128x128xbf16>, vector<8x128xf32> -> vector<8x128xf32>
    %248 = arith.truncf %219 : vector<8x128xf32> to vector<8x128xbf16>
    %c0_126 = arith.constant 0 : index
    %c0_127 = arith.constant 0 : index
    %249 = vector.load %arg5[%c0_126, %c0_127] : memref<128x128xbf16, #tpu.memory_space<vmem>>, vector<128x128xbf16>
    %cst_128 = arith.constant dense<0.000000e+00> : vector<8x128xf32>
    %250 = tpu.matmul %248, %249, %cst_128 {dimension_numbers = #tpu.dot_dimension_numbers<[1], [0], [0], [1], [0, 0, 1, 1], [], []>} : vector<8x128xbf16>, vector<128x128xbf16>, vector<8x128xf32> -> vector<8x128xf32>
    %251 = arith.addf %247, %250 : vector<8x128xf32>
    %c0_129 = arith.constant 0 : index
    %c0_130 = arith.constant 0 : index
    %252 = vector.load %arg6[%c0_129, %c0_130] : memref<1x128xf32, #tpu.memory_space<vmem>>, vector<1x128xf32>
    %253 = vector.broadcast %252 : vector<1x128xf32> to vector<8x128xf32>
    %254 = arith.addf %251, %253 : vector<8x128xf32>
    %cst_131 = arith.constant 5.000000e-01 : f32
    %255 = vector.broadcast %cst_131 : f32 to vector<8x128xf32>
    %256 = arith.mulf %254, %255 : vector<8x128xf32>
    %257 = arith.select %5, %254, %256 : vector<8x128xi1>, vector<8x128xf32>
    %258 = math.tanh %257 : vector<8x128xf32>
    %cst_132 = arith.constant 5.000000e-01 : f32
    %259 = vector.broadcast %cst_132 : f32 to vector<8x128xf32>
    %260 = arith.mulf %259, %258 : vector<8x128xf32>
    %cst_133 = arith.constant 5.000000e-01 : f32
    %261 = vector.broadcast %cst_133 : f32 to vector<8x128xf32>
    %262 = arith.addf %260, %261 : vector<8x128xf32>
    %263 = arith.select %5, %258, %262 : vector<8x128xi1>, vector<8x128xf32>
    %c96_i32_134 = arith.constant 96 : i32
    %264 = tpu.dynamic_rotate %263 by %c96_i32_134 dim 1 : vector<8x128xf32>, i32 -> vector<8x128xf32>
    %c64_i32_135 = arith.constant 64 : i32
    %265 = tpu.dynamic_rotate %263 by %c64_i32_135 dim 1 : vector<8x128xf32>, i32 -> vector<8x128xf32>
    %c32_i32_136 = arith.constant 32 : i32
    %266 = tpu.dynamic_rotate %263 by %c32_i32_136 dim 1 : vector<8x128xf32>, i32 -> vector<8x128xf32>
    %267 = arith.mulf %264, %217 : vector<8x128xf32>
    %268 = arith.mulf %263, %265 : vector<8x128xf32>
    %269 = arith.addf %267, %268 : vector<8x128xf32>
    %270 = math.tanh %269 : vector<8x128xf32>
    %271 = arith.mulf %266, %270 : vector<8x128xf32>
    %c4 = arith.constant 4 : index
    %c0_137 = arith.constant 0 : index
    %c0_138 = arith.constant 0 : index
    %272 = vector.load %arg13[%c4, %c0_137, %c0_138] : memref<8x8x128xf32, #tpu.memory_space<vmem>>, vector<1x8x128xf32>
    %273 = vector.shape_cast %272 : vector<1x8x128xf32> to vector<8x128xf32>
    %274 = vector.shape_cast %271 : vector<8x128xf32> to vector<1x8x128xf32>
    tpu.vector_store %arg13[%c4, %c0_137, %c0_138], %274 {strides = array<i32>} : memref<8x8x128xf32, #tpu.memory_space<vmem>>, vector<1x8x128xf32>,
    %c40 = arith.constant 40 : index
    %c0_139 = arith.constant 0 : index
    %275 = vector.load %arg12[%c40, %c0_139] : memref<64x128xf32, #tpu.memory_space<vmem>>, vector<8x128xf32>
    %276 = arith.truncf %244 : vector<8x128xf32> to vector<8x128xbf16>
    %c0_140 = arith.constant 0 : index
    %c0_141 = arith.constant 0 : index
    %277 = vector.load %arg2[%c0_140, %c0_141] : memref<128x128xbf16, #tpu.memory_space<vmem>>, vector<128x128xbf16>
    %cst_142 = arith.constant dense<0.000000e+00> : vector<8x128xf32>
    %278 = tpu.matmul %276, %277, %cst_142 {dimension_numbers = #tpu.dot_dimension_numbers<[1], [0], [0], [1], [0, 0, 1, 1], [], []>} : vector<8x128xbf16>, vector<128x128xbf16>, vector<8x128xf32> -> vector<8x128xf32>
    %279 = arith.addf %275, %278 : vector<8x128xf32>
    %cst_143 = arith.constant 5.000000e-01 : f32
    %280 = vector.broadcast %cst_143 : f32 to vector<8x128xf32>
    %281 = arith.mulf %279, %280 : vector<8x128xf32>
    %282 = arith.select %5, %279, %281 : vector<8x128xi1>, vector<8x128xf32>
    %283 = math.tanh %282 : vector<8x128xf32>
    %cst_144 = arith.constant 5.000000e-01 : f32
    %284 = vector.broadcast %cst_144 : f32 to vector<8x128xf32>
    %285 = arith.mulf %284, %283 : vector<8x128xf32>
    %cst_145 = arith.constant 5.000000e-01 : f32
    %286 = vector.broadcast %cst_145 : f32 to vector<8x128xf32>
    %287 = arith.addf %285, %286 : vector<8x128xf32>
    %288 = arith.select %5, %283, %287 : vector<8x128xi1>, vector<8x128xf32>
    %c96_i32_146 = arith.constant 96 : i32
    %289 = tpu.dynamic_rotate %288 by %c96_i32_146 dim 1 : vector<8x128xf32>, i32 -> vector<8x128xf32>
    %c64_i32_147 = arith.constant 64 : i32
    %290 = tpu.dynamic_rotate %288 by %c64_i32_147 dim 1 : vector<8x128xf32>, i32 -> vector<8x128xf32>
    %c32_i32_148 = arith.constant 32 : i32
    %291 = tpu.dynamic_rotate %288 by %c32_i32_148 dim 1 : vector<8x128xf32>, i32 -> vector<8x128xf32>
    %292 = arith.mulf %289, %242 : vector<8x128xf32>
    %293 = arith.mulf %288, %290 : vector<8x128xf32>
    %294 = arith.addf %292, %293 : vector<8x128xf32>
    %295 = math.tanh %294 : vector<8x128xf32>
    %296 = arith.mulf %291, %295 : vector<8x128xf32>
    %297 = arith.truncf %296 : vector<8x128xf32> to vector<8x128xbf16>
    %c0_149 = arith.constant 0 : index
    %c0_150 = arith.constant 0 : index
    %298 = vector.load %arg4[%c0_149, %c0_150] : memref<128x128xbf16, #tpu.memory_space<vmem>>, vector<128x128xbf16>
    %cst_151 = arith.constant dense<0.000000e+00> : vector<8x128xf32>
    %299 = tpu.matmul %297, %298, %cst_151 {dimension_numbers = #tpu.dot_dimension_numbers<[1], [0], [0], [1], [0, 0, 1, 1], [], []>} : vector<8x128xbf16>, vector<128x128xbf16>, vector<8x128xf32> -> vector<8x128xf32>
    %300 = arith.truncf %271 : vector<8x128xf32> to vector<8x128xbf16>
    %c0_152 = arith.constant 0 : index
    %c0_153 = arith.constant 0 : index
    %301 = vector.load %arg5[%c0_152, %c0_153] : memref<128x128xbf16, #tpu.memory_space<vmem>>, vector<128x128xbf16>
    %cst_154 = arith.constant dense<0.000000e+00> : vector<8x128xf32>
    %302 = tpu.matmul %300, %301, %cst_154 {dimension_numbers = #tpu.dot_dimension_numbers<[1], [0], [0], [1], [0, 0, 1, 1], [], []>} : vector<8x128xbf16>, vector<128x128xbf16>, vector<8x128xf32> -> vector<8x128xf32>
    %303 = arith.addf %299, %302 : vector<8x128xf32>
    %c0_155 = arith.constant 0 : index
    %c0_156 = arith.constant 0 : index
    %304 = vector.load %arg6[%c0_155, %c0_156] : memref<1x128xf32, #tpu.memory_space<vmem>>, vector<1x128xf32>
    %305 = vector.broadcast %304 : vector<1x128xf32> to vector<8x128xf32>
    %306 = arith.addf %303, %305 : vector<8x128xf32>
    %cst_157 = arith.constant 5.000000e-01 : f32
    %307 = vector.broadcast %cst_157 : f32 to vector<8x128xf32>
    %308 = arith.mulf %306, %307 : vector<8x128xf32>
    %309 = arith.select %5, %306, %308 : vector<8x128xi1>, vector<8x128xf32>
    %310 = math.tanh %309 : vector<8x128xf32>
    %cst_158 = arith.constant 5.000000e-01 : f32
    %311 = vector.broadcast %cst_158 : f32 to vector<8x128xf32>
    %312 = arith.mulf %311, %310 : vector<8x128xf32>
    %cst_159 = arith.constant 5.000000e-01 : f32
    %313 = vector.broadcast %cst_159 : f32 to vector<8x128xf32>
    %314 = arith.addf %312, %313 : vector<8x128xf32>
    %315 = arith.select %5, %310, %314 : vector<8x128xi1>, vector<8x128xf32>
    %c96_i32_160 = arith.constant 96 : i32
    %316 = tpu.dynamic_rotate %315 by %c96_i32_160 dim 1 : vector<8x128xf32>, i32 -> vector<8x128xf32>
    %c64_i32_161 = arith.constant 64 : i32
    %317 = tpu.dynamic_rotate %315 by %c64_i32_161 dim 1 : vector<8x128xf32>, i32 -> vector<8x128xf32>
    %c32_i32_162 = arith.constant 32 : i32
    %318 = tpu.dynamic_rotate %315 by %c32_i32_162 dim 1 : vector<8x128xf32>, i32 -> vector<8x128xf32>
    %319 = arith.mulf %316, %269 : vector<8x128xf32>
    %320 = arith.mulf %315, %317 : vector<8x128xf32>
    %321 = arith.addf %319, %320 : vector<8x128xf32>
    %322 = math.tanh %321 : vector<8x128xf32>
    %323 = arith.mulf %318, %322 : vector<8x128xf32>
    %c5 = arith.constant 5 : index
    %c0_163 = arith.constant 0 : index
    %c0_164 = arith.constant 0 : index
    %324 = vector.load %arg13[%c5, %c0_163, %c0_164] : memref<8x8x128xf32, #tpu.memory_space<vmem>>, vector<1x8x128xf32>
    %325 = vector.shape_cast %324 : vector<1x8x128xf32> to vector<8x128xf32>
    %326 = vector.shape_cast %323 : vector<8x128xf32> to vector<1x8x128xf32>
    tpu.vector_store %arg13[%c5, %c0_163, %c0_164], %326 {strides = array<i32>} : memref<8x8x128xf32, #tpu.memory_space<vmem>>, vector<1x8x128xf32>,
    %c48 = arith.constant 48 : index
    %c0_165 = arith.constant 0 : index
    %327 = vector.load %arg12[%c48, %c0_165] : memref<64x128xf32, #tpu.memory_space<vmem>>, vector<8x128xf32>
    %328 = arith.truncf %296 : vector<8x128xf32> to vector<8x128xbf16>
    %c0_166 = arith.constant 0 : index
    %c0_167 = arith.constant 0 : index
    %329 = vector.load %arg2[%c0_166, %c0_167] : memref<128x128xbf16, #tpu.memory_space<vmem>>, vector<128x128xbf16>
    %cst_168 = arith.constant dense<0.000000e+00> : vector<8x128xf32>
    %330 = tpu.matmul %328, %329, %cst_168 {dimension_numbers = #tpu.dot_dimension_numbers<[1], [0], [0], [1], [0, 0, 1, 1], [], []>} : vector<8x128xbf16>, vector<128x128xbf16>, vector<8x128xf32> -> vector<8x128xf32>
    %331 = arith.addf %327, %330 : vector<8x128xf32>
    %cst_169 = arith.constant 5.000000e-01 : f32
    %332 = vector.broadcast %cst_169 : f32 to vector<8x128xf32>
    %333 = arith.mulf %331, %332 : vector<8x128xf32>
    %334 = arith.select %5, %331, %333 : vector<8x128xi1>, vector<8x128xf32>
    %335 = math.tanh %334 : vector<8x128xf32>
    %cst_170 = arith.constant 5.000000e-01 : f32
    %336 = vector.broadcast %cst_170 : f32 to vector<8x128xf32>
    %337 = arith.mulf %336, %335 : vector<8x128xf32>
    %cst_171 = arith.constant 5.000000e-01 : f32
    %338 = vector.broadcast %cst_171 : f32 to vector<8x128xf32>
    %339 = arith.addf %337, %338 : vector<8x128xf32>
    %340 = arith.select %5, %335, %339 : vector<8x128xi1>, vector<8x128xf32>
    %c96_i32_172 = arith.constant 96 : i32
    %341 = tpu.dynamic_rotate %340 by %c96_i32_172 dim 1 : vector<8x128xf32>, i32 -> vector<8x128xf32>
    %c64_i32_173 = arith.constant 64 : i32
    %342 = tpu.dynamic_rotate %340 by %c64_i32_173 dim 1 : vector<8x128xf32>, i32 -> vector<8x128xf32>
    %c32_i32_174 = arith.constant 32 : i32
    %343 = tpu.dynamic_rotate %340 by %c32_i32_174 dim 1 : vector<8x128xf32>, i32 -> vector<8x128xf32>
    %344 = arith.mulf %341, %294 : vector<8x128xf32>
    %345 = arith.mulf %340, %342 : vector<8x128xf32>
    %346 = arith.addf %344, %345 : vector<8x128xf32>
    %347 = math.tanh %346 : vector<8x128xf32>
    %348 = arith.mulf %343, %347 : vector<8x128xf32>
    %349 = arith.truncf %348 : vector<8x128xf32> to vector<8x128xbf16>
    %c0_175 = arith.constant 0 : index
    %c0_176 = arith.constant 0 : index
    %350 = vector.load %arg4[%c0_175, %c0_176] : memref<128x128xbf16, #tpu.memory_space<vmem>>, vector<128x128xbf16>
    %cst_177 = arith.constant dense<0.000000e+00> : vector<8x128xf32>
    %351 = tpu.matmul %349, %350, %cst_177 {dimension_numbers = #tpu.dot_dimension_numbers<[1], [0], [0], [1], [0, 0, 1, 1], [], []>} : vector<8x128xbf16>, vector<128x128xbf16>, vector<8x128xf32> -> vector<8x128xf32>
    %352 = arith.truncf %323 : vector<8x128xf32> to vector<8x128xbf16>
    %c0_178 = arith.constant 0 : index
    %c0_179 = arith.constant 0 : index
    %353 = vector.load %arg5[%c0_178, %c0_179] : memref<128x128xbf16, #tpu.memory_space<vmem>>, vector<128x128xbf16>
    %cst_180 = arith.constant dense<0.000000e+00> : vector<8x128xf32>
    %354 = tpu.matmul %352, %353, %cst_180 {dimension_numbers = #tpu.dot_dimension_numbers<[1], [0], [0], [1], [0, 0, 1, 1], [], []>} : vector<8x128xbf16>, vector<128x128xbf16>, vector<8x128xf32> -> vector<8x128xf32>
    %355 = arith.addf %351, %354 : vector<8x128xf32>
    %c0_181 = arith.constant 0 : index
    %c0_182 = arith.constant 0 : index
    %356 = vector.load %arg6[%c0_181, %c0_182] : memref<1x128xf32, #tpu.memory_space<vmem>>, vector<1x128xf32>
    %357 = vector.broadcast %356 : vector<1x128xf32> to vector<8x128xf32>
    %358 = arith.addf %355, %357 : vector<8x128xf32>
    %cst_183 = arith.constant 5.000000e-01 : f32
    %359 = vector.broadcast %cst_183 : f32 to vector<8x128xf32>
    %360 = arith.mulf %358, %359 : vector<8x128xf32>
    %361 = arith.select %5, %358, %360 : vector<8x128xi1>, vector<8x128xf32>
    %362 = math.tanh %361 : vector<8x128xf32>
    %cst_184 = arith.constant 5.000000e-01 : f32
    %363 = vector.broadcast %cst_184 : f32 to vector<8x128xf32>
    %364 = arith.mulf %363, %362 : vector<8x128xf32>
    %cst_185 = arith.constant 5.000000e-01 : f32
    %365 = vector.broadcast %cst_185 : f32 to vector<8x128xf32>
    %366 = arith.addf %364, %365 : vector<8x128xf32>
    %367 = arith.select %5, %362, %366 : vector<8x128xi1>, vector<8x128xf32>
    %c96_i32_186 = arith.constant 96 : i32
    %368 = tpu.dynamic_rotate %367 by %c96_i32_186 dim 1 : vector<8x128xf32>, i32 -> vector<8x128xf32>
    %c64_i32_187 = arith.constant 64 : i32
    %369 = tpu.dynamic_rotate %367 by %c64_i32_187 dim 1 : vector<8x128xf32>, i32 -> vector<8x128xf32>
    %c32_i32_188 = arith.constant 32 : i32
    %370 = tpu.dynamic_rotate %367 by %c32_i32_188 dim 1 : vector<8x128xf32>, i32 -> vector<8x128xf32>
    %371 = arith.mulf %368, %321 : vector<8x128xf32>
    %372 = arith.mulf %367, %369 : vector<8x128xf32>
    %373 = arith.addf %371, %372 : vector<8x128xf32>
    %374 = math.tanh %373 : vector<8x128xf32>
    %375 = arith.mulf %370, %374 : vector<8x128xf32>
    %c6 = arith.constant 6 : index
    %c0_189 = arith.constant 0 : index
    %c0_190 = arith.constant 0 : index
    %376 = vector.load %arg13[%c6, %c0_189, %c0_190] : memref<8x8x128xf32, #tpu.memory_space<vmem>>, vector<1x8x128xf32>
    %377 = vector.shape_cast %376 : vector<1x8x128xf32> to vector<8x128xf32>
    %378 = vector.shape_cast %375 : vector<8x128xf32> to vector<1x8x128xf32>
    tpu.vector_store %arg13[%c6, %c0_189, %c0_190], %378 {strides = array<i32>} : memref<8x8x128xf32, #tpu.memory_space<vmem>>, vector<1x8x128xf32>,
    %c56 = arith.constant 56 : index
    %c0_191 = arith.constant 0 : index
    %379 = vector.load %arg12[%c56, %c0_191] : memref<64x128xf32, #tpu.memory_space<vmem>>, vector<8x128xf32>
    %380 = arith.truncf %348 : vector<8x128xf32> to vector<8x128xbf16>
    %c0_192 = arith.constant 0 : index
    %c0_193 = arith.constant 0 : index
    %381 = vector.load %arg2[%c0_192, %c0_193] : memref<128x128xbf16, #tpu.memory_space<vmem>>, vector<128x128xbf16>
    %cst_194 = arith.constant dense<0.000000e+00> : vector<8x128xf32>
    %382 = tpu.matmul %380, %381, %cst_194 {dimension_numbers = #tpu.dot_dimension_numbers<[1], [0], [0], [1], [0, 0, 1, 1], [], []>} : vector<8x128xbf16>, vector<128x128xbf16>, vector<8x128xf32> -> vector<8x128xf32>
    %383 = arith.addf %379, %382 : vector<8x128xf32>
    %cst_195 = arith.constant 5.000000e-01 : f32
    %384 = vector.broadcast %cst_195 : f32 to vector<8x128xf32>
    %385 = arith.mulf %383, %384 : vector<8x128xf32>
    %386 = arith.select %5, %383, %385 : vector<8x128xi1>, vector<8x128xf32>
    %387 = math.tanh %386 : vector<8x128xf32>
    %cst_196 = arith.constant 5.000000e-01 : f32
    %388 = vector.broadcast %cst_196 : f32 to vector<8x128xf32>
    %389 = arith.mulf %388, %387 : vector<8x128xf32>
    %cst_197 = arith.constant 5.000000e-01 : f32
    %390 = vector.broadcast %cst_197 : f32 to vector<8x128xf32>
    %391 = arith.addf %389, %390 : vector<8x128xf32>
    %392 = arith.select %5, %387, %391 : vector<8x128xi1>, vector<8x128xf32>
    %c96_i32_198 = arith.constant 96 : i32
    %393 = tpu.dynamic_rotate %392 by %c96_i32_198 dim 1 : vector<8x128xf32>, i32 -> vector<8x128xf32>
    %c64_i32_199 = arith.constant 64 : i32
    %394 = tpu.dynamic_rotate %392 by %c64_i32_199 dim 1 : vector<8x128xf32>, i32 -> vector<8x128xf32>
    %c32_i32_200 = arith.constant 32 : i32
    %395 = tpu.dynamic_rotate %392 by %c32_i32_200 dim 1 : vector<8x128xf32>, i32 -> vector<8x128xf32>
    %396 = arith.mulf %393, %346 : vector<8x128xf32>
    %397 = arith.mulf %392, %394 : vector<8x128xf32>
    %398 = arith.addf %396, %397 : vector<8x128xf32>
    %399 = math.tanh %398 : vector<8x128xf32>
    %400 = arith.mulf %395, %399 : vector<8x128xf32>
    %401 = arith.truncf %400 : vector<8x128xf32> to vector<8x128xbf16>
    %c0_201 = arith.constant 0 : index
    %c0_202 = arith.constant 0 : index
    %402 = vector.load %arg4[%c0_201, %c0_202] : memref<128x128xbf16, #tpu.memory_space<vmem>>, vector<128x128xbf16>
    %cst_203 = arith.constant dense<0.000000e+00> : vector<8x128xf32>
    %403 = tpu.matmul %401, %402, %cst_203 {dimension_numbers = #tpu.dot_dimension_numbers<[1], [0], [0], [1], [0, 0, 1, 1], [], []>} : vector<8x128xbf16>, vector<128x128xbf16>, vector<8x128xf32> -> vector<8x128xf32>
    %404 = arith.truncf %375 : vector<8x128xf32> to vector<8x128xbf16>
    %c0_204 = arith.constant 0 : index
    %c0_205 = arith.constant 0 : index
    %405 = vector.load %arg5[%c0_204, %c0_205] : memref<128x128xbf16, #tpu.memory_space<vmem>>, vector<128x128xbf16>
    %cst_206 = arith.constant dense<0.000000e+00> : vector<8x128xf32>
    %406 = tpu.matmul %404, %405, %cst_206 {dimension_numbers = #tpu.dot_dimension_numbers<[1], [0], [0], [1], [0, 0, 1, 1], [], []>} : vector<8x128xbf16>, vector<128x128xbf16>, vector<8x128xf32> -> vector<8x128xf32>
    %407 = arith.addf %403, %406 : vector<8x128xf32>
    %c0_207 = arith.constant 0 : index
    %c0_208 = arith.constant 0 : index
    %408 = vector.load %arg6[%c0_207, %c0_208] : memref<1x128xf32, #tpu.memory_space<vmem>>, vector<1x128xf32>
    %409 = vector.broadcast %408 : vector<1x128xf32> to vector<8x128xf32>
    %410 = arith.addf %407, %409 : vector<8x128xf32>
    %cst_209 = arith.constant 5.000000e-01 : f32
    %411 = vector.broadcast %cst_209 : f32 to vector<8x128xf32>
    %412 = arith.mulf %410, %411 : vector<8x128xf32>
    %413 = arith.select %5, %410, %412 : vector<8x128xi1>, vector<8x128xf32>
    %414 = math.tanh %413 : vector<8x128xf32>
    %cst_210 = arith.constant 5.000000e-01 : f32
    %415 = vector.broadcast %cst_210 : f32 to vector<8x128xf32>
    %416 = arith.mulf %415, %414 : vector<8x128xf32>
    %cst_211 = arith.constant 5.000000e-01 : f32
    %417 = vector.broadcast %cst_211 : f32 to vector<8x128xf32>
    %418 = arith.addf %416, %417 : vector<8x128xf32>
    %419 = arith.select %5, %414, %418 : vector<8x128xi1>, vector<8x128xf32>
    %c96_i32_212 = arith.constant 96 : i32
    %420 = tpu.dynamic_rotate %419 by %c96_i32_212 dim 1 : vector<8x128xf32>, i32 -> vector<8x128xf32>
    %c64_i32_213 = arith.constant 64 : i32
    %421 = tpu.dynamic_rotate %419 by %c64_i32_213 dim 1 : vector<8x128xf32>, i32 -> vector<8x128xf32>
    %c32_i32_214 = arith.constant 32 : i32
    %422 = tpu.dynamic_rotate %419 by %c32_i32_214 dim 1 : vector<8x128xf32>, i32 -> vector<8x128xf32>
    %423 = arith.mulf %420, %373 : vector<8x128xf32>
    %424 = arith.mulf %419, %421 : vector<8x128xf32>
    %425 = arith.addf %423, %424 : vector<8x128xf32>
    %426 = math.tanh %425 : vector<8x128xf32>
    %427 = arith.mulf %422, %426 : vector<8x128xf32>
    %c7 = arith.constant 7 : index
    %c0_215 = arith.constant 0 : index
    %c0_216 = arith.constant 0 : index
    %428 = vector.load %arg13[%c7, %c0_215, %c0_216] : memref<8x8x128xf32, #tpu.memory_space<vmem>>, vector<1x8x128xf32>
    %429 = vector.shape_cast %428 : vector<1x8x128xf32> to vector<8x128xf32>
    %430 = vector.shape_cast %427 : vector<8x128xf32> to vector<1x8x128xf32>
    tpu.vector_store %arg13[%c7, %c0_215, %c0_216], %430 {strides = array<i32>} : memref<8x8x128xf32, #tpu.memory_space<vmem>>, vector<1x8x128xf32>,
    %c0_217 = arith.constant 0 : index
    %c0_218 = arith.constant 0 : index
    %c0_219 = arith.constant 0 : index
    %431 = vector.load %arg13[%c0_217, %c0_218, %c0_219] : memref<8x8x128xf32, #tpu.memory_space<vmem>>, vector<8x8x128xf32>
    %c0_220 = arith.constant 0 : index
    %c0_221 = arith.constant 0 : index
    %432 = vector.load %arg7[%c0_220, %c0_221] : memref<1x128xf32, #tpu.memory_space<vmem>>, vector<1x128xf32>
    %433 = vector.shape_cast %432 : vector<1x128xf32> to vector<1x1x128xf32>
    %434 = vector.broadcast %433 : vector<1x1x128xf32> to vector<8x8x128xf32>
    %435 = arith.mulf %431, %434 : vector<8x8x128xf32>
    %cst_222 = arith.constant dense<0.000000e+00> : vector<8x8xf32>
    %436 = vector.multi_reduction <add>, %435, %cst_222 [2] : vector<8x8x128xf32> to vector<8x8xf32>
    %437 = vector.shape_cast %436 : vector<8x8xf32> to vector<8x8x1xf32>
    %c0_223 = arith.constant 0 : index
    %c0_224 = arith.constant 0 : index
    %438 = vector.load %arg8[%c0_223, %c0_224] : memref<1x1xf32, #tpu.memory_space<vmem>>, vector<1x1xf32>
    %439 = vector.shape_cast %438 : vector<1x1xf32> to vector<1x1x1xf32>
    %440 = vector.broadcast %439 : vector<1x1x1xf32> to vector<8x8x1xf32>
    %441 = arith.addf %437, %440 : vector<8x8x1xf32>
    %cst_225 = arith.constant dense<0xFF800000> : vector<8x1xf32>
    %442 = vector.multi_reduction <maximumf>, %441, %cst_225 [0] : vector<8x8x1xf32> to vector<8x1xf32>
    %443 = vector.shape_cast %442 : vector<8x1xf32> to vector<1x8x1xf32>
    %444 = vector.broadcast %443 : vector<1x8x1xf32> to vector<8x8x1xf32>
    %445 = arith.subf %441, %444 : vector<8x8x1xf32>
    %446 = math.exp %445 : vector<8x8x1xf32>
    %cst_226 = arith.constant dense<0.000000e+00> : vector<8x1xf32>
    %447 = vector.multi_reduction <add>, %446, %cst_226 [0] : vector<8x8x1xf32> to vector<8x1xf32>
    %448 = vector.shape_cast %447 : vector<8x1xf32> to vector<1x8x1xf32>
    %449 = tpu.reciprocal %448 {approx = true} : vector<1x8x1xf32> -> vector<1x8x1xf32>
    %450 = vector.broadcast %449 : vector<1x8x1xf32> to vector<8x8x1xf32>
    %451 = arith.mulf %446, %450 : vector<8x8x1xf32>
    %452 = vector.broadcast %451 : vector<8x8x1xf32> to vector<8x8x128xf32>
    %453 = arith.mulf %452, %431 : vector<8x8x128xf32>
    %cst_227 = arith.constant dense<0.000000e+00> : vector<8x128xf32>
    %454 = vector.multi_reduction <add>, %453, %cst_227 [0] : vector<8x8x128xf32> to vector<8x128xf32>
    %c0_228 = arith.constant 0 : index
    %c0_229 = arith.constant 0 : index
    %455 = vector.load %arg9[%c0_228, %c0_229] : memref<1x128xf32, #tpu.memory_space<vmem>>, vector<1x128xf32>
    %456 = vector.broadcast %455 : vector<1x128xf32> to vector<8x128xf32>
    %457 = arith.mulf %454, %456 : vector<8x128xf32>
    %cst_230 = arith.constant dense<0.000000e+00> : vector<8xf32>
    %458 = vector.multi_reduction <add>, %457, %cst_230 [1] : vector<8x128xf32> to vector<8xf32>
    %459 = vector.shape_cast %458 : vector<8xf32> to vector<8x1xf32>
    %c0_231 = arith.constant 0 : index
    %c0_232 = arith.constant 0 : index
    %460 = vector.load %arg10[%c0_231, %c0_232] : memref<1x1xf32, #tpu.memory_space<vmem>>, vector<1x1xf32>
    %461 = vector.broadcast %460 : vector<1x1xf32> to vector<8x1xf32>
    %462 = arith.addf %459, %461 : vector<8x1xf32>
    %c0_233 = arith.constant 0 : index
    %c0_234 = arith.constant 0 : index
    %463 = vector.load %arg11[%c0_233, %c0_234] : memref<8x1xf32, #tpu.memory_space<vmem>>, vector<8x1xf32>
    tpu.vector_store %arg11[%c0_233, %c0_234], %462 {strides = array<i32>} : memref<8x1xf32, #tpu.memory_space<vmem>>, vector<8x1xf32>,
    return
  }
}

</mosaic_0001>

<llo_original>
// kernel: lstm_with_attention_forward.1
$region0: #{lstm_with_attention_forward.1}
  #allocation0 [shape = 'u32[]', space=smem, size = 0x4, offset = 0x4, fixed_abs, tag = 'smem constant byte address 0x4 - core index']
  #allocation1 [shape = 'u32[144,128]{1,0:T(1,128)}', space=vmem, size = 0x12000, scoped, tag = 'internal scratch']
  #allocation2 [shape = 'f32[64,128]{1,0:T(8,128)}', space=vmem, size = 0x8000, scoped, tag = 'scratch operand']
  #allocation3 [shape = 'f32[8,8,128]{2,1,0:T(8,128)}', space=vmem, size = 0x8000, scoped, tag = 'scratch operand']
  #allocation4 [shape = 'f32[1,1]{1,0:T(1,128)S(1)}', space=vmem, size = 0x200, scoped, tag = 'scoped memory for lstm_with_attention_forward.1']
  #allocation5 [shape = 'f32[1,1]{1,0:T(1,128)S(1)}', space=vmem, size = 0x200, scoped, tag = 'scoped memory for lstm_with_attention_forward.1']
  %s0 = inlined_call_operand.vmem [shape: f32[64,16], index: 0, kind: input, shape index: {}]
  %s1 = inlined_call_operand.vmem [shape: bf16[16,128], index: 1, kind: input, shape index: {}]
  %s2 = inlined_call_operand.vmem [shape: bf16[128,128], index: 2, kind: input, shape index: {}]
  %s3 = inlined_call_operand.vmem [shape: f32[1,128], index: 3, kind: input, shape index: {}]
  %s4 = inlined_call_operand.vmem [shape: bf16[128,128], index: 4, kind: input, shape index: {}]
  %s5 = inlined_call_operand.hbm [shape: bf16[128,128], index: 5, kind: input, shape index: {}]
  %s6 = inlined_call_operand.vmem [shape: f32[1,128], index: 6, kind: input, shape index: {}]
  %s7 = inlined_call_operand.vmem [shape: f32[1,128], index: 7, kind: input, shape index: {}]
  %s8 = inlined_call_operand.<no memory space> [shape: f32[1,1], index: 8, kind: input, shape index: {}]
  %s9 = inlined_call_operand.vmem [shape: f32[1,128], index: 9, kind: input, shape index: {}]
  %s10 = inlined_call_operand.<no memory space> [shape: f32[1,1], index: 10, kind: input, shape index: {}]
  %s11 = inlined_call_operand.vmem [shape: f32[8,1], index: 11, kind: output, shape index: {}]
  %s12 = sld [smem:[#allocation0]]
  $region58: #{lstm_with_attention_forward.1} parent=0
    _
  %s14 = ssub.s32 1, %s12
  %s15 = scalar_select 0, %s14, %s12
  %v16 = vstv %s8
  %17 = vst [vmem:[#allocation4] sm:$0x1] %v16
  %v18 = vstv %s10
  %19 = vst [vmem:[#allocation5] sm:$0x1] %v18
  $region1: #{lstm_with_attention_forward.1} parent=0
    #allocation6 [shape = 'u8[32768]{0}', space=vmem, size = 0x8000, scoped, tag = 'input window, operand 5, single buffered']
    #allocation7 [shape = 's32[1]{0}', space=sflag, size = 0x4, scoped, tag = 'scoped memory for lstm_with_attention_forward.1']
    %20 = vsyncpa [#allocation7], 0
    // Predicated region
    $region2: #{lstm_with_attention_forward.1} parent=1 // pred_check
      _
    $region3: #{lstm_with_attention_forward.1} parent=1 // pred_check_branch
      %22 = sbr.rel (0) target = $region5
    $region4: #{lstm_with_attention_forward.1} parent=1 // pred_region
      _
    $region5: #{lstm_with_attention_forward.1} parent=1 // pred_fallthru
      _
    // Predicated region
    $region6: #{lstm_with_attention_forward.1} parent=1 // pred_check
      _
    $region7: #{lstm_with_attention_forward.1} parent=1 // pred_check_branch
      %24 = sbr.rel (0) target = $region9
    $region8: #{lstm_with_attention_forward.1} parent=1 // pred_region
      _
    $region9: #{lstm_with_attention_forward.1} parent=1 // pred_fallthru
      _
    // Predicated region
    $region10: #{lstm_with_attention_forward.1} parent=1 // pred_check
      _
    $region11: #{lstm_with_attention_forward.1} parent=1 // pred_check_branch
      %26 = sbr.rel (0) target = $region13
    $region12: #{lstm_with_attention_forward.1} parent=1 // pred_region
      _
    $region13: #{lstm_with_attention_forward.1} parent=1 // pred_fallthru
      _
    // Predicated region
    $region14: #{lstm_with_attention_forward.1} parent=1 // pred_check
      _
    $region15: #{lstm_with_attention_forward.1} parent=1 // pred_check_branch
      %28 = sbr.rel (0) target = $region17
    $region16: #{lstm_with_attention_forward.1} parent=1 // pred_region
      _
    $region17: #{lstm_with_attention_forward.1} parent=1 // pred_fallthru
      _
    // Predicated region
    $region18: #{lstm_with_attention_forward.1} parent=1 // pred_check
      _
    $region19: #{lstm_with_attention_forward.1} parent=1 // pred_check_branch
      %30 = sbr.rel (0) target = $region21
    $region20: #{lstm_with_attention_forward.1} parent=1 // pred_region
      _
    $region21: #{lstm_with_attention_forward.1} parent=1 // pred_fallthru
      _
    // Predicated region
    $region22: #{lstm_with_attention_forward.1} parent=1 // pred_check
      _
    $region23: #{lstm_with_attention_forward.1} parent=1 // pred_check_branch
      %32 = sbr.rel (0) target = $region25
    $region24: #{lstm_with_attention_forward.1} parent=1 // pred_region
      %s34 = ssub.s32 1024, 1024
      %35 = vsyncadd [#allocation7], %s34
      %s36 = sshll.u32 [#allocation6], 4
      %s37 = int_to_ptr.vmem [resolvable:$true] %s36
      %42 = dma.hbm_to_vmem [thread:$0]  %s5, 1024, %s37, [#allocation7], 64, 64, 4
    $region25: #{lstm_with_attention_forward.1} parent=1 // pred_fallthru
      _
    // Predicated region
    $region26: #{lstm_with_attention_forward.1} parent=1 // pred_check
      _
    $region27: #{lstm_with_attention_forward.1} parent=1 // pred_check_branch
      %44 = sbr.rel (0) target = $region29
    $region28: #{lstm_with_attention_forward.1} parent=1 // pred_region
      _
    $region29: #{lstm_with_attention_forward.1} parent=1 // pred_fallthru
      _
    // Predicated region
    $region30: #{lstm_with_attention_forward.1} parent=1 // pred_check
      _
    $region31: #{lstm_with_attention_forward.1} parent=1 // pred_check_branch
      %46 = sbr.rel (0) target = $region33
    $region32: #{lstm_with_attention_forward.1} parent=1 // pred_region
      _
    $region33: #{lstm_with_attention_forward.1} parent=1 // pred_fallthru
      _
    // Predicated region
    $region34: #{lstm_with_attention_forward.1} parent=1 // pred_check
      _
    $region35: #{lstm_with_attention_forward.1} parent=1 // pred_check_branch
      %48 = sbr.rel (0) target = $region37
    $region36: #{lstm_with_attention_forward.1} parent=1 // pred_region
      _
    $region37: #{lstm_with_attention_forward.1} parent=1 // pred_fallthru
      _
    // Predicated region
    $region38: #{lstm_with_attention_forward.1} parent=1 // pred_check
      _
    $region39: #{lstm_with_attention_forward.1} parent=1 // pred_check_branch
      %50 = sbr.rel (0) target = $region41
    $region40: #{lstm_with_attention_forward.1} parent=1 // pred_region
      _
    $region41: #{lstm_with_attention_forward.1} parent=1 // pred_fallthru
      _
    // Predicated region
    $region42: #{lstm_with_attention_forward.1} parent=1 // pred_check
      _
    $region43: #{lstm_with_attention_forward.1} parent=1 // pred_check_branch
      %52 = sbr.rel (0) target = $region45
    $region44: #{lstm_with_attention_forward.1} parent=1 // pred_region
      _
    $region45: #{lstm_with_attention_forward.1} parent=1 // pred_fallthru
      _
    // Predicated region
    $region46: #{lstm_with_attention_forward.1} parent=1 // pred_check
      _
    $region47: #{lstm_with_attention_forward.1} parent=1 // pred_check_branch
      %54 = sbr.rel (0) target = $region49
    $region48: #{lstm_with_attention_forward.1} parent=1 // pred_region
      %55 = dma.done [#allocation7], 1024
    $region49: #{lstm_with_attention_forward.1} parent=1 // pred_fallthru
      _
    %v57 = vlaneseq
    %v58 = vand.u32 %v57, 127
    %vm59 = vcmp.ge.s32.totalorder %v58, 64
    %vm60 = vcmp.lt.s32.totalorder %v58, 96
    %vm61 = vmand %vm59, %vm60
    %v62 = vld [vmem:[%s0] sm:$0xff]
    %v63 = vld [vmem:[%s0 + $0x8] sm:$0xff]
    %v64 = vld [vmem:[%s0 + $0x10] sm:$0xff]
    %v65 = vld [vmem:[%s0 + $0x18] sm:$0xff]
    %v66 = vld [vmem:[%s0 + $0x20] sm:$0xff]
    %v67 = vld [vmem:[%s0 + $0x28] sm:$0xff]
    %v68 = vld [vmem:[%s0 + $0x30] sm:$0xff]
    %v69 = vld [vmem:[%s0 + $0x38] sm:$0xff]
    %v70 = vpack.c.bf16 %v63, %v62
    %v71 = vpack.c.bf16 %v65, %v64
    %v72 = vpack.c.bf16 %v67, %v66
    %v73 = vpack.c.bf16 %v69, %v68
    %v74 = vld [vmem:[%s1] sm:$0xf]
    %v75 = vld [vmem:[%s1 + $0x4] sm:$0xf]
    %v76 = vld [vmem:[%s3] sm:$0x1]
    %v78 = vlaneseq
    %v79 = vshrl.u32 %v78, 7
    %v80 = vsub.s32 0, %v79
    %v81 = vrot.slane %v76, %v80
    %v85 = vunpack.c.l.b16 %v74
    %v86 = vunpack.c.l.b16 %v75
    %v87 = vpack.c.b16 %v86, %v85
    %vm89 = vcmask 130048
    %v91 = vsel %vm89, %v70, 0
    %v94 = vsel %vm89, %v71, 0
    %v97 = vsel %vm89, %v72, 0
    %v100 = vsel %vm89, %v73, 0
    %102 = vmatprep.subr.bf16.mxu0 0
    %103 = vmatpush1.bf16.msra.mxu0 %v87
    %104 = vmatprep.subr.bf16.mxu0 0
    %105 = vmatpush1.bf16.msra.mxu0 0
    %106 = vmatprep.subr.bf16.mxu0 0
    %107 = vmatpush1.bf16.msra.mxu0 0
    %108 = vmatprep.subr.bf16.mxu0 0
    %109 = vmatpush1.bf16.msra.mxu0 0
    %110 = vmatprep.subr.bf16.mxu0 0
    %111 = vmatpush1.bf16.msra.mxu0 0
    %112 = vmatprep.subr.bf16.mxu0 0
    %113 = vmatpush1.bf16.msra.mxu0 0
    %114 = vmatprep.subr.bf16.mxu0 0
    %115 = vmatpush1.bf16.msra.mxu0 0
    %116 = vmatprep.subr.bf16.mxu0 0
    %117 = vmatpush1.bf16.msra.mxu0 0
    %118 = vmatprep.subr.bf16.mxu0 0
    %119 = vmatpush1.bf16.msra.mxu0 0
    %120 = vmatprep.subr.bf16.mxu0 0
    %121 = vmatpush1.bf16.msra.mxu0 0
    %122 = vmatprep.subr.bf16.mxu0 0
    %123 = vmatpush1.bf16.msra.mxu0 0
    %124 = vmatprep.subr.bf16.mxu0 0
    %125 = vmatpush1.bf16.msra.mxu0 0
    %126 = vmatprep.subr.bf16.mxu0 0
    %127 = vmatpush1.bf16.msra.mxu0 0
    %128 = vmatprep.subr.bf16.mxu0 0
    %129 = vmatpush1.bf16.msra.mxu0 0
    %130 = vmatprep.subr.bf16.mxu0 0
    %131 = vmatpush1.bf16.msra.mxu0 0
    %132 = vmatprep.subr.bf16.mxu0 0
    %133 = vmatpush1.bf16.msra.mxu0 0
    %134 = vmatprep.mubr.bf16.mxu0 0
    %135 = vmatmul.mubr.bf16.gmra.mrb[0].mxu0 %v91
    %v136 = vpop.f32.mrb[0].mxu0
    %v137 = vadd.f32 %v81, %v136
    %v138 = vpop.f32.mrb[0].mxu0
    %v139 = vpop.f32.mrb[0].mxu0
    %v140 = vadd.f32 %v81, %v139
    %v141 = vpop.f32.mrb[0].mxu0
    %142 = vmatprep.mubr.bf16.mxu0 0
    %143 = vmatmul.mubr.bf16.gmra.mrb[0].mxu0 %v94
    %v144 = vpop.f32.mrb[0].mxu0
    %v145 = vadd.f32 %v81, %v144
    %v146 = vpop.f32.mrb[0].mxu0
    %v147 = vpop.f32.mrb[0].mxu0
    %v148 = vadd.f32 %v81, %v147
    %v149 = vpop.f32.mrb[0].mxu0
    %150 = vmatprep.mubr.bf16.mxu0 0
    %151 = vmatmul.mubr.bf16.gmra.mrb[0].mxu0 %v97
    %v152 = vpop.f32.mrb[0].mxu0
    %v153 = vadd.f32 %v81, %v152
    %v154 = vpop.f32.mrb[0].mxu0
    %v155 = vpop.f32.mrb[0].mxu0
    %v156 = vadd.f32 %v81, %v155
    %v157 = vpop.f32.mrb[0].mxu0
    %158 = vmatprep.mubr.bf16.mxu0 0
    %159 = vmatmul.mubr.bf16.gmra.mrb[0].mxu0 %v100
    %v160 = vpop.f32.mrb[0].mxu0
    %v161 = vadd.f32 %v81, %v160
    %v162 = vpop.f32.mrb[0].mxu0
    %v163 = vpop.f32.mrb[0].mxu0
    %v164 = vadd.f32 %v81, %v163
    %v165 = vpop.f32.mrb[0].mxu0
    %166 = vdwg.mxu0
    %167 = vst [vmem:[#allocation2] sm:$0xff] %v137
    %168 = vst [vmem:[#allocation2 + $0x8] sm:$0xff] %v140
    %169 = vst [vmem:[#allocation2 + $0x10] sm:$0xff] %v145
    %170 = vst [vmem:[#allocation2 + $0x18] sm:$0xff] %v148
    %171 = vst [vmem:[#allocation2 + $0x20] sm:$0xff] %v153
    %172 = vst [vmem:[#allocation2 + $0x28] sm:$0xff] %v156
    %173 = vst [vmem:[#allocation2 + $0x30] sm:$0xff] %v161
    %174 = vst [vmem:[#allocation2 + $0x38] sm:$0xff] %v164
    %v175 = vld [vmem:[#allocation2] sm:$0xff]
    %v176 = vld [vmem:[%s2] sm:$0xf]
    %v177 = vld [vmem:[%s2 + $0x4] sm:$0xf]
    %v178 = vld [vmem:[%s2 + $0x8] sm:$0xf]
    %v179 = vld [vmem:[%s2 + $0xc] sm:$0xf]
    %v180 = vld [vmem:[%s2 + $0x10] sm:$0xf]
    %v181 = vld [vmem:[%s2 + $0x14] sm:$0xf]
    %v182 = vld [vmem:[%s2 + $0x18] sm:$0xf]
    %v183 = vld [vmem:[%s2 + $0x1c] sm:$0xf]
    %v184 = vld [vmem:[%s2 + $0x20] sm:$0xf]
    %v185 = vld [vmem:[%s2 + $0x24] sm:$0xf]
    %v186 = vld [vmem:[%s2 + $0x28] sm:$0xf]
    %v187 = vld [vmem:[%s2 + $0x2c] sm:$0xf]
    %v188 = vld [vmem:[%s2 + $0x30] sm:$0xf]
    %v189 = vld [vmem:[%s2 + $0x34] sm:$0xf]
    %v190 = vld [vmem:[%s2 + $0x38] sm:$0xf]
    %v191 = vld [vmem:[%s2 + $0x3c] sm:$0xf]
    %v208 = vunpack.c.l.b16 %v176
    %v209 = vunpack.c.l.b16 %v177
    %v210 = vunpack.c.l.b16 %v178
    %v211 = vunpack.c.l.b16 %v179
    %v212 = vunpack.c.l.b16 %v180
    %v213 = vunpack.c.l.b16 %v181
    %v214 = vunpack.c.l.b16 %v182
    %v215 = vunpack.c.l.b16 %v183
    %v216 = vunpack.c.l.b16 %v184
    %v217 = vunpack.c.l.b16 %v185
    %v218 = vunpack.c.l.b16 %v186
    %v219 = vunpack.c.l.b16 %v187
    %v220 = vunpack.c.l.b16 %v188
    %v221 = vunpack.c.l.b16 %v189
    %v222 = vunpack.c.l.b16 %v190
    %v223 = vunpack.c.l.b16 %v191
    %v224 = vpack.c.b16 %v209, %v208
    %v225 = vpack.c.b16 %v211, %v210
    %v226 = vpack.c.b16 %v213, %v212
    %v227 = vpack.c.b16 %v215, %v214
    %v228 = vpack.c.b16 %v217, %v216
    %v229 = vpack.c.b16 %v219, %v218
    %v230 = vpack.c.b16 %v221, %v220
    %v231 = vpack.c.b16 %v223, %v222
    %240 = vmatprep.subr.bf16.mxu0 0
    %241 = vmatpush1.bf16.msra.mxu0 %v224
    %242 = vmatprep.subr.bf16.mxu0 0
    %243 = vmatpush1.bf16.msra.mxu0 %v225
    %244 = vmatprep.subr.bf16.mxu0 0
    %245 = vmatpush1.bf16.msra.mxu0 %v226
    %246 = vmatprep.subr.bf16.mxu0 0
    %247 = vmatpush1.bf16.msra.mxu0 %v227
    %248 = vmatprep.subr.bf16.mxu0 0
    %249 = vmatpush1.bf16.msra.mxu0 %v228
    %250 = vmatprep.subr.bf16.mxu0 0
    %251 = vmatpush1.bf16.msra.mxu0 %v229
    %252 = vmatprep.subr.bf16.mxu0 0
    %253 = vmatpush1.bf16.msra.mxu0 %v230
    %254 = vmatprep.subr.bf16.mxu0 0
    %255 = vmatpush1.bf16.msra.mxu0 %v231
    %256 = vmatprep.subr.bf16.mxu0 0
    %257 = vmatpush1.bf16.msra.mxu0 0
    %258 = vmatprep.subr.bf16.mxu0 0
    %259 = vmatpush1.bf16.msra.mxu0 0
    %260 = vmatprep.subr.bf16.mxu0 0
    %261 = vmatpush1.bf16.msra.mxu0 0
    %262 = vmatprep.subr.bf16.mxu0 0
    %263 = vmatpush1.bf16.msra.mxu0 0
    %264 = vmatprep.subr.bf16.mxu0 0
    %265 = vmatpush1.bf16.msra.mxu0 0
    %266 = vmatprep.subr.bf16.mxu0 0
    %267 = vmatpush1.bf16.msra.mxu0 0
    %268 = vmatprep.subr.bf16.mxu0 0
    %269 = vmatpush1.bf16.msra.mxu0 0
    %270 = vmatprep.subr.bf16.mxu0 0
    %271 = vmatpush1.bf16.msra.mxu0 0
    %272 = vmatprep.mubr.bf16.mxu0 0
    %273 = vmatmul.mubr.bf16.gmra.mrb[0].mxu0 0
    %v274 = vpop.f32.mrb[0].mxu0
    %v275 = vadd.f32 0.0, %v274
    %v276 = vpop.f32.mrb[0].mxu0
    %v277 = vpop.f32.mrb[0].mxu0
    %v278 = vpop.f32.mrb[0].mxu0
    %279 = vdwg.mxu0
    %v280 = vadd.f32 %v175, %v275
    %v281 = vmul.f32 %v280, 0.5
    %v282 = vsel %vm61, %v280, %v281
    %v283 = vtanh.pop %v282
    %v284 = vmul.f32 %v283, 0.5
    %v285 = vadd.f32 %v284, 0.5
    %v286 = vsel %vm61, %v283, %v285
    %287 = vrot.lane.b32.xlu0 %v286, 96
    %v288 = vpop.permute.xlu0 %287
    %289 = vrot.lane.b32.xlu0 %v286, 64
    %v290 = vpop.permute.xlu0 %289
    %291 = vrot.lane.b32.xlu0 %v286, 32
    %v292 = vpop.permute.xlu0 %291
    %v293 = vmul.f32 %v288, 0.0
    %v294 = vmul.f32 %v286, %v290
    %v295 = vadd.f32 %v293, %v294
    %v296 = vtanh.pop %v295
    %v297 = vmul.f32 %v292, %v296
    %v298 = vpack.c.bf16 %v297, %v297
    %v299 = vld [vmem:[%s4] sm:$0xf]
    %v300 = vld [vmem:[%s4 + $0x4] sm:$0xf]
    %v301 = vld [vmem:[%s4 + $0x8] sm:$0xf]
    %v302 = vld [vmem:[%s4 + $0xc] sm:$0xf]
    %v303 = vld [vmem:[%s4 + $0x10] sm:$0xf]
    %v304 = vld [vmem:[%s4 + $0x14] sm:$0xf]
    %v305 = vld [vmem:[%s4 + $0x18] sm:$0xf]
    %v306 = vld [vmem:[%s4 + $0x1c] sm:$0xf]
    %v307 = vld [vmem:[%s4 + $0x20] sm:$0xf]
    %v308 = vld [vmem:[%s4 + $0x24] sm:$0xf]
    %v309 = vld [vmem:[%s4 + $0x28] sm:$0xf]
    %v310 = vld [vmem:[%s4 + $0x2c] sm:$0xf]
    %v311 = vld [vmem:[%s4 + $0x30] sm:$0xf]
    %v312 = vld [vmem:[%s4 + $0x34] sm:$0xf]
    %v313 = vld [vmem:[%s4 + $0x38] sm:$0xf]
    %v314 = vld [vmem:[%s4 + $0x3c] sm:$0xf]
    %v315 = vld [vmem:[#allocation6] sm:$0xf]
    %v316 = vld [vmem:[#allocation6 + $0x4] sm:$0xf]
    %v317 = vld [vmem:[#allocation6 + $0x8] sm:$0xf]
    %v318 = vld [vmem:[#allocation6 + $0xc] sm:$0xf]
    %v319 = vld [vmem:[#allocation6 + $0x10] sm:$0xf]
    %v320 = vld [vmem:[#allocation6 + $0x14] sm:$0xf]
    %v321 = vld [vmem:[#allocation6 + $0x18] sm:$0xf]
    %v322 = vld [vmem:[#allocation6 + $0x1c] sm:$0xf]
    %v323 = vld [vmem:[#allocation6 + $0x20] sm:$0xf]
    %v324 = vld [vmem:[#allocation6 + $0x24] sm:$0xf]
    %v325 = vld [vmem:[#allocation6 + $0x28] sm:$0xf]
    %v326 = vld [vmem:[#allocation6 + $0x2c] sm:$0xf]
    %v327 = vld [vmem:[#allocation6 + $0x30] sm:$0xf]
    %v328 = vld [vmem:[#allocation6 + $0x34] sm:$0xf]
    %v329 = vld [vmem:[#allocation6 + $0x38] sm:$0xf]
    %v330 = vld [vmem:[#allocation6 + $0x3c] sm:$0xf]
    %v347 = vunpack.c.l.b16 %v315
    %v348 = vunpack.c.l.b16 %v316
    %v349 = vunpack.c.l.b16 %v317
    %v350 = vunpack.c.l.b16 %v318
    %v351 = vunpack.c.l.b16 %v319
    %v352 = vunpack.c.l.b16 %v320
    %v353 = vunpack.c.l.b16 %v321
    %v354 = vunpack.c.l.b16 %v322
    %v355 = vunpack.c.l.b16 %v323
    %v356 = vunpack.c.l.b16 %v324
    %v357 = vunpack.c.l.b16 %v325
    %v358 = vunpack.c.l.b16 %v326
    %v359 = vunpack.c.l.b16 %v327
    %v360 = vunpack.c.l.b16 %v328
    %v361 = vunpack.c.l.b16 %v329
    %v362 = vunpack.c.l.b16 %v330
    %v363 = vpack.c.b16 %v348, %v347
    %v364 = vpack.c.b16 %v350, %v349
    %v365 = vpack.c.b16 %v352, %v351
    %v366 = vpack.c.b16 %v354, %v353
    %v367 = vpack.c.b16 %v356, %v355
    %v368 = vpack.c.b16 %v358, %v357
    %v369 = vpack.c.b16 %v360, %v359
    %v370 = vpack.c.b16 %v362, %v361
    %379 = vmatprep.subr.bf16.mxu0 0
    %380 = vmatpush1.bf16.msra.mxu0 %v363
    %381 = vmatprep.subr.bf16.mxu0 0
    %382 = vmatpush1.bf16.msra.mxu0 %v364
    %383 = vmatprep.subr.bf16.mxu0 0
    %384 = vmatpush1.bf16.msra.mxu0 %v365
    %385 = vmatprep.subr.bf16.mxu0 0
    %386 = vmatpush1.bf16.msra.mxu0 %v366
    %387 = vmatprep.subr.bf16.mxu0 0
    %388 = vmatpush1.bf16.msra.mxu0 %v367
    %389 = vmatprep.subr.bf16.mxu0 0
    %390 = vmatpush1.bf16.msra.mxu0 %v368
    %391 = vmatprep.subr.bf16.mxu0 0
    %392 = vmatpush1.bf16.msra.mxu0 %v369
    %393 = vmatprep.subr.bf16.mxu0 0
    %394 = vmatpush1.bf16.msra.mxu0 %v370
    %395 = vmatprep.subr.bf16.mxu0 0
    %396 = vmatpush1.bf16.msra.mxu0 0
    %397 = vmatprep.subr.bf16.mxu0 0
    %398 = vmatpush1.bf16.msra.mxu0 0
    %399 = vmatprep.subr.bf16.mxu0 0
    %400 = vmatpush1.bf16.msra.mxu0 0
    %401 = vmatprep.subr.bf16.mxu0 0
    %402 = vmatpush1.bf16.msra.mxu0 0
    %403 = vmatprep.subr.bf16.mxu0 0
    %404 = vmatpush1.bf16.msra.mxu0 0
    %405 = vmatprep.subr.bf16.mxu0 0
    %406 = vmatpush1.bf16.msra.mxu0 0
    %407 = vmatprep.subr.bf16.mxu0 0
    %408 = vmatpush1.bf16.msra.mxu0 0
    %409 = vmatprep.subr.bf16.mxu0 0
    %410 = vmatpush1.bf16.msra.mxu0 0
    %411 = vmatprep.mubr.bf16.mxu0 0
    %412 = vmatmul.mubr.bf16.gmra.mrb[0].mxu0 0
    %v413 = vpop.f32.mrb[0].mxu0
    %v414 = vadd.f32 0.0, %v413
    %v415 = vpop.f32.mrb[0].mxu0
    %v416 = vpop.f32.mrb[0].mxu0
    %v417 = vpop.f32.mrb[0].mxu0
    %418 = vdwg.mxu0
    %v435 = vunpack.c.l.b16 %v299
    %v436 = vunpack.c.l.b16 %v300
    %v437 = vunpack.c.l.b16 %v301
    %v438 = vunpack.c.l.b16 %v302
    %v439 = vunpack.c.l.b16 %v303
    %v440 = vunpack.c.l.b16 %v304
    %v441 = vunpack.c.l.b16 %v305
    %v442 = vunpack.c.l.b16 %v306
    %v443 = vunpack.c.l.b16 %v307
    %v444 = vunpack.c.l.b16 %v308
    %v445 = vunpack.c.l.b16 %v309
    %v446 = vunpack.c.l.b16 %v310
    %v447 = vunpack.c.l.b16 %v311
    %v448 = vunpack.c.l.b16 %v312
    %v449 = vunpack.c.l.b16 %v313
    %v450 = vunpack.c.l.b16 %v314
    %v451 = vpack.c.b16 %v436, %v435
    %v452 = vpack.c.b16 %v438, %v437
    %v453 = vpack.c.b16 %v440, %v439
    %v454 = vpack.c.b16 %v442, %v441
    %v455 = vpack.c.b16 %v444, %v443
    %v456 = vpack.c.b16 %v446, %v445
    %v457 = vpack.c.b16 %v448, %v447
    %v458 = vpack.c.b16 %v450, %v449
    %467 = vmatprep.subr.bf16.mxu0 0
    %468 = vmatpush1.bf16.msra.mxu0 %v451
    %469 = vmatprep.subr.bf16.mxu0 0
    %470 = vmatpush1.bf16.msra.mxu0 %v452
    %471 = vmatprep.subr.bf16.mxu0 0
    %472 = vmatpush1.bf16.msra.mxu0 %v453
    %473 = vmatprep.subr.bf16.mxu0 0
    %474 = vmatpush1.bf16.msra.mxu0 %v454
    %475 = vmatprep.subr.bf16.mxu0 0
    %476 = vmatpush1.bf16.msra.mxu0 %v455
    %477 = vmatprep.subr.bf16.mxu0 0
    %478 = vmatpush1.bf16.msra.mxu0 %v456
    %479 = vmatprep.subr.bf16.mxu0 0
    %480 = vmatpush1.bf16.msra.mxu0 %v457
    %481 = vmatprep.subr.bf16.mxu0 0
    %482 = vmatpush1.bf16.msra.mxu0 %v458
    %483 = vmatprep.subr.bf16.mxu0 0
    %484 = vmatpush1.bf16.msra.mxu0 0
    %485 = vmatprep.subr.bf16.mxu0 0
    %486 = vmatpush1.bf16.msra.mxu0 0
    %487 = vmatprep.subr.bf16.mxu0 0
    %488 = vmatpush1.bf16.msra.mxu0 0
    %489 = vmatprep.subr.bf16.mxu0 0
    %490 = vmatpush1.bf16.msra.mxu0 0
    %491 = vmatprep.subr.bf16.mxu0 0
    %492 = vmatpush1.bf16.msra.mxu0 0
    %493 = vmatprep.subr.bf16.mxu0 0
    %494 = vmatpush1.bf16.msra.mxu0 0
    %495 = vmatprep.subr.bf16.mxu0 0
    %496 = vmatpush1.bf16.msra.mxu0 0
    %497 = vmatprep.subr.bf16.mxu0 0
    %498 = vmatpush1.bf16.msra.mxu0 0
    %499 = vmatprep.mubr.bf16.mxu0 0
    %500 = vmatmul.mubr.bf16.gmra.mrb[0].mxu0 %v298
    %v501 = vpop.f32.mrb[0].mxu0
    %v502 = vadd.f32 %v414, %v501
    %v503 = vpop.f32.mrb[0].mxu0
    %v504 = vpop.f32.mrb[0].mxu0
    %v505 = vpop.f32.mrb[0].mxu0
    %506 = vdwg.mxu0
    %v507 = vld [vmem:[%s6] sm:$0x1]
    %v509 = vlaneseq
    %v510 = vshrl.u32 %v509, 7
    %v511 = vsub.s32 0, %v510
    %v512 = vrot.slane %v507, %v511
    %v514 = vadd.f32 %v502, %v512
    %v515 = vmul.f32 %v514, 0.5
    %v516 = vsel %vm61, %v514, %v515
    %v517 = vtanh.pop %v516
    %v518 = vmul.f32 %v517, 0.5
    %v519 = vadd.f32 %v518, 0.5
    %v520 = vsel %vm61, %v517, %v519
    %521 = vrot.lane.b32.xlu0 %v520, 96
    %v522 = vpop.permute.xlu0 %521
    %523 = vrot.lane.b32.xlu0 %v520, 64
    %v524 = vpop.permute.xlu0 %523
    %525 = vrot.lane.b32.xlu0 %v520, 32
    %v526 = vpop.permute.xlu0 %525
    %v527 = vmul.f32 %v522, 0.0
    %v528 = vmul.f32 %v520, %v524
    %v529 = vadd.f32 %v527, %v528
    %v530 = vtanh.pop %v529
    %v531 = vmul.f32 %v526, %v530
    %532 = vst [vmem:[#allocation3] sm:$0xff] %v531
    %v533 = vld [vmem:[#allocation2 + $0x8] sm:$0xff]
    %v534 = vld [vmem:[%s2] sm:$0xf]
    %v535 = vld [vmem:[%s2 + $0x4] sm:$0xf]
    %v536 = vld [vmem:[%s2 + $0x8] sm:$0xf]
    %v537 = vld [vmem:[%s2 + $0xc] sm:$0xf]
    %v538 = vld [vmem:[%s2 + $0x10] sm:$0xf]
    %v539 = vld [vmem:[%s2 + $0x14] sm:$0xf]
    %v540 = vld [vmem:[%s2 + $0x18] sm:$0xf]
    %v541 = vld [vmem:[%s2 + $0x1c] sm:$0xf]
    %v542 = vld [vmem:[%s2 + $0x20] sm:$0xf]
    %v543 = vld [vmem:[%s2 + $0x24] sm:$0xf]
    %v544 = vld [vmem:[%s2 + $0x28] sm:$0xf]
    %v545 = vld [vmem:[%s2 + $0x2c] sm:$0xf]
    %v546 = vld [vmem:[%s2 + $0x30] sm:$0xf]
    %v547 = vld [vmem:[%s2 + $0x34] sm:$0xf]
    %v548 = vld [vmem:[%s2 + $0x38] sm:$0xf]
    %v549 = vld [vmem:[%s2 + $0x3c] sm:$0xf]
    %v566 = vunpack.c.l.b16 %v534
    %v567 = vunpack.c.l.b16 %v535
    %v568 = vunpack.c.l.b16 %v536
    %v569 = vunpack.c.l.b16 %v537
    %v570 = vunpack.c.l.b16 %v538
    %v571 = vunpack.c.l.b16 %v539
    %v572 = vunpack.c.l.b16 %v540
    %v573 = vunpack.c.l.b16 %v541
    %v574 = vunpack.c.l.b16 %v542
    %v575 = vunpack.c.l.b16 %v543
    %v576 = vunpack.c.l.b16 %v544
    %v577 = vunpack.c.l.b16 %v545
    %v578 = vunpack.c.l.b16 %v546
    %v579 = vunpack.c.l.b16 %v547
    %v580 = vunpack.c.l.b16 %v548
    %v581 = vunpack.c.l.b16 %v549
    %v582 = vpack.c.b16 %v567, %v566
    %v583 = vpack.c.b16 %v569, %v568
    %v584 = vpack.c.b16 %v571, %v570
    %v585 = vpack.c.b16 %v573, %v572
    %v586 = vpack.c.b16 %v575, %v574
    %v587 = vpack.c.b16 %v577, %v576
    %v588 = vpack.c.b16 %v579, %v578
    %v589 = vpack.c.b16 %v581, %v580
    %598 = vmatprep.subr.bf16.mxu0 0
    %599 = vmatpush1.bf16.msra.mxu0 %v582
    %600 = vmatprep.subr.bf16.mxu0 0
    %601 = vmatpush1.bf16.msra.mxu0 %v583
    %602 = vmatprep.subr.bf16.mxu0 0
    %603 = vmatpush1.bf16.msra.mxu0 %v584
    %604 = vmatprep.subr.bf16.mxu0 0
    %605 = vmatpush1.bf16.msra.mxu0 %v585
    %606 = vmatprep.subr.bf16.mxu0 0
    %607 = vmatpush1.bf16.msra.mxu0 %v586
    %608 = vmatprep.subr.bf16.mxu0 0
    %609 = vmatpush1.bf16.msra.mxu0 %v587
    %610 = vmatprep.subr.bf16.mxu0 0
    %611 = vmatpush1.bf16.msra.mxu0 %v588
    %612 = vmatprep.subr.bf16.mxu0 0
    %613 = vmatpush1.bf16.msra.mxu0 %v589
    %614 = vmatprep.subr.bf16.mxu0 0
    %615 = vmatpush1.bf16.msra.mxu0 0
    %616 = vmatprep.subr.bf16.mxu0 0
    %617 = vmatpush1.bf16.msra.mxu0 0
    %618 = vmatprep.subr.bf16.mxu0 0
    %619 = vmatpush1.bf16.msra.mxu0 0
    %620 = vmatprep.subr.bf16.mxu0 0
    %621 = vmatpush1.bf16.msra.mxu0 0
    %622 = vmatprep.subr.bf16.mxu0 0
    %623 = vmatpush1.bf16.msra.mxu0 0
    %624 = vmatprep.subr.bf16.mxu0 0
    %625 = vmatpush1.bf16.msra.mxu0 0
    %626 = vmatprep.subr.bf16.mxu0 0
    %627 = vmatpush1.bf16.msra.mxu0 0
    %628 = vmatprep.subr.bf16.mxu0 0
    %629 = vmatpush1.bf16.msra.mxu0 0
    %630 = vmatprep.mubr.bf16.mxu0 0
    %631 = vmatmul.mubr.bf16.gmra.mrb[0].mxu0 %v298
    %v632 = vpop.f32.mrb[0].mxu0
    %v633 = vadd.f32 0.0, %v632
    %v634 = vpop.f32.mrb[0].mxu0
    %v635 = vpop.f32.mrb[0].mxu0
    %v636 = vpop.f32.mrb[0].mxu0
    %637 = vdwg.mxu0
    %v638 = vadd.f32 %v533, %v633
    %v639 = vmul.f32 %v638, 0.5
    %v640 = vsel %vm61, %v638, %v639
    %v641 = vtanh.pop %v640
    %v642 = vmul.f32 %v641, 0.5
    %v643 = vadd.f32 %v642, 0.5
    %v644 = vsel %vm61, %v641, %v643
    %645 = vrot.lane.b32.xlu0 %v644, 96
    %v646 = vpop.permute.xlu0 %645
    %647 = vrot.lane.b32.xlu0 %v644, 64
    %v648 = vpop.permute.xlu0 %647
    %649 = vrot.lane.b32.xlu0 %v644, 32
    %v650 = vpop.permute.xlu0 %649
    %v651 = vmul.f32 %v646, %v295
    %v652 = vmul.f32 %v644, %v648
    %v653 = vadd.f32 %v651, %v652
    %v654 = vtanh.pop %v653
    %v655 = vmul.f32 %v650, %v654
    %v656 = vpack.c.bf16 %v655, %v655
    %v657 = vld [vmem:[%s4] sm:$0xf]
    %v658 = vld [vmem:[%s4 + $0x4] sm:$0xf]
    %v659 = vld [vmem:[%s4 + $0x8] sm:$0xf]
    %v660 = vld [vmem:[%s4 + $0xc] sm:$0xf]
    %v661 = vld [vmem:[%s4 + $0x10] sm:$0xf]
    %v662 = vld [vmem:[%s4 + $0x14] sm:$0xf]
    %v663 = vld [vmem:[%s4 + $0x18] sm:$0xf]
    %v664 = vld [vmem:[%s4 + $0x1c] sm:$0xf]
    %v665 = vld [vmem:[%s4 + $0x20] sm:$0xf]
    %v666 = vld [vmem:[%s4 + $0x24] sm:$0xf]
    %v667 = vld [vmem:[%s4 + $0x28] sm:$0xf]
    %v668 = vld [vmem:[%s4 + $0x2c] sm:$0xf]
    %v669 = vld [vmem:[%s4 + $0x30] sm:$0xf]
    %v670 = vld [vmem:[%s4 + $0x34] sm:$0xf]
    %v671 = vld [vmem:[%s4 + $0x38] sm:$0xf]
    %v672 = vld [vmem:[%s4 + $0x3c] sm:$0xf]
    %v673 = vpack.c.bf16 %v531, %v531
    %v674 = vld [vmem:[#allocation6] sm:$0xf]
    %v675 = vld [vmem:[#allocation6 + $0x4] sm:$0xf]
    %v676 = vld [vmem:[#allocation6 + $0x8] sm:$0xf]
    %v677 = vld [vmem:[#allocation6 + $0xc] sm:$0xf]
    %v678 = vld [vmem:[#allocation6 + $0x10] sm:$0xf]
    %v679 = vld [vmem:[#allocation6 + $0x14] sm:$0xf]
    %v680 = vld [vmem:[#allocation6 + $0x18] sm:$0xf]
    %v681 = vld [vmem:[#allocation6 + $0x1c] sm:$0xf]
    %v682 = vld [vmem:[#allocation6 + $0x20] sm:$0xf]
    %v683 = vld [vmem:[#allocation6 + $0x24] sm:$0xf]
    %v684 = vld [vmem:[#allocation6 + $0x28] sm:$0xf]
    %v685 = vld [vmem:[#allocation6 + $0x2c] sm:$0xf]
    %v686 = vld [vmem:[#allocation6 + $0x30] sm:$0xf]
    %v687 = vld [vmem:[#allocation6 + $0x34] sm:$0xf]
    %v688 = vld [vmem:[#allocation6 + $0x38] sm:$0xf]
    %v689 = vld [vmem:[#allocation6 + $0x3c] sm:$0xf]
    %v706 = vunpack.c.l.b16 %v674
    %v707 = vunpack.c.l.b16 %v675
    %v708 = vunpack.c.l.b16 %v676
    %v709 = vunpack.c.l.b16 %v677
    %v710 = vunpack.c.l.b16 %v678
    %v711 = vunpack.c.l.b16 %v679
    %v712 = vunpack.c.l.b16 %v680
    %v713 = vunpack.c.l.b16 %v681
    %v714 = vunpack.c.l.b16 %v682
    %v715 = vunpack.c.l.b16 %v683
    %v716 = vunpack.c.l.b16 %v684
    %v717 = vunpack.c.l.b16 %v685
    %v718 = vunpack.c.l.b16 %v686
    %v719 = vunpack.c.l.b16 %v687
    %v720 = vunpack.c.l.b16 %v688
    %v721 = vunpack.c.l.b16 %v689
    %v722 = vpack.c.b16 %v707, %v706
    %v723 = vpack.c.b16 %v709, %v708
    %v724 = vpack.c.b16 %v711, %v710
    %v725 = vpack.c.b16 %v713, %v712
    %v726 = vpack.c.b16 %v715, %v714
    %v727 = vpack.c.b16 %v717, %v716
    %v728 = vpack.c.b16 %v719, %v718
    %v729 = vpack.c.b16 %v721, %v720
    %738 = vmatprep.subr.bf16.mxu0 0
    %739 = vmatpush1.bf16.msra.mxu0 %v722
    %740 = vmatprep.subr.bf16.mxu0 0
    %741 = vmatpush1.bf16.msra.mxu0 %v723
    %742 = vmatprep.subr.bf16.mxu0 0
    %743 = vmatpush1.bf16.msra.mxu0 %v724
    %744 = vmatprep.subr.bf16.mxu0 0
    %745 = vmatpush1.bf16.msra.mxu0 %v725
    %746 = vmatprep.subr.bf16.mxu0 0
    %747 = vmatpush1.bf16.msra.mxu0 %v726
    %748 = vmatprep.subr.bf16.mxu0 0
    %749 = vmatpush1.bf16.msra.mxu0 %v727
    %750 = vmatprep.subr.bf16.mxu0 0
    %751 = vmatpush1.bf16.msra.mxu0 %v728
    %752 = vmatprep.subr.bf16.mxu0 0
    %753 = vmatpush1.bf16.msra.mxu0 %v729
    %754 = vmatprep.subr.bf16.mxu0 0
    %755 = vmatpush1.bf16.msra.mxu0 0
    %756 = vmatprep.subr.bf16.mxu0 0
    %757 = vmatpush1.bf16.msra.mxu0 0
    %758 = vmatprep.subr.bf16.mxu0 0
    %759 = vmatpush1.bf16.msra.mxu0 0
    %760 = vmatprep.subr.bf16.mxu0 0
    %761 = vmatpush1.bf16.msra.mxu0 0
    %762 = vmatprep.subr.bf16.mxu0 0
    %763 = vmatpush1.bf16.msra.mxu0 0
    %764 = vmatprep.subr.bf16.mxu0 0
    %765 = vmatpush1.bf16.msra.mxu0 0
    %766 = vmatprep.subr.bf16.mxu0 0
    %767 = vmatpush1.bf16.msra.mxu0 0
    %768 = vmatprep.subr.bf16.mxu0 0
    %769 = vmatpush1.bf16.msra.mxu0 0
    %770 = vmatprep.mubr.bf16.mxu0 0
    %771 = vmatmul.mubr.bf16.gmra.mrb[0].mxu0 %v673
    %v772 = vpop.f32.mrb[0].mxu0
    %v773 = vadd.f32 0.0, %v772
    %v774 = vpop.f32.mrb[0].mxu0
    %v775 = vpop.f32.mrb[0].mxu0
    %v776 = vpop.f32.mrb[0].mxu0
    %777 = vdwg.mxu0
    %v794 = vunpack.c.l.b16 %v657
    %v795 = vunpack.c.l.b16 %v658
    %v796 = vunpack.c.l.b16 %v659
    %v797 = vunpack.c.l.b16 %v660
    %v798 = vunpack.c.l.b16 %v661
    %v799 = vunpack.c.l.b16 %v662
    %v800 = vunpack.c.l.b16 %v663
    %v801 = vunpack.c.l.b16 %v664
    %v802 = vunpack.c.l.b16 %v665
    %v803 = vunpack.c.l.b16 %v666
    %v804 = vunpack.c.l.b16 %v667
    %v805 = vunpack.c.l.b16 %v668
    %v806 = vunpack.c.l.b16 %v669
    %v807 = vunpack.c.l.b16 %v670
    %v808 = vunpack.c.l.b16 %v671
    %v809 = vunpack.c.l.b16 %v672
    %v810 = vpack.c.b16 %v795, %v794
    %v811 = vpack.c.b16 %v797, %v796
    %v812 = vpack.c.b16 %v799, %v798
    %v813 = vpack.c.b16 %v801, %v800
    %v814 = vpack.c.b16 %v803, %v802
    %v815 = vpack.c.b16 %v805, %v804
    %v816 = vpack.c.b16 %v807, %v806
    %v817 = vpack.c.b16 %v809, %v808
    %826 = vmatprep.subr.bf16.mxu0 0
    %827 = vmatpush1.bf16.msra.mxu0 %v810
    %828 = vmatprep.subr.bf16.mxu0 0
    %829 = vmatpush1.bf16.msra.mxu0 %v811
    %830 = vmatprep.subr.bf16.mxu0 0
    %831 = vmatpush1.bf16.msra.mxu0 %v812
    %832 = vmatprep.subr.bf16.mxu0 0
    %833 = vmatpush1.bf16.msra.mxu0 %v813
    %834 = vmatprep.subr.bf16.mxu0 0
    %835 = vmatpush1.bf16.msra.mxu0 %v814
    %836 = vmatprep.subr.bf16.mxu0 0
    %837 = vmatpush1.bf16.msra.mxu0 %v815
    %838 = vmatprep.subr.bf16.mxu0 0
    %839 = vmatpush1.bf16.msra.mxu0 %v816
    %840 = vmatprep.subr.bf16.mxu0 0
    %841 = vmatpush1.bf16.msra.mxu0 %v817
    %842 = vmatprep.subr.bf16.mxu0 0
    %843 = vmatpush1.bf16.msra.mxu0 0
    %844 = vmatprep.subr.bf16.mxu0 0
    %845 = vmatpush1.bf16.msra.mxu0 0
    %846 = vmatprep.subr.bf16.mxu0 0
    %847 = vmatpush1.bf16.msra.mxu0 0
    %848 = vmatprep.subr.bf16.mxu0 0
    %849 = vmatpush1.bf16.msra.mxu0 0
    %850 = vmatprep.subr.bf16.mxu0 0
    %851 = vmatpush1.bf16.msra.mxu0 0
    %852 = vmatprep.subr.bf16.mxu0 0
    %853 = vmatpush1.bf16.msra.mxu0 0
    %854 = vmatprep.subr.bf16.mxu0 0
    %855 = vmatpush1.bf16.msra.mxu0 0
    %856 = vmatprep.subr.bf16.mxu0 0
    %857 = vmatpush1.bf16.msra.mxu0 0
    %858 = vmatprep.mubr.bf16.mxu0 0
    %859 = vmatmul.mubr.bf16.gmra.mrb[0].mxu0 %v656
    %v860 = vpop.f32.mrb[0].mxu0
    %v861 = vadd.f32 %v773, %v860
    %v862 = vpop.f32.mrb[0].mxu0
    %v863 = vpop.f32.mrb[0].mxu0
    %v864 = vpop.f32.mrb[0].mxu0
    %865 = vdwg.mxu0
    %v866 = vld [vmem:[%s6] sm:$0x1]
    %v868 = vlaneseq
    %v869 = vshrl.u32 %v868, 7
    %v870 = vsub.s32 0, %v869
    %v871 = vrot.slane %v866, %v870
    %v873 = vadd.f32 %v861, %v871
    %v874 = vmul.f32 %v873, 0.5
    %v875 = vsel %vm61, %v873, %v874
    %v876 = vtanh.pop %v875
    %v877 = vmul.f32 %v876, 0.5
    %v878 = vadd.f32 %v877, 0.5
    %v879 = vsel %vm61, %v876, %v878
    %880 = vrot.lane.b32.xlu0 %v879, 96
    %v881 = vpop.permute.xlu0 %880
    %882 = vrot.lane.b32.xlu0 %v879, 64
    %v883 = vpop.permute.xlu0 %882
    %884 = vrot.lane.b32.xlu0 %v879, 32
    %v885 = vpop.permute.xlu0 %884
    %v886 = vmul.f32 %v881, %v529
    %v887 = vmul.f32 %v879, %v883
    %v888 = vadd.f32 %v886, %v887
    %v889 = vtanh.pop %v888
    %v890 = vmul.f32 %v885, %v889
    %s891 = scalar_lea.vmem [#allocation3], 8
    %892 = vst [vmem:[%s891] sm:$0xff] %v890
    %v893 = vld [vmem:[#allocation2 + $0x10] sm:$0xff]
    %v894 = vld [vmem:[%s2] sm:$0xf]
    %v895 = vld [vmem:[%s2 + $0x4] sm:$0xf]
    %v896 = vld [vmem:[%s2 + $0x8] sm:$0xf]
    %v897 = vld [vmem:[%s2 + $0xc] sm:$0xf]
    %v898 = vld [vmem:[%s2 + $0x10] sm:$0xf]
    %v899 = vld [vmem:[%s2 + $0x14] sm:$0xf]
    %v900 = vld [vmem:[%s2 + $0x18] sm:$0xf]
    %v901 = vld [vmem:[%s2 + $0x1c] sm:$0xf]
    %v902 = vld [vmem:[%s2 + $0x20] sm:$0xf]
    %v903 = vld [vmem:[%s2 + $0x24] sm:$0xf]
    %v904 = vld [vmem:[%s2 + $0x28] sm:$0xf]
    %v905 = vld [vmem:[%s2 + $0x2c] sm:$0xf]
    %v906 = vld [vmem:[%s2 + $0x30] sm:$0xf]
    %v907 = vld [vmem:[%s2 + $0x34] sm:$0xf]
    %v908 = vld [vmem:[%s2 + $0x38] sm:$0xf]
    %v909 = vld [vmem:[%s2 + $0x3c] sm:$0xf]
    %v926 = vunpack.c.l.b16 %v894
    %v927 = vunpack.c.l.b16 %v895
    %v928 = vunpack.c.l.b16 %v896
    %v929 = vunpack.c.l.b16 %v897
    %v930 = vunpack.c.l.b16 %v898
    %v931 = vunpack.c.l.b16 %v899
    %v932 = vunpack.c.l.b16 %v900
    %v933 = vunpack.c.l.b16 %v901
    %v934 = vunpack.c.l.b16 %v902
    %v935 = vunpack.c.l.b16 %v903
    %v936 = vunpack.c.l.b16 %v904
    %v937 = vunpack.c.l.b16 %v905
    %v938 = vunpack.c.l.b16 %v906
    %v939 = vunpack.c.l.b16 %v907
    %v940 = vunpack.c.l.b16 %v908
    %v941 = vunpack.c.l.b16 %v909
    %v942 = vpack.c.b16 %v927, %v926
    %v943 = vpack.c.b16 %v929, %v928
    %v944 = vpack.c.b16 %v931, %v930
    %v945 = vpack.c.b16 %v933, %v932
    %v946 = vpack.c.b16 %v935, %v934
    %v947 = vpack.c.b16 %v937, %v936
    %v948 = vpack.c.b16 %v939, %v938
    %v949 = vpack.c.b16 %v941, %v940
    %958 = vmatprep.subr.bf16.mxu0 0
    %959 = vmatpush1.bf16.msra.mxu0 %v942
    %960 = vmatprep.subr.bf16.mxu0 0
    %961 = vmatpush1.bf16.msra.mxu0 %v943
    %962 = vmatprep.subr.bf16.mxu0 0
    %963 = vmatpush1.bf16.msra.mxu0 %v944
    %964 = vmatprep.subr.bf16.mxu0 0
    %965 = vmatpush1.bf16.msra.mxu0 %v945
    %966 = vmatprep.subr.bf16.mxu0 0
    %967 = vmatpush1.bf16.msra.mxu0 %v946
    %968 = vmatprep.subr.bf16.mxu0 0
    %969 = vmatpush1.bf16.msra.mxu0 %v947
    %970 = vmatprep.subr.bf16.mxu0 0
    %971 = vmatpush1.bf16.msra.mxu0 %v948
    %972 = vmatprep.subr.bf16.mxu0 0
    %973 = vmatpush1.bf16.msra.mxu0 %v949
    %974 = vmatprep.subr.bf16.mxu0 0
    %975 = vmatpush1.bf16.msra.mxu0 0
    %976 = vmatprep.subr.bf16.mxu0 0
    %977 = vmatpush1.bf16.msra.mxu0 0
    %978 = vmatprep.subr.bf16.mxu0 0
    %979 = vmatpush1.bf16.msra.mxu0 0
    %980 = vmatprep.subr.bf16.mxu0 0
    %981 = vmatpush1.bf16.msra.mxu0 0
    %982 = vmatprep.subr.bf16.mxu0 0
    %983 = vmatpush1.bf16.msra.mxu0 0
    %984 = vmatprep.subr.bf16.mxu0 0
    %985 = vmatpush1.bf16.msra.mxu0 0
    %986 = vmatprep.subr.bf16.mxu0 0
    %987 = vmatpush1.bf16.msra.mxu0 0
    %988 = vmatprep.subr.bf16.mxu0 0
    %989 = vmatpush1.bf16.msra.mxu0 0
    %990 = vmatprep.mubr.bf16.mxu0 0
    %991 = vmatmul.mubr.bf16.gmra.mrb[0].mxu0 %v656
    %v992 = vpop.f32.mrb[0].mxu0
    %v993 = vadd.f32 0.0, %v992
    %v994 = vpop.f32.mrb[0].mxu0
    %v995 = vpop.f32.mrb[0].mxu0
    %v996 = vpop.f32.mrb[0].mxu0
    %997 = vdwg.mxu0
    %v998 = vadd.f32 %v893, %v993
    %v999 = vmul.f32 %v998, 0.5
    %v1000 = vsel %vm61, %v998, %v999
    %v1001 = vtanh.pop %v1000
    %v1002 = vmul.f32 %v1001, 0.5
    %v1003 = vadd.f32 %v1002, 0.5
    %v1004 = vsel %vm61, %v1001, %v1003
    %1005 = vrot.lane.b32.xlu0 %v1004, 96
    %v1006 = vpop.permute.xlu0 %1005
    %1007 = vrot.lane.b32.xlu0 %v1004, 64
    %v1008 = vpop.permute.xlu0 %1007
    %1009 = vrot.lane.b32.xlu0 %v1004, 32
    %v1010 = vpop.permute.xlu0 %1009
    %v1011 = vmul.f32 %v1006, %v653
    %v1012 = vmul.f32 %v1004, %v1008
    %v1013 = vadd.f32 %v1011, %v1012
    %v1014 = vtanh.pop %v1013
    %v1015 = vmul.f32 %v1010, %v1014
    %v1016 = vpack.c.bf16 %v1015, %v1015
    %v1017 = vld [vmem:[%s4] sm:$0xf]
    %v1018 = vld [vmem:[%s4 + $0x4] sm:$0xf]
    %v1019 = vld [vmem:[%s4 + $0x8] sm:$0xf]
    %v1020 = vld [vmem:[%s4 + $0xc] sm:$0xf]
    %v1021 = vld [vmem:[%s4 + $0x10] sm:$0xf]
    %v1022 = vld [vmem:[%s4 + $0x14] sm:$0xf]
    %v1023 = vld [vmem:[%s4 + $0x18] sm:$0xf]
    %v1024 = vld [vmem:[%s4 + $0x1c] sm:$0xf]
    %v1025 = vld [vmem:[%s4 + $0x20] sm:$0xf]
    %v1026 = vld [vmem:[%s4 + $0x24] sm:$0xf]
    %v1027 = vld [vmem:[%s4 + $0x28] sm:$0xf]
    %v1028 = vld [vmem:[%s4 + $0x2c] sm:$0xf]
    %v1029 = vld [vmem:[%s4 + $0x30] sm:$0xf]
    %v1030 = vld [vmem:[%s4 + $0x34] sm:$0xf]
    %v1031 = vld [vmem:[%s4 + $0x38] sm:$0xf]
    %v1032 = vld [vmem:[%s4 + $0x3c] sm:$0xf]
    %v1033 = vpack.c.bf16 %v890, %v890
    %v1034 = vld [vmem:[#allocation6] sm:$0xf]
    %v1035 = vld [vmem:[#allocation6 + $0x4] sm:$0xf]
    %v1036 = vld [vmem:[#allocation6 + $0x8] sm:$0xf]
    %v1037 = vld [vmem:[#allocation6 + $0xc] sm:$0xf]
    %v1038 = vld [vmem:[#allocation6 + $0x10] sm:$0xf]
    %v1039 = vld [vmem:[#allocation6 + $0x14] sm:$0xf]
    %v1040 = vld [vmem:[#allocation6 + $0x18] sm:$0xf]
    %v1041 = vld [vmem:[#allocation6 + $0x1c] sm:$0xf]
    %v1042 = vld [vmem:[#allocation6 + $0x20] sm:$0xf]
    %v1043 = vld [vmem:[#allocation6 + $0x24] sm:$0xf]
    %v1044 = vld [vmem:[#allocation6 + $0x28] sm:$0xf]
    %v1045 = vld [vmem:[#allocation6 + $0x2c] sm:$0xf]
    %v1046 = vld [vmem:[#allocation6 + $0x30] sm:$0xf]
    %v1047 = vld [vmem:[#allocation6 + $0x34] sm:$0xf]
    %v1048 = vld [vmem:[#allocation6 + $0x38] sm:$0xf]
    %v1049 = vld [vmem:[#allocation6 + $0x3c] sm:$0xf]
    %v1066 = vunpack.c.l.b16 %v1034
    %v1067 = vunpack.c.l.b16 %v1035
    %v1068 = vunpack.c.l.b16 %v1036
    %v1069 = vunpack.c.l.b16 %v1037
    %v1070 = vunpack.c.l.b16 %v1038
    %v1071 = vunpack.c.l.b16 %v1039
    %v1072 = vunpack.c.l.b16 %v1040
    %v1073 = vunpack.c.l.b16 %v1041
    %v1074 = vunpack.c.l.b16 %v1042
    %v1075 = vunpack.c.l.b16 %v1043
    %v1076 = vunpack.c.l.b16 %v1044
    %v1077 = vunpack.c.l.b16 %v1045
    %v1078 = vunpack.c.l.b16 %v1046
    %v1079 = vunpack.c.l.b16 %v1047
    %v1080 = vunpack.c.l.b16 %v1048
    %v1081 = vunpack.c.l.b16 %v1049
    %v1082 = vpack.c.b16 %v1067, %v1066
    %v1083 = vpack.c.b16 %v1069, %v1068
    %v1084 = vpack.c.b16 %v1071, %v1070
    %v1085 = vpack.c.b16 %v1073, %v1072
    %v1086 = vpack.c.b16 %v1075, %v1074
    %v1087 = vpack.c.b16 %v1077, %v1076
    %v1088 = vpack.c.b16 %v1079, %v1078
    %v1089 = vpack.c.b16 %v1081, %v1080
    %1098 = vmatprep.subr.bf16.mxu0 0
    %1099 = vmatpush1.bf16.msra.mxu0 %v1082
    %1100 = vmatprep.subr.bf16.mxu0 0
    %1101 = vmatpush1.bf16.msra.mxu0 %v1083
    %1102 = vmatprep.subr.bf16.mxu0 0
    %1103 = vmatpush1.bf16.msra.mxu0 %v1084
    %1104 = vmatprep.subr.bf16.mxu0 0
    %1105 = vmatpush1.bf16.msra.mxu0 %v1085
    %1106 = vmatprep.subr.bf16.mxu0 0
    %1107 = vmatpush1.bf16.msra.mxu0 %v1086
    %1108 = vmatprep.subr.bf16.mxu0 0
    %1109 = vmatpush1.bf16.msra.mxu0 %v1087
    %1110 = vmatprep.subr.bf16.mxu0 0
    %1111 = vmatpush1.bf16.msra.mxu0 %v1088
    %1112 = vmatprep.subr.bf16.mxu0 0
    %1113 = vmatpush1.bf16.msra.mxu0 %v1089
    %1114 = vmatprep.subr.bf16.mxu0 0
    %1115 = vmatpush1.bf16.msra.mxu0 0
    %1116 = vmatprep.subr.bf16.mxu0 0
    %1117 = vmatpush1.bf16.msra.mxu0 0
    %1118 = vmatprep.subr.bf16.mxu0 0
    %1119 = vmatpush1.bf16.msra.mxu0 0
    %1120 = vmatprep.subr.bf16.mxu0 0
    %1121 = vmatpush1.bf16.msra.mxu0 0
    %1122 = vmatprep.subr.bf16.mxu0 0
    %1123 = vmatpush1.bf16.msra.mxu0 0
    %1124 = vmatprep.subr.bf16.mxu0 0
    %1125 = vmatpush1.bf16.msra.mxu0 0
    %1126 = vmatprep.subr.bf16.mxu0 0
    %1127 = vmatpush1.bf16.msra.mxu0 0
    %1128 = vmatprep.subr.bf16.mxu0 0
    %1129 = vmatpush1.bf16.msra.mxu0 0
    %1130 = vmatprep.mubr.bf16.mxu0 0
    %1131 = vmatmul.mubr.bf16.gmra.mrb[0].mxu0 %v1033
    %v1132 = vpop.f32.mrb[0].mxu0
    %v1133 = vadd.f32 0.0, %v1132
    %v1134 = vpop.f32.mrb[0].mxu0
    %v1135 = vpop.f32.mrb[0].mxu0
    %v1136 = vpop.f32.mrb[0].mxu0
    %1137 = vdwg.mxu0
    %v1154 = vunpack.c.l.b16 %v1017
    %v1155 = vunpack.c.l.b16 %v1018
    %v1156 = vunpack.c.l.b16 %v1019
    %v1157 = vunpack.c.l.b16 %v1020
    %v1158 = vunpack.c.l.b16 %v1021
    %v1159 = vunpack.c.l.b16 %v1022
    %v1160 = vunpack.c.l.b16 %v1023
    %v1161 = vunpack.c.l.b16 %v1024
    %v1162 = vunpack.c.l.b16 %v1025
    %v1163 = vunpack.c.l.b16 %v1026
    %v1164 = vunpack.c.l.b16 %v1027
    %v1165 = vunpack.c.l.b16 %v1028
    %v1166 = vunpack.c.l.b16 %v1029
    %v1167 = vunpack.c.l.b16 %v1030
    %v1168 = vunpack.c.l.b16 %v1031
    %v1169 = vunpack.c.l.b16 %v1032
    %v1170 = vpack.c.b16 %v1155, %v1154
    %v1171 = vpack.c.b16 %v1157, %v1156
    %v1172 = vpack.c.b16 %v1159, %v1158
    %v1173 = vpack.c.b16 %v1161, %v1160
    %v1174 = vpack.c.b16 %v1163, %v1162
    %v1175 = vpack.c.b16 %v1165, %v1164
    %v1176 = vpack.c.b16 %v1167, %v1166
    %v1177 = vpack.c.b16 %v1169, %v1168
    %1186 = vmatprep.subr.bf16.mxu0 0
    %1187 = vmatpush1.bf16.msra.mxu0 %v1170
    %1188 = vmatprep.subr.bf16.mxu0 0
    %1189 = vmatpush1.bf16.msra.mxu0 %v1171
    %1190 = vmatprep.subr.bf16.mxu0 0
    %1191 = vmatpush1.bf16.msra.mxu0 %v1172
    %1192 = vmatprep.subr.bf16.mxu0 0
    %1193 = vmatpush1.bf16.msra.mxu0 %v1173
    %1194 = vmatprep.subr.bf16.mxu0 0
    %1195 = vmatpush1.bf16.msra.mxu0 %v1174
    %1196 = vmatprep.subr.bf16.mxu0 0
    %1197 = vmatpush1.bf16.msra.mxu0 %v1175
    %1198 = vmatprep.subr.bf16.mxu0 0
    %1199 = vmatpush1.bf16.msra.mxu0 %v1176
    %1200 = vmatprep.subr.bf16.mxu0 0
    %1201 = vmatpush1.bf16.msra.mxu0 %v1177
    %1202 = vmatprep.subr.bf16.mxu0 0
    %1203 = vmatpush1.bf16.msra.mxu0 0
    %1204 = vmatprep.subr.bf16.mxu0 0
    %1205 = vmatpush1.bf16.msra.mxu0 0
    %1206 = vmatprep.subr.bf16.mxu0 0
    %1207 = vmatpush1.bf16.msra.mxu0 0
    %1208 = vmatprep.subr.bf16.mxu0 0
    %1209 = vmatpush1.bf16.msra.mxu0 0
    %1210 = vmatprep.subr.bf16.mxu0 0
    %1211 = vmatpush1.bf16.msra.mxu0 0
    %1212 = vmatprep.subr.bf16.mxu0 0
    %1213 = vmatpush1.bf16.msra.mxu0 0
    %1214 = vmatprep.subr.bf16.mxu0 0
    %1215 = vmatpush1.bf16.msra.mxu0 0
    %1216 = vmatprep.subr.bf16.mxu0 0
    %1217 = vmatpush1.bf16.msra.mxu0 0
    %1218 = vmatprep.mubr.bf16.mxu0 0
    %1219 = vmatmul.mubr.bf16.gmra.mrb[0].mxu0 %v1016
    %v1220 = vpop.f32.mrb[0].mxu0
    %v1221 = vadd.f32 %v1133, %v1220
    %v1222 = vpop.f32.mrb[0].mxu0
    %v1223 = vpop.f32.mrb[0].mxu0
    %v1224 = vpop.f32.mrb[0].mxu0
    %1225 = vdwg.mxu0
    %v1226 = vld [vmem:[%s6] sm:$0x1]
    %v1228 = vlaneseq
    %v1229 = vshrl.u32 %v1228, 7
    %v1230 = vsub.s32 0, %v1229
    %v1231 = vrot.slane %v1226, %v1230
    %v1233 = vadd.f32 %v1221, %v1231
    %v1234 = vmul.f32 %v1233, 0.5
    %v1235 = vsel %vm61, %v1233, %v1234
    %v1236 = vtanh.pop %v1235
    %v1237 = vmul.f32 %v1236, 0.5
    %v1238 = vadd.f32 %v1237, 0.5
    %v1239 = vsel %vm61, %v1236, %v1238
    %1240 = vrot.lane.b32.xlu0 %v1239, 96
    %v1241 = vpop.permute.xlu0 %1240
    %1242 = vrot.lane.b32.xlu0 %v1239, 64
    %v1243 = vpop.permute.xlu0 %1242
    %1244 = vrot.lane.b32.xlu0 %v1239, 32
    %v1245 = vpop.permute.xlu0 %1244
    %v1246 = vmul.f32 %v1241, %v888
    %v1247 = vmul.f32 %v1239, %v1243
    %v1248 = vadd.f32 %v1246, %v1247
    %v1249 = vtanh.pop %v1248
    %v1250 = vmul.f32 %v1245, %v1249
    %s1251 = scalar_lea.vmem [#allocation3], 16
    %1252 = vst [vmem:[%s1251] sm:$0xff] %v1250
    %v1253 = vld [vmem:[#allocation2 + $0x18] sm:$0xff]
    %v1254 = vld [vmem:[%s2] sm:$0xf]
    %v1255 = vld [vmem:[%s2 + $0x4] sm:$0xf]
    %v1256 = vld [vmem:[%s2 + $0x8] sm:$0xf]
    %v1257 = vld [vmem:[%s2 + $0xc] sm:$0xf]
    %v1258 = vld [vmem:[%s2 + $0x10] sm:$0xf]
    %v1259 = vld [vmem:[%s2 + $0x14] sm:$0xf]
    %v1260 = vld [vmem:[%s2 + $0x18] sm:$0xf]
    %v1261 = vld [vmem:[%s2 + $0x1c] sm:$0xf]
    %v1262 = vld [vmem:[%s2 + $0x20] sm:$0xf]
    %v1263 = vld [vmem:[%s2 + $0x24] sm:$0xf]
    %v1264 = vld [vmem:[%s2 + $0x28] sm:$0xf]
    %v1265 = vld [vmem:[%s2 + $0x2c] sm:$0xf]
    %v1266 = vld [vmem:[%s2 + $0x30] sm:$0xf]
    %v1267 = vld [vmem:[%s2 + $0x34] sm:$0xf]
    %v1268 = vld [vmem:[%s2 + $0x38] sm:$0xf]
    %v1269 = vld [vmem:[%s2 + $0x3c] sm:$0xf]
    %v1286 = vunpack.c.l.b16 %v1254
    %v1287 = vunpack.c.l.b16 %v1255
    %v1288 = vunpack.c.l.b16 %v1256
    %v1289 = vunpack.c.l.b16 %v1257
    %v1290 = vunpack.c.l.b16 %v1258
    %v1291 = vunpack.c.l.b16 %v1259
    %v1292 = vunpack.c.l.b16 %v1260
    %v1293 = vunpack.c.l.b16 %v1261
    %v1294 = vunpack.c.l.b16 %v1262
    %v1295 = vunpack.c.l.b16 %v1263
    %v1296 = vunpack.c.l.b16 %v1264
    %v1297 = vunpack.c.l.b16 %v1265
    %v1298 = vunpack.c.l.b16 %v1266
    %v1299 = vunpack.c.l.b16 %v1267
    %v1300 = vunpack.c.l.b16 %v1268
    %v1301 = vunpack.c.l.b16 %v1269
    %v1302 = vpack.c.b16 %v1287, %v1286
    %v1303 = vpack.c.b16 %v1289, %v1288
    %v1304 = vpack.c.b16 %v1291, %v1290
    %v1305 = vpack.c.b16 %v1293, %v1292
    %v1306 = vpack.c.b16 %v1295, %v1294
    %v1307 = vpack.c.b16 %v1297, %v1296
    %v1308 = vpack.c.b16 %v1299, %v1298
    %v1309 = vpack.c.b16 %v1301, %v1300
    %1318 = vmatprep.subr.bf16.mxu0 0
    %1319 = vmatpush1.bf16.msra.mxu0 %v1302
    %1320 = vmatprep.subr.bf16.mxu0 0
    %1321 = vmatpush1.bf16.msra.mxu0 %v1303
    %1322 = vmatprep.subr.bf16.mxu0 0
    %1323 = vmatpush1.bf16.msra.mxu0 %v1304
    %1324 = vmatprep.subr.bf16.mxu0 0
    %1325 = vmatpush1.bf16.msra.mxu0 %v1305
    %1326 = vmatprep.subr.bf16.mxu0 0
    %1327 = vmatpush1.bf16.msra.mxu0 %v1306
    %1328 = vmatprep.subr.bf16.mxu0 0
    %1329 = vmatpush1.bf16.msra.mxu0 %v1307
    %1330 = vmatprep.subr.bf16.mxu0 0
    %1331 = vmatpush1.bf16.msra.mxu0 %v1308
    %1332 = vmatprep.subr.bf16.mxu0 0
    %1333 = vmatpush1.bf16.msra.mxu0 %v1309
    %1334 = vmatprep.subr.bf16.mxu0 0
    %1335 = vmatpush1.bf16.msra.mxu0 0
    %1336 = vmatprep.subr.bf16.mxu0 0
    %1337 = vmatpush1.bf16.msra.mxu0 0
    %1338 = vmatprep.subr.bf16.mxu0 0
    %1339 = vmatpush1.bf16.msra.mxu0 0
    %1340 = vmatprep.subr.bf16.mxu0 0
    %1341 = vmatpush1.bf16.msra.mxu0 0
    %1342 = vmatprep.subr.bf16.mxu0 0
    %1343 = vmatpush1.bf16.msra.mxu0 0
    %1344 = vmatprep.subr.bf16.mxu0 0
    %1345 = vmatpush1.bf16.msra.mxu0 0
    %1346 = vmatprep.subr.bf16.mxu0 0
    %1347 = vmatpush1.bf16.msra.mxu0 0
    %1348 = vmatprep.subr.bf16.mxu0 0
    %1349 = vmatpush1.bf16.msra.mxu0 0
    %1350 = vmatprep.mubr.bf16.mxu0 0
    %1351 = vmatmul.mubr.bf16.gmra.mrb[0].mxu0 %v1016
    %v1352 = vpop.f32.mrb[0].mxu0
    %v1353 = vadd.f32 0.0, %v1352
    %v1354 = vpop.f32.mrb[0].mxu0
    %v1355 = vpop.f32.mrb[0].mxu0
    %v1356 = vpop.f32.mrb[0].mxu0
    %1357 = vdwg.mxu0
    %v1358 = vadd.f32 %v1253, %v1353
    %v1359 = vmul.f32 %v1358, 0.5
    %v1360 = vsel %vm61, %v1358, %v1359
    %v1361 = vtanh.pop %v1360
    %v1362 = vmul.f32 %v1361, 0.5
    %v1363 = vadd.f32 %v1362, 0.5
    %v1364 = vsel %vm61, %v1361, %v1363
    %1365 = vrot.lane.b32.xlu0 %v1364, 96
    %v1366 = vpop.permute.xlu0 %1365
    %1367 = vrot.lane.b32.xlu0 %v1364, 64
    %v1368 = vpop.permute.xlu0 %1367
    %1369 = vrot.lane.b32.xlu0 %v1364, 32
    %v1370 = vpop.permute.xlu0 %1369
    %v1371 = vmul.f32 %v1366, %v1013
    %v1372 = vmul.f32 %v1364, %v1368
    %v1373 = vadd.f32 %v1371, %v1372
    %v1374 = vtanh.pop %v1373
    %v1375 = vmul.f32 %v1370, %v1374
    %v1376 = vpack.c.bf16 %v1375, %v1375
    %v1377 = vld [vmem:[%s4] sm:$0xf]
    %v1378 = vld [vmem:[%s4 + $0x4] sm:$0xf]
    %v1379 = vld [vmem:[%s4 + $0x8] sm:$0xf]
    %v1380 = vld [vmem:[%s4 + $0xc] sm:$0xf]
    %v1381 = vld [vmem:[%s4 + $0x10] sm:$0xf]
    %v1382 = vld [vmem:[%s4 + $0x14] sm:$0xf]
    %v1383 = vld [vmem:[%s4 + $0x18] sm:$0xf]
    %v1384 = vld [vmem:[%s4 + $0x1c] sm:$0xf]
    %v1385 = vld [vmem:[%s4 + $0x20] sm:$0xf]
    %v1386 = vld [vmem:[%s4 + $0x24] sm:$0xf]
    %v1387 = vld [vmem:[%s4 + $0x28] sm:$0xf]
    %v1388 = vld [vmem:[%s4 + $0x2c] sm:$0xf]
    %v1389 = vld [vmem:[%s4 + $0x30] sm:$0xf]
    %v1390 = vld [vmem:[%s4 + $0x34] sm:$0xf]
    %v1391 = vld [vmem:[%s4 + $0x38] sm:$0xf]
    %v1392 = vld [vmem:[%s4 + $0x3c] sm:$0xf]
    %v1393 = vpack.c.bf16 %v1250, %v1250
    %v1394 = vld [vmem:[#allocation6] sm:$0xf]
    %v1395 = vld [vmem:[#allocation6 + $0x4] sm:$0xf]
    %v1396 = vld [vmem:[#allocation6 + $0x8] sm:$0xf]
    %v1397 = vld [vmem:[#allocation6 + $0xc] sm:$0xf]
    %v1398 = vld [vmem:[#allocation6 + $0x10] sm:$0xf]
    %v1399 = vld [vmem:[#allocation6 + $0x14] sm:$0xf]
    %v1400 = vld [vmem:[#allocation6 + $0x18] sm:$0xf]
    %v1401 = vld [vmem:[#allocation6 + $0x1c] sm:$0xf]
    %v1402 = vld [vmem:[#allocation6 + $0x20] sm:$0xf]
    %v1403 = vld [vmem:[#allocation6 + $0x24] sm:$0xf]
    %v1404 = vld [vmem:[#allocation6 + $0x28] sm:$0xf]
    %v1405 = vld [vmem:[#allocation6 + $0x2c] sm:$0xf]
    %v1406 = vld [vmem:[#allocation6 + $0x30] sm:$0xf]
    %v1407 = vld [vmem:[#allocation6 + $0x34] sm:$0xf]
    %v1408 = vld [vmem:[#allocation6 + $0x38] sm:$0xf]
    %v1409 = vld [vmem:[#allocation6 + $0x3c] sm:$0xf]
    %v1426 = vunpack.c.l.b16 %v1394
    %v1427 = vunpack.c.l.b16 %v1395
    %v1428 = vunpack.c.l.b16 %v1396
    %v1429 = vunpack.c.l.b16 %v1397
    %v1430 = vunpack.c.l.b16 %v1398
    %v1431 = vunpack.c.l.b16 %v1399
    %v1432 = vunpack.c.l.b16 %v1400
    %v1433 = vunpack.c.l.b16 %v1401
    %v1434 = vunpack.c.l.b16 %v1402
    %v1435 = vunpack.c.l.b16 %v1403
    %v1436 = vunpack.c.l.b16 %v1404
    %v1437 = vunpack.c.l.b16 %v1405
    %v1438 = vunpack.c.l.b16 %v1406
    %v1439 = vunpack.c.l.b16 %v1407
    %v1440 = vunpack.c.l.b16 %v1408
    %v1441 = vunpack.c.l.b16 %v1409
    %v1442 = vpack.c.b16 %v1427, %v1426
    %v1443 = vpack.c.b16 %v1429, %v1428
    %v1444 = vpack.c.b16 %v1431, %v1430
    %v1445 = vpack.c.b16 %v1433, %v1432
    %v1446 = vpack.c.b16 %v1435, %v1434
    %v1447 = vpack.c.b16 %v1437, %v1436
    %v1448 = vpack.c.b16 %v1439, %v1438
    %v1449 = vpack.c.b16 %v1441, %v1440
    %1458 = vmatprep.subr.bf16.mxu0 0
    %1459 = vmatpush1.bf16.msra.mxu0 %v1442
    %1460 = vmatprep.subr.bf16.mxu0 0
    %1461 = vmatpush1.bf16.msra.mxu0 %v1443
    %1462 = vmatprep.subr.bf16.mxu0 0
    %1463 = vmatpush1.bf16.msra.mxu0 %v1444
    %1464 = vmatprep.subr.bf16.mxu0 0
    %1465 = vmatpush1.bf16.msra.mxu0 %v1445
    %1466 = vmatprep.subr.bf16.mxu0 0
    %1467 = vmatpush1.bf16.msra.mxu0 %v1446
    %1468 = vmatprep.subr.bf16.mxu0 0
    %1469 = vmatpush1.bf16.msra.mxu0 %v1447
    %1470 = vmatprep.subr.bf16.mxu0 0
    %1471 = vmatpush1.bf16.msra.mxu0 %v1448
    %1472 = vmatprep.subr.bf16.mxu0 0
    %1473 = vmatpush1.bf16.msra.mxu0 %v1449
    %1474 = vmatprep.subr.bf16.mxu0 0
    %1475 = vmatpush1.bf16.msra.mxu0 0
    %1476 = vmatprep.subr.bf16.mxu0 0
    %1477 = vmatpush1.bf16.msra.mxu0 0
    %1478 = vmatprep.subr.bf16.mxu0 0
    %1479 = vmatpush1.bf16.msra.mxu0 0
    %1480 = vmatprep.subr.bf16.mxu0 0
    %1481 = vmatpush1.bf16.msra.mxu0 0
    %1482 = vmatprep.subr.bf16.mxu0 0
    %1483 = vmatpush1.bf16.msra.mxu0 0
    %1484 = vmatprep.subr.bf16.mxu0 0
    %1485 = vmatpush1.bf16.msra.mxu0 0
    %1486 = vmatprep.subr.bf16.mxu0 0
    %1487 = vmatpush1.bf16.msra.mxu0 0
    %1488 = vmatprep.subr.bf16.mxu0 0
    %1489 = vmatpush1.bf16.msra.mxu0 0
    %1490 = vmatprep.mubr.bf16.mxu0 0
    %1491 = vmatmul.mubr.bf16.gmra.mrb[0].mxu0 %v1393
    %v1492 = vpop.f32.mrb[0].mxu0
    %v1493 = vadd.f32 0.0, %v1492
    %v1494 = vpop.f32.mrb[0].mxu0
    %v1495 = vpop.f32.mrb[0].mxu0
    %v1496 = vpop.f32.mrb[0].mxu0
    %1497 = vdwg.mxu0
    %v1514 = vunpack.c.l.b16 %v1377
    %v1515 = vunpack.c.l.b16 %v1378
    %v1516 = vunpack.c.l.b16 %v1379
    %v1517 = vunpack.c.l.b16 %v1380
    %v1518 = vunpack.c.l.b16 %v1381
    %v1519 = vunpack.c.l.b16 %v1382
    %v1520 = vunpack.c.l.b16 %v1383
    %v1521 = vunpack.c.l.b16 %v1384
    %v1522 = vunpack.c.l.b16 %v1385
    %v1523 = vunpack.c.l.b16 %v1386
    %v1524 = vunpack.c.l.b16 %v1387
    %v1525 = vunpack.c.l.b16 %v1388
    %v1526 = vunpack.c.l.b16 %v1389
    %v1527 = vunpack.c.l.b16 %v1390
    %v1528 = vunpack.c.l.b16 %v1391
    %v1529 = vunpack.c.l.b16 %v1392
    %v1530 = vpack.c.b16 %v1515, %v1514
    %v1531 = vpack.c.b16 %v1517, %v1516
    %v1532 = vpack.c.b16 %v1519, %v1518
    %v1533 = vpack.c.b16 %v1521, %v1520
    %v1534 = vpack.c.b16 %v1523, %v1522
    %v1535 = vpack.c.b16 %v1525, %v1524
    %v1536 = vpack.c.b16 %v1527, %v1526
    %v1537 = vpack.c.b16 %v1529, %v1528
    %1546 = vmatprep.subr.bf16.mxu0 0
    %1547 = vmatpush1.bf16.msra.mxu0 %v1530
    %1548 = vmatprep.subr.bf16.mxu0 0
    %1549 = vmatpush1.bf16.msra.mxu0 %v1531
    %1550 = vmatprep.subr.bf16.mxu0 0
    %1551 = vmatpush1.bf16.msra.mxu0 %v1532
    %1552 = vmatprep.subr.bf16.mxu0 0
    %1553 = vmatpush1.bf16.msra.mxu0 %v1533
    %1554 = vmatprep.subr.bf16.mxu0 0
    %1555 = vmatpush1.bf16.msra.mxu0 %v1534
    %1556 = vmatprep.subr.bf16.mxu0 0
    %1557 = vmatpush1.bf16.msra.mxu0 %v1535
    %1558 = vmatprep.subr.bf16.mxu0 0
    %1559 = vmatpush1.bf16.msra.mxu0 %v1536
    %1560 = vmatprep.subr.bf16.mxu0 0
    %1561 = vmatpush1.bf16.msra.mxu0 %v1537
    %1562 = vmatprep.subr.bf16.mxu0 0
    %1563 = vmatpush1.bf16.msra.mxu0 0
    %1564 = vmatprep.subr.bf16.mxu0 0
    %1565 = vmatpush1.bf16.msra.mxu0 0
    %1566 = vmatprep.subr.bf16.mxu0 0
    %1567 = vmatpush1.bf16.msra.mxu0 0
    %1568 = vmatprep.subr.bf16.mxu0 0
    %1569 = vmatpush1.bf16.msra.mxu0 0
    %1570 = vmatprep.subr.bf16.mxu0 0
    %1571 = vmatpush1.bf16.msra.mxu0 0
    %1572 = vmatprep.subr.bf16.mxu0 0
    %1573 = vmatpush1.bf16.msra.mxu0 0
    %1574 = vmatprep.subr.bf16.mxu0 0
    %1575 = vmatpush1.bf16.msra.mxu0 0
    %1576 = vmatprep.subr.bf16.mxu0 0
    %1577 = vmatpush1.bf16.msra.mxu0 0
    %1578 = vmatprep.mubr.bf16.mxu0 0
    %1579 = vmatmul.mubr.bf16.gmra.mrb[0].mxu0 %v1376
    %v1580 = vpop.f32.mrb[0].mxu0
    %v1581 = vadd.f32 %v1493, %v1580
    %v1582 = vpop.f32.mrb[0].mxu0
    %v1583 = vpop.f32.mrb[0].mxu0
    %v1584 = vpop.f32.mrb[0].mxu0
    %1585 = vdwg.mxu0
    %v1586 = vld [vmem:[%s6] sm:$0x1]
    %v1588 = vlaneseq
    %v1589 = vshrl.u32 %v1588, 7
    %v1590 = vsub.s32 0, %v1589
    %v1591 = vrot.slane %v1586, %v1590
    %v1593 = vadd.f32 %v1581, %v1591
    %v1594 = vmul.f32 %v1593, 0.5
    %v1595 = vsel %vm61, %v1593, %v1594
    %v1596 = vtanh.pop %v1595
    %v1597 = vmul.f32 %v1596, 0.5
    %v1598 = vadd.f32 %v1597, 0.5
    %v1599 = vsel %vm61, %v1596, %v1598
    %1600 = vrot.lane.b32.xlu0 %v1599, 96
    %v1601 = vpop.permute.xlu0 %1600
    %1602 = vrot.lane.b32.xlu0 %v1599, 64
    %v1603 = vpop.permute.xlu0 %1602
    %1604 = vrot.lane.b32.xlu0 %v1599, 32
    %v1605 = vpop.permute.xlu0 %1604
    %v1606 = vmul.f32 %v1601, %v1248
    %v1607 = vmul.f32 %v1599, %v1603
    %v1608 = vadd.f32 %v1606, %v1607
    %v1609 = vtanh.pop %v1608
    %v1610 = vmul.f32 %v1605, %v1609
    %s1611 = scalar_lea.vmem [#allocation3], 24
    %1612 = vst [vmem:[%s1611] sm:$0xff] %v1610
    %v1613 = vld [vmem:[#allocation2 + $0x20] sm:$0xff]
    %v1614 = vld [vmem:[%s2] sm:$0xf]
    %v1615 = vld [vmem:[%s2 + $0x4] sm:$0xf]
    %v1616 = vld [vmem:[%s2 + $0x8] sm:$0xf]
    %v1617 = vld [vmem:[%s2 + $0xc] sm:$0xf]
    %v1618 = vld [vmem:[%s2 + $0x10] sm:$0xf]
    %v1619 = vld [vmem:[%s2 + $0x14] sm:$0xf]
    %v1620 = vld [vmem:[%s2 + $0x18] sm:$0xf]
    %v1621 = vld [vmem:[%s2 + $0x1c] sm:$0xf]
    %v1622 = vld [vmem:[%s2 + $0x20] sm:$0xf]
    %v1623 = vld [vmem:[%s2 + $0x24] sm:$0xf]
    %v1624 = vld [vmem:[%s2 + $0x28] sm:$0xf]
    %v1625 = vld [vmem:[%s2 + $0x2c] sm:$0xf]
    %v1626 = vld [vmem:[%s2 + $0x30] sm:$0xf]
    %v1627 = vld [vmem:[%s2 + $0x34] sm:$0xf]
    %v1628 = vld [vmem:[%s2 + $0x38] sm:$0xf]
    %v1629 = vld [vmem:[%s2 + $0x3c] sm:$0xf]
    %v1646 = vunpack.c.l.b16 %v1614
    %v1647 = vunpack.c.l.b16 %v1615
    %v1648 = vunpack.c.l.b16 %v1616
    %v1649 = vunpack.c.l.b16 %v1617
    %v1650 = vunpack.c.l.b16 %v1618
    %v1651 = vunpack.c.l.b16 %v1619
    %v1652 = vunpack.c.l.b16 %v1620
    %v1653 = vunpack.c.l.b16 %v1621
    %v1654 = vunpack.c.l.b16 %v1622
    %v1655 = vunpack.c.l.b16 %v1623
    %v1656 = vunpack.c.l.b16 %v1624
    %v1657 = vunpack.c.l.b16 %v1625
    %v1658 = vunpack.c.l.b16 %v1626
    %v1659 = vunpack.c.l.b16 %v1627
    %v1660 = vunpack.c.l.b16 %v1628
    %v1661 = vunpack.c.l.b16 %v1629
    %v1662 = vpack.c.b16 %v1647, %v1646
    %v1663 = vpack.c.b16 %v1649, %v1648
    %v1664 = vpack.c.b16 %v1651, %v1650
    %v1665 = vpack.c.b16 %v1653, %v1652
    %v1666 = vpack.c.b16 %v1655, %v1654
    %v1667 = vpack.c.b16 %v1657, %v1656
    %v1668 = vpack.c.b16 %v1659, %v1658
    %v1669 = vpack.c.b16 %v1661, %v1660
    %1678 = vmatprep.subr.bf16.mxu0 0
    %1679 = vmatpush1.bf16.msra.mxu0 %v1662
    %1680 = vmatprep.subr.bf16.mxu0 0
    %1681 = vmatpush1.bf16.msra.mxu0 %v1663
    %1682 = vmatprep.subr.bf16.mxu0 0
    %1683 = vmatpush1.bf16.msra.mxu0 %v1664
    %1684 = vmatprep.subr.bf16.mxu0 0
    %1685 = vmatpush1.bf16.msra.mxu0 %v1665
    %1686 = vmatprep.subr.bf16.mxu0 0
    %1687 = vmatpush1.bf16.msra.mxu0 %v1666
    %1688 = vmatprep.subr.bf16.mxu0 0
    %1689 = vmatpush1.bf16.msra.mxu0 %v1667
    %1690 = vmatprep.subr.bf16.mxu0 0
    %1691 = vmatpush1.bf16.msra.mxu0 %v1668
    %1692 = vmatprep.subr.bf16.mxu0 0
    %1693 = vmatpush1.bf16.msra.mxu0 %v1669
    %1694 = vmatprep.subr.bf16.mxu0 0
    %1695 = vmatpush1.bf16.msra.mxu0 0
    %1696 = vmatprep.subr.bf16.mxu0 0
    %1697 = vmatpush1.bf16.msra.mxu0 0
    %1698 = vmatprep.subr.bf16.mxu0 0
    %1699 = vmatpush1.bf16.msra.mxu0 0
    %1700 = vmatprep.subr.bf16.mxu0 0
    %1701 = vmatpush1.bf16.msra.mxu0 0
    %1702 = vmatprep.subr.bf16.mxu0 0
    %1703 = vmatpush1.bf16.msra.mxu0 0
    %1704 = vmatprep.subr.bf16.mxu0 0
    %1705 = vmatpush1.bf16.msra.mxu0 0
    %1706 = vmatprep.subr.bf16.mxu0 0
    %1707 = vmatpush1.bf16.msra.mxu0 0
    %1708 = vmatprep.subr.bf16.mxu0 0
    %1709 = vmatpush1.bf16.msra.mxu0 0
    %1710 = vmatprep.mubr.bf16.mxu0 0
    %1711 = vmatmul.mubr.bf16.gmra.mrb[0].mxu0 %v1376
    %v1712 = vpop.f32.mrb[0].mxu0
    %v1713 = vadd.f32 0.0, %v1712
    %v1714 = vpop.f32.mrb[0].mxu0
    %v1715 = vpop.f32.mrb[0].mxu0
    %v1716 = vpop.f32.mrb[0].mxu0
    %1717 = vdwg.mxu0
    %v1718 = vadd.f32 %v1613, %v1713
    %v1719 = vmul.f32 %v1718, 0.5
    %v1720 = vsel %vm61, %v1718, %v1719
    %v1721 = vtanh.pop %v1720
    %v1722 = vmul.f32 %v1721, 0.5
    %v1723 = vadd.f32 %v1722, 0.5
    %v1724 = vsel %vm61, %v1721, %v1723
    %1725 = vrot.lane.b32.xlu0 %v1724, 96
    %v1726 = vpop.permute.xlu0 %1725
    %1727 = vrot.lane.b32.xlu0 %v1724, 64
    %v1728 = vpop.permute.xlu0 %1727
    %1729 = vrot.lane.b32.xlu0 %v1724, 32
    %v1730 = vpop.permute.xlu0 %1729
    %v1731 = vmul.f32 %v1726, %v1373
    %v1732 = vmul.f32 %v1724, %v1728
    %v1733 = vadd.f32 %v1731, %v1732
    %v1734 = vtanh.pop %v1733
    %v1735 = vmul.f32 %v1730, %v1734
    %v1736 = vpack.c.bf16 %v1735, %v1735
    %v1737 = vld [vmem:[%s4] sm:$0xf]
    %v1738 = vld [vmem:[%s4 + $0x4] sm:$0xf]
    %v1739 = vld [vmem:[%s4 + $0x8] sm:$0xf]
    %v1740 = vld [vmem:[%s4 + $0xc] sm:$0xf]
    %v1741 = vld [vmem:[%s4 + $0x10] sm:$0xf]
    %v1742 = vld [vmem:[%s4 + $0x14] sm:$0xf]
    %v1743 = vld [vmem:[%s4 + $0x18] sm:$0xf]
    %v1744 = vld [vmem:[%s4 + $0x1c] sm:$0xf]
    %v1745 = vld [vmem:[%s4 + $0x20] sm:$0xf]
    %v1746 = vld [vmem:[%s4 + $0x24] sm:$0xf]
    %v1747 = vld [vmem:[%s4 + $0x28] sm:$0xf]
    %v1748 = vld [vmem:[%s4 + $0x2c] sm:$0xf]
    %v1749 = vld [vmem:[%s4 + $0x30] sm:$0xf]
    %v1750 = vld [vmem:[%s4 + $0x34] sm:$0xf]
    %v1751 = vld [vmem:[%s4 + $0x38] sm:$0xf]
    %v1752 = vld [vmem:[%s4 + $0x3c] sm:$0xf]
    %v1753 = vpack.c.bf16 %v1610, %v1610
    %v1754 = vld [vmem:[#allocation6] sm:$0xf]
    %v1755 = vld [vmem:[#allocation6 + $0x4] sm:$0xf]
    %v1756 = vld [vmem:[#allocation6 + $0x8] sm:$0xf]
    %v1757 = vld [vmem:[#allocation6 + $0xc] sm:$0xf]
    %v1758 = vld [vmem:[#allocation6 + $0x10] sm:$0xf]
    %v1759 = vld [vmem:[#allocation6 + $0x14] sm:$0xf]
    %v1760 = vld [vmem:[#allocation6 + $0x18] sm:$0xf]
    %v1761 = vld [vmem:[#allocation6 + $0x1c] sm:$0xf]
    %v1762 = vld [vmem:[#allocation6 + $0x20] sm:$0xf]
    %v1763 = vld [vmem:[#allocation6 + $0x24] sm:$0xf]
    %v1764 = vld [vmem:[#allocation6 + $0x28] sm:$0xf]
    %v1765 = vld [vmem:[#allocation6 + $0x2c] sm:$0xf]
    %v1766 = vld [vmem:[#allocation6 + $0x30] sm:$0xf]
    %v1767 = vld [vmem:[#allocation6 + $0x34] sm:$0xf]
    %v1768 = vld [vmem:[#allocation6 + $0x38] sm:$0xf]
    %v1769 = vld [vmem:[#allocation6 + $0x3c] sm:$0xf]
    %v1786 = vunpack.c.l.b16 %v1754
    %v1787 = vunpack.c.l.b16 %v1755
    %v1788 = vunpack.c.l.b16 %v1756
    %v1789 = vunpack.c.l.b16 %v1757
    %v1790 = vunpack.c.l.b16 %v1758
    %v1791 = vunpack.c.l.b16 %v1759
    %v1792 = vunpack.c.l.b16 %v1760
    %v1793 = vunpack.c.l.b16 %v1761
    %v1794 = vunpack.c.l.b16 %v1762
    %v1795 = vunpack.c.l.b16 %v1763
    %v1796 = vunpack.c.l.b16 %v1764
    %v1797 = vunpack.c.l.b16 %v1765
    %v1798 = vunpack.c.l.b16 %v1766
    %v1799 = vunpack.c.l.b16 %v1767
    %v1800 = vunpack.c.l.b16 %v1768
    %v1801 = vunpack.c.l.b16 %v1769
    %v1802 = vpack.c.b16 %v1787, %v1786
    %v1803 = vpack.c.b16 %v1789, %v1788
    %v1804 = vpack.c.b16 %v1791, %v1790
    %v1805 = vpack.c.b16 %v1793, %v1792
    %v1806 = vpack.c.b16 %v1795, %v1794
    %v1807 = vpack.c.b16 %v1797, %v1796
    %v1808 = vpack.c.b16 %v1799, %v1798
    %v1809 = vpack.c.b16 %v1801, %v1800
    %1818 = vmatprep.subr.bf16.mxu0 0
    %1819 = vmatpush1.bf16.msra.mxu0 %v1802
    %1820 = vmatprep.subr.bf16.mxu0 0
    %1821 = vmatpush1.bf16.msra.mxu0 %v1803
    %1822 = vmatprep.subr.bf16.mxu0 0
    %1823 = vmatpush1.bf16.msra.mxu0 %v1804
    %1824 = vmatprep.subr.bf16.mxu0 0
    %1825 = vmatpush1.bf16.msra.mxu0 %v1805
    %1826 = vmatprep.subr.bf16.mxu0 0
    %1827 = vmatpush1.bf16.msra.mxu0 %v1806
    %1828 = vmatprep.subr.bf16.mxu0 0
    %1829 = vmatpush1.bf16.msra.mxu0 %v1807
    %1830 = vmatprep.subr.bf16.mxu0 0
    %1831 = vmatpush1.bf16.msra.mxu0 %v1808
    %1832 = vmatprep.subr.bf16.mxu0 0
    %1833 = vmatpush1.bf16.msra.mxu0 %v1809
    %1834 = vmatprep.subr.bf16.mxu0 0
    %1835 = vmatpush1.bf16.msra.mxu0 0
    %1836 = vmatprep.subr.bf16.mxu0 0
    %1837 = vmatpush1.bf16.msra.mxu0 0
    %1838 = vmatprep.subr.bf16.mxu0 0
    %1839 = vmatpush1.bf16.msra.mxu0 0
    %1840 = vmatprep.subr.bf16.mxu0 0
    %1841 = vmatpush1.bf16.msra.mxu0 0
    %1842 = vmatprep.subr.bf16.mxu0 0
    %1843 = vmatpush1.bf16.msra.mxu0 0
    %1844 = vmatprep.subr.bf16.mxu0 0
    %1845 = vmatpush1.bf16.msra.mxu0 0
    %1846 = vmatprep.subr.bf16.mxu0 0
    %1847 = vmatpush1.bf16.msra.mxu0 0
    %1848 = vmatprep.subr.bf16.mxu0 0
    %1849 = vmatpush1.bf16.msra.mxu0 0
    %1850 = vmatprep.mubr.bf16.mxu0 0
    %1851 = vmatmul.mubr.bf16.gmra.mrb[0].mxu0 %v1753
    %v1852 = vpop.f32.mrb[0].mxu0
    %v1853 = vadd.f32 0.0, %v1852
    %v1854 = vpop.f32.mrb[0].mxu0
    %v1855 = vpop.f32.mrb[0].mxu0
    %v1856 = vpop.f32.mrb[0].mxu0
    %1857 = vdwg.mxu0
    %v1874 = vunpack.c.l.b16 %v1737
    %v1875 = vunpack.c.l.b16 %v1738
    %v1876 = vunpack.c.l.b16 %v1739
    %v1877 = vunpack.c.l.b16 %v1740
    %v1878 = vunpack.c.l.b16 %v1741
    %v1879 = vunpack.c.l.b16 %v1742
    %v1880 = vunpack.c.l.b16 %v1743
    %v1881 = vunpack.c.l.b16 %v1744
    %v1882 = vunpack.c.l.b16 %v1745
    %v1883 = vunpack.c.l.b16 %v1746
    %v1884 = vunpack.c.l.b16 %v1747
    %v1885 = vunpack.c.l.b16 %v1748
    %v1886 = vunpack.c.l.b16 %v1749
    %v1887 = vunpack.c.l.b16 %v1750
    %v1888 = vunpack.c.l.b16 %v1751
    %v1889 = vunpack.c.l.b16 %v1752
    %v1890 = vpack.c.b16 %v1875, %v1874
    %v1891 = vpack.c.b16 %v1877, %v1876
    %v1892 = vpack.c.b16 %v1879, %v1878
    %v1893 = vpack.c.b16 %v1881, %v1880
    %v1894 = vpack.c.b16 %v1883, %v1882
    %v1895 = vpack.c.b16 %v1885, %v1884
    %v1896 = vpack.c.b16 %v1887, %v1886
    %v1897 = vpack.c.b16 %v1889, %v1888
    %1906 = vmatprep.subr.bf16.mxu0 0
    %1907 = vmatpush1.bf16.msra.mxu0 %v1890
    %1908 = vmatprep.subr.bf16.mxu0 0
    %1909 = vmatpush1.bf16.msra.mxu0 %v1891
    %1910 = vmatprep.subr.bf16.mxu0 0
    %1911 = vmatpush1.bf16.msra.mxu0 %v1892
    %1912 = vmatprep.subr.bf16.mxu0 0
    %1913 = vmatpush1.bf16.msra.mxu0 %v1893
    %1914 = vmatprep.subr.bf16.mxu0 0
    %1915 = vmatpush1.bf16.msra.mxu0 %v1894
    %1916 = vmatprep.subr.bf16.mxu0 0
    %1917 = vmatpush1.bf16.msra.mxu0 %v1895
    %1918 = vmatprep.subr.bf16.mxu0 0
    %1919 = vmatpush1.bf16.msra.mxu0 %v1896
    %1920 = vmatprep.subr.bf16.mxu0 0
    %1921 = vmatpush1.bf16.msra.mxu0 %v1897
    %1922 = vmatprep.subr.bf16.mxu0 0
    %1923 = vmatpush1.bf16.msra.mxu0 0
    %1924 = vmatprep.subr.bf16.mxu0 0
    %1925 = vmatpush1.bf16.msra.mxu0 0
    %1926 = vmatprep.subr.bf16.mxu0 0
    %1927 = vmatpush1.bf16.msra.mxu0 0
    %1928 = vmatprep.subr.bf16.mxu0 0
    %1929 = vmatpush1.bf16.msra.mxu0 0
    %1930 = vmatprep.subr.bf16.mxu0 0
    %1931 = vmatpush1.bf16.msra.mxu0 0
    %1932 = vmatprep.subr.bf16.mxu0 0
    %1933 = vmatpush1.bf16.msra.mxu0 0
    %1934 = vmatprep.subr.bf16.mxu0 0
    %1935 = vmatpush1.bf16.msra.mxu0 0
    %1936 = vmatprep.subr.bf16.mxu0 0
    %1937 = vmatpush1.bf16.msra.mxu0 0
    %1938 = vmatprep.mubr.bf16.mxu0 0
    %1939 = vmatmul.mubr.bf16.gmra.mrb[0].mxu0 %v1736
    %v1940 = vpop.f32.mrb[0].mxu0
    %v1941 = vadd.f32 %v1853, %v1940
    %v1942 = vpop.f32.mrb[0].mxu0
    %v1943 = vpop.f32.mrb[0].mxu0
    %v1944 = vpop.f32.mrb[0].mxu0
    %1945 = vdwg.mxu0
    %v1946 = vld [vmem:[%s6] sm:$0x1]
    %v1948 = vlaneseq
    %v1949 = vshrl.u32 %v1948, 7
    %v1950 = vsub.s32 0, %v1949
    %v1951 = vrot.slane %v1946, %v1950
    %v1953 = vadd.f32 %v1941, %v1951
    %v1954 = vmul.f32 %v1953, 0.5
    %v1955 = vsel %vm61, %v1953, %v1954
    %v1956 = vtanh.pop %v1955
    %v1957 = vmul.f32 %v1956, 0.5
    %v1958 = vadd.f32 %v1957, 0.5
    %v1959 = vsel %vm61, %v1956, %v1958
    %1960 = vrot.lane.b32.xlu0 %v1959, 96
    %v1961 = vpop.permute.xlu0 %1960
    %1962 = vrot.lane.b32.xlu0 %v1959, 64
    %v1963 = vpop.permute.xlu0 %1962
    %1964 = vrot.lane.b32.xlu0 %v1959, 32
    %v1965 = vpop.permute.xlu0 %1964
    %v1966 = vmul.f32 %v1961, %v1608
    %v1967 = vmul.f32 %v1959, %v1963
    %v1968 = vadd.f32 %v1966, %v1967
    %v1969 = vtanh.pop %v1968
    %v1970 = vmul.f32 %v1965, %v1969
    %s1971 = scalar_lea.vmem [#allocation3], 32
    %1972 = vst [vmem:[%s1971] sm:$0xff] %v1970
    %v1973 = vld [vmem:[#allocation2 + $0x28] sm:$0xff]
    %v1974 = vld [vmem:[%s2] sm:$0xf]
    %v1975 = vld [vmem:[%s2 + $0x4] sm:$0xf]
    %v1976 = vld [vmem:[%s2 + $0x8] sm:$0xf]
    %v1977 = vld [vmem:[%s2 + $0xc] sm:$0xf]
    %v1978 = vld [vmem:[%s2 + $0x10] sm:$0xf]
    %v1979 = vld [vmem:[%s2 + $0x14] sm:$0xf]
    %v1980 = vld [vmem:[%s2 + $0x18] sm:$0xf]
    %v1981 = vld [vmem:[%s2 + $0x1c] sm:$0xf]
    %v1982 = vld [vmem:[%s2 + $0x20] sm:$0xf]
    %v1983 = vld [vmem:[%s2 + $0x24] sm:$0xf]
    %v1984 = vld [vmem:[%s2 + $0x28] sm:$0xf]
    %v1985 = vld [vmem:[%s2 + $0x2c] sm:$0xf]
    %v1986 = vld [vmem:[%s2 + $0x30] sm:$0xf]
    %v1987 = vld [vmem:[%s2 + $0x34] sm:$0xf]
    %v1988 = vld [vmem:[%s2 + $0x38] sm:$0xf]
    %v1989 = vld [vmem:[%s2 + $0x3c] sm:$0xf]
    %v2006 = vunpack.c.l.b16 %v1974
    %v2007 = vunpack.c.l.b16 %v1975
    %v2008 = vunpack.c.l.b16 %v1976
    %v2009 = vunpack.c.l.b16 %v1977
    %v2010 = vunpack.c.l.b16 %v1978
    %v2011 = vunpack.c.l.b16 %v1979
    %v2012 = vunpack.c.l.b16 %v1980
    %v2013 = vunpack.c.l.b16 %v1981
    %v2014 = vunpack.c.l.b16 %v1982
    %v2015 = vunpack.c.l.b16 %v1983
    %v2016 = vunpack.c.l.b16 %v1984
    %v2017 = vunpack.c.l.b16 %v1985
    %v2018 = vunpack.c.l.b16 %v1986
    %v2019 = vunpack.c.l.b16 %v1987
    %v2020 = vunpack.c.l.b16 %v1988
    %v2021 = vunpack.c.l.b16 %v1989
    %v2022 = vpack.c.b16 %v2007, %v2006
    %v2023 = vpack.c.b16 %v2009, %v2008
    %v2024 = vpack.c.b16 %v2011, %v2010
    %v2025 = vpack.c.b16 %v2013, %v2012
    %v2026 = vpack.c.b16 %v2015, %v2014
    %v2027 = vpack.c.b16 %v2017, %v2016
    %v2028 = vpack.c.b16 %v2019, %v2018
    %v2029 = vpack.c.b16 %v2021, %v2020
    %2038 = vmatprep.subr.bf16.mxu0 0
    %2039 = vmatpush1.bf16.msra.mxu0 %v2022
    %2040 = vmatprep.subr.bf16.mxu0 0
    %2041 = vmatpush1.bf16.msra.mxu0 %v2023
    %2042 = vmatprep.subr.bf16.mxu0 0
    %2043 = vmatpush1.bf16.msra.mxu0 %v2024
    %2044 = vmatprep.subr.bf16.mxu0 0
    %2045 = vmatpush1.bf16.msra.mxu0 %v2025
    %2046 = vmatprep.subr.bf16.mxu0 0
    %2047 = vmatpush1.bf16.msra.mxu0 %v2026
    %2048 = vmatprep.subr.bf16.mxu0 0
    %2049 = vmatpush1.bf16.msra.mxu0 %v2027
    %2050 = vmatprep.subr.bf16.mxu0 0
    %2051 = vmatpush1.bf16.msra.mxu0 %v2028
    %2052 = vmatprep.subr.bf16.mxu0 0
    %2053 = vmatpush1.bf16.msra.mxu0 %v2029
    %2054 = vmatprep.subr.bf16.mxu0 0
    %2055 = vmatpush1.bf16.msra.mxu0 0
    %2056 = vmatprep.subr.bf16.mxu0 0
    %2057 = vmatpush1.bf16.msra.mxu0 0
    %2058 = vmatprep.subr.bf16.mxu0 0
    %2059 = vmatpush1.bf16.msra.mxu0 0
    %2060 = vmatprep.subr.bf16.mxu0 0
    %2061 = vmatpush1.bf16.msra.mxu0 0
    %2062 = vmatprep.subr.bf16.mxu0 0
    %2063 = vmatpush1.bf16.msra.mxu0 0
    %2064 = vmatprep.subr.bf16.mxu0 0
    %2065 = vmatpush1.bf16.msra.mxu0 0
    %2066 = vmatprep.subr.bf16.mxu0 0
    %2067 = vmatpush1.bf16.msra.mxu0 0
    %2068 = vmatprep.subr.bf16.mxu0 0
    %2069 = vmatpush1.bf16.msra.mxu0 0
    %2070 = vmatprep.mubr.bf16.mxu0 0
    %2071 = vmatmul.mubr.bf16.gmra.mrb[0].mxu0 %v1736
    %v2072 = vpop.f32.mrb[0].mxu0
    %v2073 = vadd.f32 0.0, %v2072
    %v2074 = vpop.f32.mrb[0].mxu0
    %v2075 = vpop.f32.mrb[0].mxu0
    %v2076 = vpop.f32.mrb[0].mxu0
    %2077 = vdwg.mxu0
    %v2078 = vadd.f32 %v1973, %v2073
    %v2079 = vmul.f32 %v2078, 0.5
    %v2080 = vsel %vm61, %v2078, %v2079
    %v2081 = vtanh.pop %v2080
    %v2082 = vmul.f32 %v2081, 0.5
    %v2083 = vadd.f32 %v2082, 0.5
    %v2084 = vsel %vm61, %v2081, %v2083
    %2085 = vrot.lane.b32.xlu0 %v2084, 96
    %v2086 = vpop.permute.xlu0 %2085
    %2087 = vrot.lane.b32.xlu0 %v2084, 64
    %v2088 = vpop.permute.xlu0 %2087
    %2089 = vrot.lane.b32.xlu0 %v2084, 32
    %v2090 = vpop.permute.xlu0 %2089
    %v2091 = vmul.f32 %v2086, %v1733
    %v2092 = vmul.f32 %v2084, %v2088
    %v2093 = vadd.f32 %v2091, %v2092
    %v2094 = vtanh.pop %v2093
    %v2095 = vmul.f32 %v2090, %v2094
    %v2096 = vpack.c.bf16 %v2095, %v2095
    %v2097 = vld [vmem:[%s4] sm:$0xf]
    %v2098 = vld [vmem:[%s4 + $0x4] sm:$0xf]
    %v2099 = vld [vmem:[%s4 + $0x8] sm:$0xf]
    %v2100 = vld [vmem:[%s4 + $0xc] sm:$0xf]
    %v2101 = vld [vmem:[%s4 + $0x10] sm:$0xf]
    %v2102 = vld [vmem:[%s4 + $0x14] sm:$0xf]
    %v2103 = vld [vmem:[%s4 + $0x18] sm:$0xf]
    %v2104 = vld [vmem:[%s4 + $0x1c] sm:$0xf]
    %v2105 = vld [vmem:[%s4 + $0x20] sm:$0xf]
    %v2106 = vld [vmem:[%s4 + $0x24] sm:$0xf]
    %v2107 = vld [vmem:[%s4 + $0x28] sm:$0xf]
    %v2108 = vld [vmem:[%s4 + $0x2c] sm:$0xf]
    %v2109 = vld [vmem:[%s4 + $0x30] sm:$0xf]
    %v2110 = vld [vmem:[%s4 + $0x34] sm:$0xf]
    %v2111 = vld [vmem:[%s4 + $0x38] sm:$0xf]
    %v2112 = vld [vmem:[%s4 + $0x3c] sm:$0xf]
    %v2113 = vpack.c.bf16 %v1970, %v1970
    %v2114 = vld [vmem:[#allocation6] sm:$0xf]
    %v2115 = vld [vmem:[#allocation6 + $0x4] sm:$0xf]
    %v2116 = vld [vmem:[#allocation6 + $0x8] sm:$0xf]
    %v2117 = vld [vmem:[#allocation6 + $0xc] sm:$0xf]
    %v2118 = vld [vmem:[#allocation6 + $0x10] sm:$0xf]
    %v2119 = vld [vmem:[#allocation6 + $0x14] sm:$0xf]
    %v2120 = vld [vmem:[#allocation6 + $0x18] sm:$0xf]
    %v2121 = vld [vmem:[#allocation6 + $0x1c] sm:$0xf]
    %v2122 = vld [vmem:[#allocation6 + $0x20] sm:$0xf]
    %v2123 = vld [vmem:[#allocation6 + $0x24] sm:$0xf]
    %v2124 = vld [vmem:[#allocation6 + $0x28] sm:$0xf]
    %v2125 = vld [vmem:[#allocation6 + $0x2c] sm:$0xf]
    %v2126 = vld [vmem:[#allocation6 + $0x30] sm:$0xf]
    %v2127 = vld [vmem:[#allocation6 + $0x34] sm:$0xf]
    %v2128 = vld [vmem:[#allocation6 + $0x38] sm:$0xf]
    %v2129 = vld [vmem:[#allocation6 + $0x3c] sm:$0xf]
    %v2146 = vunpack.c.l.b16 %v2114
    %v2147 = vunpack.c.l.b16 %v2115
    %v2148 = vunpack.c.l.b16 %v2116
    %v2149 = vunpack.c.l.b16 %v2117
    %v2150 = vunpack.c.l.b16 %v2118
    %v2151 = vunpack.c.l.b16 %v2119
    %v2152 = vunpack.c.l.b16 %v2120
    %v2153 = vunpack.c.l.b16 %v2121
    %v2154 = vunpack.c.l.b16 %v2122
    %v2155 = vunpack.c.l.b16 %v2123
    %v2156 = vunpack.c.l.b16 %v2124
    %v2157 = vunpack.c.l.b16 %v2125
    %v2158 = vunpack.c.l.b16 %v2126
    %v2159 = vunpack.c.l.b16 %v2127
    %v2160 = vunpack.c.l.b16 %v2128
    %v2161 = vunpack.c.l.b16 %v2129
    %v2162 = vpack.c.b16 %v2147, %v2146
    %v2163 = vpack.c.b16 %v2149, %v2148
    %v2164 = vpack.c.b16 %v2151, %v2150
    %v2165 = vpack.c.b16 %v2153, %v2152
    %v2166 = vpack.c.b16 %v2155, %v2154
    %v2167 = vpack.c.b16 %v2157, %v2156
    %v2168 = vpack.c.b16 %v2159, %v2158
    %v2169 = vpack.c.b16 %v2161, %v2160
    %2178 = vmatprep.subr.bf16.mxu0 0
    %2179 = vmatpush1.bf16.msra.mxu0 %v2162
    %2180 = vmatprep.subr.bf16.mxu0 0
    %2181 = vmatpush1.bf16.msra.mxu0 %v2163
    %2182 = vmatprep.subr.bf16.mxu0 0
    %2183 = vmatpush1.bf16.msra.mxu0 %v2164
    %2184 = vmatprep.subr.bf16.mxu0 0
    %2185 = vmatpush1.bf16.msra.mxu0 %v2165
    %2186 = vmatprep.subr.bf16.mxu0 0
    %2187 = vmatpush1.bf16.msra.mxu0 %v2166
    %2188 = vmatprep.subr.bf16.mxu0 0
    %2189 = vmatpush1.bf16.msra.mxu0 %v2167
    %2190 = vmatprep.subr.bf16.mxu0 0
    %2191 = vmatpush1.bf16.msra.mxu0 %v2168
    %2192 = vmatprep.subr.bf16.mxu0 0
    %2193 = vmatpush1.bf16.msra.mxu0 %v2169
    %2194 = vmatprep.subr.bf16.mxu0 0
    %2195 = vmatpush1.bf16.msra.mxu0 0
    %2196 = vmatprep.subr.bf16.mxu0 0
    %2197 = vmatpush1.bf16.msra.mxu0 0
    %2198 = vmatprep.subr.bf16.mxu0 0
    %2199 = vmatpush1.bf16.msra.mxu0 0
    %2200 = vmatprep.subr.bf16.mxu0 0
    %2201 = vmatpush1.bf16.msra.mxu0 0
    %2202 = vmatprep.subr.bf16.mxu0 0
    %2203 = vmatpush1.bf16.msra.mxu0 0
    %2204 = vmatprep.subr.bf16.mxu0 0
    %2205 = vmatpush1.bf16.msra.mxu0 0
    %2206 = vmatprep.subr.bf16.mxu0 0
    %2207 = vmatpush1.bf16.msra.mxu0 0
    %2208 = vmatprep.subr.bf16.mxu0 0
    %2209 = vmatpush1.bf16.msra.mxu0 0
    %2210 = vmatprep.mubr.bf16.mxu0 0
    %2211 = vmatmul.mubr.bf16.gmra.mrb[0].mxu0 %v2113
    %v2212 = vpop.f32.mrb[0].mxu0
    %v2213 = vadd.f32 0.0, %v2212
    %v2214 = vpop.f32.mrb[0].mxu0
    %v2215 = vpop.f32.mrb[0].mxu0
    %v2216 = vpop.f32.mrb[0].mxu0
    %2217 = vdwg.mxu0
    %v2234 = vunpack.c.l.b16 %v2097
    %v2235 = vunpack.c.l.b16 %v2098
    %v2236 = vunpack.c.l.b16 %v2099
    %v2237 = vunpack.c.l.b16 %v2100
    %v2238 = vunpack.c.l.b16 %v2101
    %v2239 = vunpack.c.l.b16 %v2102
    %v2240 = vunpack.c.l.b16 %v2103
    %v2241 = vunpack.c.l.b16 %v2104
    %v2242 = vunpack.c.l.b16 %v2105
    %v2243 = vunpack.c.l.b16 %v2106
    %v2244 = vunpack.c.l.b16 %v2107
    %v2245 = vunpack.c.l.b16 %v2108
    %v2246 = vunpack.c.l.b16 %v2109
    %v2247 = vunpack.c.l.b16 %v2110
    %v2248 = vunpack.c.l.b16 %v2111
    %v2249 = vunpack.c.l.b16 %v2112
    %v2250 = vpack.c.b16 %v2235, %v2234
    %v2251 = vpack.c.b16 %v2237, %v2236
    %v2252 = vpack.c.b16 %v2239, %v2238
    %v2253 = vpack.c.b16 %v2241, %v2240
    %v2254 = vpack.c.b16 %v2243, %v2242
    %v2255 = vpack.c.b16 %v2245, %v2244
    %v2256 = vpack.c.b16 %v2247, %v2246
    %v2257 = vpack.c.b16 %v2249, %v2248
    %2266 = vmatprep.subr.bf16.mxu0 0
    %2267 = vmatpush1.bf16.msra.mxu0 %v2250
    %2268 = vmatprep.subr.bf16.mxu0 0
    %2269 = vmatpush1.bf16.msra.mxu0 %v2251
    %2270 = vmatprep.subr.bf16.mxu0 0
    %2271 = vmatpush1.bf16.msra.mxu0 %v2252
    %2272 = vmatprep.subr.bf16.mxu0 0
    %2273 = vmatpush1.bf16.msra.mxu0 %v2253
    %2274 = vmatprep.subr.bf16.mxu0 0
    %2275 = vmatpush1.bf16.msra.mxu0 %v2254
    %2276 = vmatprep.subr.bf16.mxu0 0
    %2277 = vmatpush1.bf16.msra.mxu0 %v2255
    %2278 = vmatprep.subr.bf16.mxu0 0
    %2279 = vmatpush1.bf16.msra.mxu0 %v2256
    %2280 = vmatprep.subr.bf16.mxu0 0
    %2281 = vmatpush1.bf16.msra.mxu0 %v2257
    %2282 = vmatprep.subr.bf16.mxu0 0
    %2283 = vmatpush1.bf16.msra.mxu0 0
    %2284 = vmatprep.subr.bf16.mxu0 0
    %2285 = vmatpush1.bf16.msra.mxu0 0
    %2286 = vmatprep.subr.bf16.mxu0 0
    %2287 = vmatpush1.bf16.msra.mxu0 0
    %2288 = vmatprep.subr.bf16.mxu0 0
    %2289 = vmatpush1.bf16.msra.mxu0 0
    %2290 = vmatprep.subr.bf16.mxu0 0
    %2291 = vmatpush1.bf16.msra.mxu0 0
    %2292 = vmatprep.subr.bf16.mxu0 0
    %2293 = vmatpush1.bf16.msra.mxu0 0
    %2294 = vmatprep.subr.bf16.mxu0 0
    %2295 = vmatpush1.bf16.msra.mxu0 0
    %2296 = vmatprep.subr.bf16.mxu0 0
    %2297 = vmatpush1.bf16.msra.mxu0 0
    %2298 = vmatprep.mubr.bf16.mxu0 0
    %2299 = vmatmul.mubr.bf16.gmra.mrb[0].mxu0 %v2096
    %v2300 = vpop.f32.mrb[0].mxu0
    %v2301 = vadd.f32 %v2213, %v2300
    %v2302 = vpop.f32.mrb[0].mxu0
    %v2303 = vpop.f32.mrb[0].mxu0
    %v2304 = vpop.f32.mrb[0].mxu0
    %2305 = vdwg.mxu0
    %v2306 = vld [vmem:[%s6] sm:$0x1]
    %v2308 = vlaneseq
    %v2309 = vshrl.u32 %v2308, 7
    %v2310 = vsub.s32 0, %v2309
    %v2311 = vrot.slane %v2306, %v2310
    %v2313 = vadd.f32 %v2301, %v2311
    %v2314 = vmul.f32 %v2313, 0.5
    %v2315 = vsel %vm61, %v2313, %v2314
    %v2316 = vtanh.pop %v2315
    %v2317 = vmul.f32 %v2316, 0.5
    %v2318 = vadd.f32 %v2317, 0.5
    %v2319 = vsel %vm61, %v2316, %v2318
    %2320 = vrot.lane.b32.xlu0 %v2319, 96
    %v2321 = vpop.permute.xlu0 %2320
    %2322 = vrot.lane.b32.xlu0 %v2319, 64
    %v2323 = vpop.permute.xlu0 %2322
    %2324 = vrot.lane.b32.xlu0 %v2319, 32
    %v2325 = vpop.permute.xlu0 %2324
    %v2326 = vmul.f32 %v2321, %v1968
    %v2327 = vmul.f32 %v2319, %v2323
    %v2328 = vadd.f32 %v2326, %v2327
    %v2329 = vtanh.pop %v2328
    %v2330 = vmul.f32 %v2325, %v2329
    %s2331 = scalar_lea.vmem [#allocation3], 40
    %2332 = vst [vmem:[%s2331] sm:$0xff] %v2330
    %v2333 = vld [vmem:[#allocation2 + $0x30] sm:$0xff]
    %v2334 = vld [vmem:[%s2] sm:$0xf]
    %v2335 = vld [vmem:[%s2 + $0x4] sm:$0xf]
    %v2336 = vld [vmem:[%s2 + $0x8] sm:$0xf]
    %v2337 = vld [vmem:[%s2 + $0xc] sm:$0xf]
    %v2338 = vld [vmem:[%s2 + $0x10] sm:$0xf]
    %v2339 = vld [vmem:[%s2 + $0x14] sm:$0xf]
    %v2340 = vld [vmem:[%s2 + $0x18] sm:$0xf]
    %v2341 = vld [vmem:[%s2 + $0x1c] sm:$0xf]
    %v2342 = vld [vmem:[%s2 + $0x20] sm:$0xf]
    %v2343 = vld [vmem:[%s2 + $0x24] sm:$0xf]
    %v2344 = vld [vmem:[%s2 + $0x28] sm:$0xf]
    %v2345 = vld [vmem:[%s2 + $0x2c] sm:$0xf]
    %v2346 = vld [vmem:[%s2 + $0x30] sm:$0xf]
    %v2347 = vld [vmem:[%s2 + $0x34] sm:$0xf]
    %v2348 = vld [vmem:[%s2 + $0x38] sm:$0xf]
    %v2349 = vld [vmem:[%s2 + $0x3c] sm:$0xf]
    %v2366 = vunpack.c.l.b16 %v2334
    %v2367 = vunpack.c.l.b16 %v2335
    %v2368 = vunpack.c.l.b16 %v2336
    %v2369 = vunpack.c.l.b16 %v2337
    %v2370 = vunpack.c.l.b16 %v2338
    %v2371 = vunpack.c.l.b16 %v2339
    %v2372 = vunpack.c.l.b16 %v2340
    %v2373 = vunpack.c.l.b16 %v2341
    %v2374 = vunpack.c.l.b16 %v2342
    %v2375 = vunpack.c.l.b16 %v2343
    %v2376 = vunpack.c.l.b16 %v2344
    %v2377 = vunpack.c.l.b16 %v2345
    %v2378 = vunpack.c.l.b16 %v2346
    %v2379 = vunpack.c.l.b16 %v2347
    %v2380 = vunpack.c.l.b16 %v2348
    %v2381 = vunpack.c.l.b16 %v2349
    %v2382 = vpack.c.b16 %v2367, %v2366
    %v2383 = vpack.c.b16 %v2369, %v2368
    %v2384 = vpack.c.b16 %v2371, %v2370
    %v2385 = vpack.c.b16 %v2373, %v2372
    %v2386 = vpack.c.b16 %v2375, %v2374
    %v2387 = vpack.c.b16 %v2377, %v2376
    %v2388 = vpack.c.b16 %v2379, %v2378
    %v2389 = vpack.c.b16 %v2381, %v2380
    %2398 = vmatprep.subr.bf16.mxu0 0
    %2399 = vmatpush1.bf16.msra.mxu0 %v2382
    %2400 = vmatprep.subr.bf16.mxu0 0
    %2401 = vmatpush1.bf16.msra.mxu0 %v2383
    %2402 = vmatprep.subr.bf16.mxu0 0
    %2403 = vmatpush1.bf16.msra.mxu0 %v2384
    %2404 = vmatprep.subr.bf16.mxu0 0
    %2405 = vmatpush1.bf16.msra.mxu0 %v2385
    %2406 = vmatprep.subr.bf16.mxu0 0
    %2407 = vmatpush1.bf16.msra.mxu0 %v2386
    %2408 = vmatprep.subr.bf16.mxu0 0
    %2409 = vmatpush1.bf16.msra.mxu0 %v2387
    %2410 = vmatprep.subr.bf16.mxu0 0
    %2411 = vmatpush1.bf16.msra.mxu0 %v2388
    %2412 = vmatprep.subr.bf16.mxu0 0
    %2413 = vmatpush1.bf16.msra.mxu0 %v2389
    %2414 = vmatprep.subr.bf16.mxu0 0
    %2415 = vmatpush1.bf16.msra.mxu0 0
    %2416 = vmatprep.subr.bf16.mxu0 0
    %2417 = vmatpush1.bf16.msra.mxu0 0
    %2418 = vmatprep.subr.bf16.mxu0 0
    %2419 = vmatpush1.bf16.msra.mxu0 0
    %2420 = vmatprep.subr.bf16.mxu0 0
    %2421 = vmatpush1.bf16.msra.mxu0 0
    %2422 = vmatprep.subr.bf16.mxu0 0
    %2423 = vmatpush1.bf16.msra.mxu0 0
    %2424 = vmatprep.subr.bf16.mxu0 0
    %2425 = vmatpush1.bf16.msra.mxu0 0
    %2426 = vmatprep.subr.bf16.mxu0 0
    %2427 = vmatpush1.bf16.msra.mxu0 0
    %2428 = vmatprep.subr.bf16.mxu0 0
    %2429 = vmatpush1.bf16.msra.mxu0 0
    %2430 = vmatprep.mubr.bf16.mxu0 0
    %2431 = vmatmul.mubr.bf16.gmra.mrb[0].mxu0 %v2096
    %v2432 = vpop.f32.mrb[0].mxu0
    %v2433 = vadd.f32 0.0, %v2432
    %v2434 = vpop.f32.mrb[0].mxu0
    %v2435 = vpop.f32.mrb[0].mxu0
    %v2436 = vpop.f32.mrb[0].mxu0
    %2437 = vdwg.mxu0
    %v2438 = vadd.f32 %v2333, %v2433
    %v2439 = vmul.f32 %v2438, 0.5
    %v2440 = vsel %vm61, %v2438, %v2439
    %v2441 = vtanh.pop %v2440
    %v2442 = vmul.f32 %v2441, 0.5
    %v2443 = vadd.f32 %v2442, 0.5
    %v2444 = vsel %vm61, %v2441, %v2443
    %2445 = vrot.lane.b32.xlu0 %v2444, 96
    %v2446 = vpop.permute.xlu0 %2445
    %2447 = vrot.lane.b32.xlu0 %v2444, 64
    %v2448 = vpop.permute.xlu0 %2447
    %2449 = vrot.lane.b32.xlu0 %v2444, 32
    %v2450 = vpop.permute.xlu0 %2449
    %v2451 = vmul.f32 %v2446, %v2093
    %v2452 = vmul.f32 %v2444, %v2448
    %v2453 = vadd.f32 %v2451, %v2452
    %v2454 = vtanh.pop %v2453
    %v2455 = vmul.f32 %v2450, %v2454
    %v2456 = vpack.c.bf16 %v2455, %v2455
    %v2457 = vld [vmem:[%s4] sm:$0xf]
    %v2458 = vld [vmem:[%s4 + $0x4] sm:$0xf]
    %v2459 = vld [vmem:[%s4 + $0x8] sm:$0xf]
    %v2460 = vld [vmem:[%s4 + $0xc] sm:$0xf]
    %v2461 = vld [vmem:[%s4 + $0x10] sm:$0xf]
    %v2462 = vld [vmem:[%s4 + $0x14] sm:$0xf]
    %v2463 = vld [vmem:[%s4 + $0x18] sm:$0xf]
    %v2464 = vld [vmem:[%s4 + $0x1c] sm:$0xf]
    %v2465 = vld [vmem:[%s4 + $0x20] sm:$0xf]
    %v2466 = vld [vmem:[%s4 + $0x24] sm:$0xf]
    %v2467 = vld [vmem:[%s4 + $0x28] sm:$0xf]
    %v2468 = vld [vmem:[%s4 + $0x2c] sm:$0xf]
    %v2469 = vld [vmem:[%s4 + $0x30] sm:$0xf]
    %v2470 = vld [vmem:[%s4 + $0x34] sm:$0xf]
    %v2471 = vld [vmem:[%s4 + $0x38] sm:$0xf]
    %v2472 = vld [vmem:[%s4 + $0x3c] sm:$0xf]
    %v2473 = vpack.c.bf16 %v2330, %v2330
    %v2474 = vld [vmem:[#allocation6] sm:$0xf]
    %v2475 = vld [vmem:[#allocation6 + $0x4] sm:$0xf]
    %v2476 = vld [vmem:[#allocation6 + $0x8] sm:$0xf]
    %v2477 = vld [vmem:[#allocation6 + $0xc] sm:$0xf]
    %v2478 = vld [vmem:[#allocation6 + $0x10] sm:$0xf]
    %v2479 = vld [vmem:[#allocation6 + $0x14] sm:$0xf]
    %v2480 = vld [vmem:[#allocation6 + $0x18] sm:$0xf]
    %v2481 = vld [vmem:[#allocation6 + $0x1c] sm:$0xf]
    %v2482 = vld [vmem:[#allocation6 + $0x20] sm:$0xf]
    %v2483 = vld [vmem:[#allocation6 + $0x24] sm:$0xf]
    %v2484 = vld [vmem:[#allocation6 + $0x28] sm:$0xf]
    %v2485 = vld [vmem:[#allocation6 + $0x2c] sm:$0xf]
    %v2486 = vld [vmem:[#allocation6 + $0x30] sm:$0xf]
    %v2487 = vld [vmem:[#allocation6 + $0x34] sm:$0xf]
    %v2488 = vld [vmem:[#allocation6 + $0x38] sm:$0xf]
    %v2489 = vld [vmem:[#allocation6 + $0x3c] sm:$0xf]
    %v2506 = vunpack.c.l.b16 %v2474
    %v2507 = vunpack.c.l.b16 %v2475
    %v2508 = vunpack.c.l.b16 %v2476
    %v2509 = vunpack.c.l.b16 %v2477
    %v2510 = vunpack.c.l.b16 %v2478
    %v2511 = vunpack.c.l.b16 %v2479
    %v2512 = vunpack.c.l.b16 %v2480
    %v2513 = vunpack.c.l.b16 %v2481
    %v2514 = vunpack.c.l.b16 %v2482
    %v2515 = vunpack.c.l.b16 %v2483
    %v2516 = vunpack.c.l.b16 %v2484
    %v2517 = vunpack.c.l.b16 %v2485
    %v2518 = vunpack.c.l.b16 %v2486
    %v2519 = vunpack.c.l.b16 %v2487
    %v2520 = vunpack.c.l.b16 %v2488
    %v2521 = vunpack.c.l.b16 %v2489
    %v2522 = vpack.c.b16 %v2507, %v2506
    %v2523 = vpack.c.b16 %v2509, %v2508
    %v2524 = vpack.c.b16 %v2511, %v2510
    %v2525 = vpack.c.b16 %v2513, %v2512
    %v2526 = vpack.c.b16 %v2515, %v2514
    %v2527 = vpack.c.b16 %v2517, %v2516
    %v2528 = vpack.c.b16 %v2519, %v2518
    %v2529 = vpack.c.b16 %v2521, %v2520
    %2538 = vmatprep.subr.bf16.mxu0 0
    %2539 = vmatpush1.bf16.msra.mxu0 %v2522
    %2540 = vmatprep.subr.bf16.mxu0 0
    %2541 = vmatpush1.bf16.msra.mxu0 %v2523
    %2542 = vmatprep.subr.bf16.mxu0 0
    %2543 = vmatpush1.bf16.msra.mxu0 %v2524
    %2544 = vmatprep.subr.bf16.mxu0 0
    %2545 = vmatpush1.bf16.msra.mxu0 %v2525
    %2546 = vmatprep.subr.bf16.mxu0 0
    %2547 = vmatpush1.bf16.msra.mxu0 %v2526
    %2548 = vmatprep.subr.bf16.mxu0 0
    %2549 = vmatpush1.bf16.msra.mxu0 %v2527
    %2550 = vmatprep.subr.bf16.mxu0 0
    %2551 = vmatpush1.bf16.msra.mxu0 %v2528
    %2552 = vmatprep.subr.bf16.mxu0 0
    %2553 = vmatpush1.bf16.msra.mxu0 %v2529
    %2554 = vmatprep.subr.bf16.mxu0 0
    %2555 = vmatpush1.bf16.msra.mxu0 0
    %2556 = vmatprep.subr.bf16.mxu0 0
    %2557 = vmatpush1.bf16.msra.mxu0 0
    %2558 = vmatprep.subr.bf16.mxu0 0
    %2559 = vmatpush1.bf16.msra.mxu0 0
    %2560 = vmatprep.subr.bf16.mxu0 0
    %2561 = vmatpush1.bf16.msra.mxu0 0
    %2562 = vmatprep.subr.bf16.mxu0 0
    %2563 = vmatpush1.bf16.msra.mxu0 0
    %2564 = vmatprep.subr.bf16.mxu0 0
    %2565 = vmatpush1.bf16.msra.mxu0 0
    %2566 = vmatprep.subr.bf16.mxu0 0
    %2567 = vmatpush1.bf16.msra.mxu0 0
    %2568 = vmatprep.subr.bf16.mxu0 0
    %2569 = vmatpush1.bf16.msra.mxu0 0
    %2570 = vmatprep.mubr.bf16.mxu0 0
    %2571 = vmatmul.mubr.bf16.gmra.mrb[0].mxu0 %v2473
    %v2572 = vpop.f32.mrb[0].mxu0
    %v2573 = vadd.f32 0.0, %v2572
    %v2574 = vpop.f32.mrb[0].mxu0
    %v2575 = vpop.f32.mrb[0].mxu0
    %v2576 = vpop.f32.mrb[0].mxu0
    %2577 = vdwg.mxu0
    %v2594 = vunpack.c.l.b16 %v2457
    %v2595 = vunpack.c.l.b16 %v2458
    %v2596 = vunpack.c.l.b16 %v2459
    %v2597 = vunpack.c.l.b16 %v2460
    %v2598 = vunpack.c.l.b16 %v2461
    %v2599 = vunpack.c.l.b16 %v2462
    %v2600 = vunpack.c.l.b16 %v2463
    %v2601 = vunpack.c.l.b16 %v2464
    %v2602 = vunpack.c.l.b16 %v2465
    %v2603 = vunpack.c.l.b16 %v2466
    %v2604 = vunpack.c.l.b16 %v2467
    %v2605 = vunpack.c.l.b16 %v2468
    %v2606 = vunpack.c.l.b16 %v2469
    %v2607 = vunpack.c.l.b16 %v2470
    %v2608 = vunpack.c.l.b16 %v2471
    %v2609 = vunpack.c.l.b16 %v2472
    %v2610 = vpack.c.b16 %v2595, %v2594
    %v2611 = vpack.c.b16 %v2597, %v2596
    %v2612 = vpack.c.b16 %v2599, %v2598
    %v2613 = vpack.c.b16 %v2601, %v2600
    %v2614 = vpack.c.b16 %v2603, %v2602
    %v2615 = vpack.c.b16 %v2605, %v2604
    %v2616 = vpack.c.b16 %v2607, %v2606
    %v2617 = vpack.c.b16 %v2609, %v2608
    %2626 = vmatprep.subr.bf16.mxu0 0
    %2627 = vmatpush1.bf16.msra.mxu0 %v2610
    %2628 = vmatprep.subr.bf16.mxu0 0
    %2629 = vmatpush1.bf16.msra.mxu0 %v2611
    %2630 = vmatprep.subr.bf16.mxu0 0
    %2631 = vmatpush1.bf16.msra.mxu0 %v2612
    %2632 = vmatprep.subr.bf16.mxu0 0
    %2633 = vmatpush1.bf16.msra.mxu0 %v2613
    %2634 = vmatprep.subr.bf16.mxu0 0
    %2635 = vmatpush1.bf16.msra.mxu0 %v2614
    %2636 = vmatprep.subr.bf16.mxu0 0
    %2637 = vmatpush1.bf16.msra.mxu0 %v2615
    %2638 = vmatprep.subr.bf16.mxu0 0
    %2639 = vmatpush1.bf16.msra.mxu0 %v2616
    %2640 = vmatprep.subr.bf16.mxu0 0
    %2641 = vmatpush1.bf16.msra.mxu0 %v2617
    %2642 = vmatprep.subr.bf16.mxu0 0
    %2643 = vmatpush1.bf16.msra.mxu0 0
    %2644 = vmatprep.subr.bf16.mxu0 0
    %2645 = vmatpush1.bf16.msra.mxu0 0
    %2646 = vmatprep.subr.bf16.mxu0 0
    %2647 = vmatpush1.bf16.msra.mxu0 0
    %2648 = vmatprep.subr.bf16.mxu0 0
    %2649 = vmatpush1.bf16.msra.mxu0 0
    %2650 = vmatprep.subr.bf16.mxu0 0
    %2651 = vmatpush1.bf16.msra.mxu0 0
    %2652 = vmatprep.subr.bf16.mxu0 0
    %2653 = vmatpush1.bf16.msra.mxu0 0
    %2654 = vmatprep.subr.bf16.mxu0 0
    %2655 = vmatpush1.bf16.msra.mxu0 0
    %2656 = vmatprep.subr.bf16.mxu0 0
    %2657 = vmatpush1.bf16.msra.mxu0 0
    %2658 = vmatprep.mubr.bf16.mxu0 0
    %2659 = vmatmul.mubr.bf16.gmra.mrb[0].mxu0 %v2456
    %v2660 = vpop.f32.mrb[0].mxu0
    %v2661 = vadd.f32 %v2573, %v2660
    %v2662 = vpop.f32.mrb[0].mxu0
    %v2663 = vpop.f32.mrb[0].mxu0
    %v2664 = vpop.f32.mrb[0].mxu0
    %2665 = vdwg.mxu0
    %v2666 = vld [vmem:[%s6] sm:$0x1]
    %v2668 = vlaneseq
    %v2669 = vshrl.u32 %v2668, 7
    %v2670 = vsub.s32 0, %v2669
    %v2671 = vrot.slane %v2666, %v2670
    %v2673 = vadd.f32 %v2661, %v2671
    %v2674 = vmul.f32 %v2673, 0.5
    %v2675 = vsel %vm61, %v2673, %v2674
    %v2676 = vtanh.pop %v2675
    %v2677 = vmul.f32 %v2676, 0.5
    %v2678 = vadd.f32 %v2677, 0.5
    %v2679 = vsel %vm61, %v2676, %v2678
    %2680 = vrot.lane.b32.xlu0 %v2679, 96
    %v2681 = vpop.permute.xlu0 %2680
    %2682 = vrot.lane.b32.xlu0 %v2679, 64
    %v2683 = vpop.permute.xlu0 %2682
    %2684 = vrot.lane.b32.xlu0 %v2679, 32
    %v2685 = vpop.permute.xlu0 %2684
    %v2686 = vmul.f32 %v2681, %v2328
    %v2687 = vmul.f32 %v2679, %v2683
    %v2688 = vadd.f32 %v2686, %v2687
    %v2689 = vtanh.pop %v2688
    %v2690 = vmul.f32 %v2685, %v2689
    %s2691 = scalar_lea.vmem [#allocation3], 48
    %2692 = vst [vmem:[%s2691] sm:$0xff] %v2690
    %v2693 = vld [vmem:[#allocation2 + $0x38] sm:$0xff]
    %v2694 = vld [vmem:[%s2] sm:$0xf]
    %v2695 = vld [vmem:[%s2 + $0x4] sm:$0xf]
    %v2696 = vld [vmem:[%s2 + $0x8] sm:$0xf]
    %v2697 = vld [vmem:[%s2 + $0xc] sm:$0xf]
    %v2698 = vld [vmem:[%s2 + $0x10] sm:$0xf]
    %v2699 = vld [vmem:[%s2 + $0x14] sm:$0xf]
    %v2700 = vld [vmem:[%s2 + $0x18] sm:$0xf]
    %v2701 = vld [vmem:[%s2 + $0x1c] sm:$0xf]
    %v2702 = vld [vmem:[%s2 + $0x20] sm:$0xf]
    %v2703 = vld [vmem:[%s2 + $0x24] sm:$0xf]
    %v2704 = vld [vmem:[%s2 + $0x28] sm:$0xf]
    %v2705 = vld [vmem:[%s2 + $0x2c] sm:$0xf]
    %v2706 = vld [vmem:[%s2 + $0x30] sm:$0xf]
    %v2707 = vld [vmem:[%s2 + $0x34] sm:$0xf]
    %v2708 = vld [vmem:[%s2 + $0x38] sm:$0xf]
    %v2709 = vld [vmem:[%s2 + $0x3c] sm:$0xf]
    %v2726 = vunpack.c.l.b16 %v2694
    %v2727 = vunpack.c.l.b16 %v2695
    %v2728 = vunpack.c.l.b16 %v2696
    %v2729 = vunpack.c.l.b16 %v2697
    %v2730 = vunpack.c.l.b16 %v2698
    %v2731 = vunpack.c.l.b16 %v2699
    %v2732 = vunpack.c.l.b16 %v2700
    %v2733 = vunpack.c.l.b16 %v2701
    %v2734 = vunpack.c.l.b16 %v2702
    %v2735 = vunpack.c.l.b16 %v2703
    %v2736 = vunpack.c.l.b16 %v2704
    %v2737 = vunpack.c.l.b16 %v2705
    %v2738 = vunpack.c.l.b16 %v2706
    %v2739 = vunpack.c.l.b16 %v2707
    %v2740 = vunpack.c.l.b16 %v2708
    %v2741 = vunpack.c.l.b16 %v2709
    %v2742 = vpack.c.b16 %v2727, %v2726
    %v2743 = vpack.c.b16 %v2729, %v2728
    %v2744 = vpack.c.b16 %v2731, %v2730
    %v2745 = vpack.c.b16 %v2733, %v2732
    %v2746 = vpack.c.b16 %v2735, %v2734
    %v2747 = vpack.c.b16 %v2737, %v2736
    %v2748 = vpack.c.b16 %v2739, %v2738
    %v2749 = vpack.c.b16 %v2741, %v2740
    %2758 = vmatprep.subr.bf16.mxu0 0
    %2759 = vmatpush1.bf16.msra.mxu0 %v2742
    %2760 = vmatprep.subr.bf16.mxu0 0
    %2761 = vmatpush1.bf16.msra.mxu0 %v2743
    %2762 = vmatprep.subr.bf16.mxu0 0
    %2763 = vmatpush1.bf16.msra.mxu0 %v2744
    %2764 = vmatprep.subr.bf16.mxu0 0
    %2765 = vmatpush1.bf16.msra.mxu0 %v2745
    %2766 = vmatprep.subr.bf16.mxu0 0
    %2767 = vmatpush1.bf16.msra.mxu0 %v2746
    %2768 = vmatprep.subr.bf16.mxu0 0
    %2769 = vmatpush1.bf16.msra.mxu0 %v2747
    %2770 = vmatprep.subr.bf16.mxu0 0
    %2771 = vmatpush1.bf16.msra.mxu0 %v2748
    %2772 = vmatprep.subr.bf16.mxu0 0
    %2773 = vmatpush1.bf16.msra.mxu0 %v2749
    %2774 = vmatprep.subr.bf16.mxu0 0
    %2775 = vmatpush1.bf16.msra.mxu0 0
    %2776 = vmatprep.subr.bf16.mxu0 0
    %2777 = vmatpush1.bf16.msra.mxu0 0
    %2778 = vmatprep.subr.bf16.mxu0 0
    %2779 = vmatpush1.bf16.msra.mxu0 0
    %2780 = vmatprep.subr.bf16.mxu0 0
    %2781 = vmatpush1.bf16.msra.mxu0 0
    %2782 = vmatprep.subr.bf16.mxu0 0
    %2783 = vmatpush1.bf16.msra.mxu0 0
    %2784 = vmatprep.subr.bf16.mxu0 0
    %2785 = vmatpush1.bf16.msra.mxu0 0
    %2786 = vmatprep.subr.bf16.mxu0 0
    %2787 = vmatpush1.bf16.msra.mxu0 0
    %2788 = vmatprep.subr.bf16.mxu0 0
    %2789 = vmatpush1.bf16.msra.mxu0 0
    %2790 = vmatprep.mubr.bf16.mxu0 0
    %2791 = vmatmul.mubr.bf16.gmra.mrb[0].mxu0 %v2456
    %v2792 = vpop.f32.mrb[0].mxu0
    %v2793 = vadd.f32 0.0, %v2792
    %v2794 = vpop.f32.mrb[0].mxu0
    %v2795 = vpop.f32.mrb[0].mxu0
    %v2796 = vpop.f32.mrb[0].mxu0
    %2797 = vdwg.mxu0
    %v2798 = vadd.f32 %v2693, %v2793
    %v2799 = vmul.f32 %v2798, 0.5
    %v2800 = vsel %vm61, %v2798, %v2799
    %v2801 = vtanh.pop %v2800
    %v2802 = vmul.f32 %v2801, 0.5
    %v2803 = vadd.f32 %v2802, 0.5
    %v2804 = vsel %vm61, %v2801, %v2803
    %2805 = vrot.lane.b32.xlu0 %v2804, 96
    %v2806 = vpop.permute.xlu0 %2805
    %2807 = vrot.lane.b32.xlu0 %v2804, 64
    %v2808 = vpop.permute.xlu0 %2807
    %2809 = vrot.lane.b32.xlu0 %v2804, 32
    %v2810 = vpop.permute.xlu0 %2809
    %v2811 = vmul.f32 %v2806, %v2453
    %v2812 = vmul.f32 %v2804, %v2808
    %v2813 = vadd.f32 %v2811, %v2812
    %v2814 = vtanh.pop %v2813
    %v2815 = vmul.f32 %v2810, %v2814
    %v2816 = vpack.c.bf16 %v2815, %v2815
    %v2817 = vld [vmem:[%s4] sm:$0xf]
    %v2818 = vld [vmem:[%s4 + $0x4] sm:$0xf]
    %v2819 = vld [vmem:[%s4 + $0x8] sm:$0xf]
    %v2820 = vld [vmem:[%s4 + $0xc] sm:$0xf]
    %v2821 = vld [vmem:[%s4 + $0x10] sm:$0xf]
    %v2822 = vld [vmem:[%s4 + $0x14] sm:$0xf]
    %v2823 = vld [vmem:[%s4 + $0x18] sm:$0xf]
    %v2824 = vld [vmem:[%s4 + $0x1c] sm:$0xf]
    %v2825 = vld [vmem:[%s4 + $0x20] sm:$0xf]
    %v2826 = vld [vmem:[%s4 + $0x24] sm:$0xf]
    %v2827 = vld [vmem:[%s4 + $0x28] sm:$0xf]
    %v2828 = vld [vmem:[%s4 + $0x2c] sm:$0xf]
    %v2829 = vld [vmem:[%s4 + $0x30] sm:$0xf]
    %v2830 = vld [vmem:[%s4 + $0x34] sm:$0xf]
    %v2831 = vld [vmem:[%s4 + $0x38] sm:$0xf]
    %v2832 = vld [vmem:[%s4 + $0x3c] sm:$0xf]
    %v2833 = vpack.c.bf16 %v2690, %v2690
    %v2834 = vld [vmem:[#allocation6] sm:$0xf]
    %v2835 = vld [vmem:[#allocation6 + $0x4] sm:$0xf]
    %v2836 = vld [vmem:[#allocation6 + $0x8] sm:$0xf]
    %v2837 = vld [vmem:[#allocation6 + $0xc] sm:$0xf]
    %v2838 = vld [vmem:[#allocation6 + $0x10] sm:$0xf]
    %v2839 = vld [vmem:[#allocation6 + $0x14] sm:$0xf]
    %v2840 = vld [vmem:[#allocation6 + $0x18] sm:$0xf]
    %v2841 = vld [vmem:[#allocation6 + $0x1c] sm:$0xf]
    %v2842 = vld [vmem:[#allocation6 + $0x20] sm:$0xf]
    %v2843 = vld [vmem:[#allocation6 + $0x24] sm:$0xf]
    %v2844 = vld [vmem:[#allocation6 + $0x28] sm:$0xf]
    %v2845 = vld [vmem:[#allocation6 + $0x2c] sm:$0xf]
    %v2846 = vld [vmem:[#allocation6 + $0x30] sm:$0xf]
    %v2847 = vld [vmem:[#allocation6 + $0x34] sm:$0xf]
    %v2848 = vld [vmem:[#allocation6 + $0x38] sm:$0xf]
    %v2849 = vld [vmem:[#allocation6 + $0x3c] sm:$0xf]
    %v2866 = vunpack.c.l.b16 %v2834
    %v2867 = vunpack.c.l.b16 %v2835
    %v2868 = vunpack.c.l.b16 %v2836
    %v2869 = vunpack.c.l.b16 %v2837
    %v2870 = vunpack.c.l.b16 %v2838
    %v2871 = vunpack.c.l.b16 %v2839
    %v2872 = vunpack.c.l.b16 %v2840
    %v2873 = vunpack.c.l.b16 %v2841
    %v2874 = vunpack.c.l.b16 %v2842
    %v2875 = vunpack.c.l.b16 %v2843
    %v2876 = vunpack.c.l.b16 %v2844
    %v2877 = vunpack.c.l.b16 %v2845
    %v2878 = vunpack.c.l.b16 %v2846
    %v2879 = vunpack.c.l.b16 %v2847
    %v2880 = vunpack.c.l.b16 %v2848
    %v2881 = vunpack.c.l.b16 %v2849
    %v2882 = vpack.c.b16 %v2867, %v2866
    %v2883 = vpack.c.b16 %v2869, %v2868
    %v2884 = vpack.c.b16 %v2871, %v2870
    %v2885 = vpack.c.b16 %v2873, %v2872
    %v2886 = vpack.c.b16 %v2875, %v2874
    %v2887 = vpack.c.b16 %v2877, %v2876
    %v2888 = vpack.c.b16 %v2879, %v2878
    %v2889 = vpack.c.b16 %v2881, %v2880
    %2898 = vmatprep.subr.bf16.mxu0 0
    %2899 = vmatpush1.bf16.msra.mxu0 %v2882
    %2900 = vmatprep.subr.bf16.mxu0 0
    %2901 = vmatpush1.bf16.msra.mxu0 %v2883
    %2902 = vmatprep.subr.bf16.mxu0 0
    %2903 = vmatpush1.bf16.msra.mxu0 %v2884
    %2904 = vmatprep.subr.bf16.mxu0 0
    %2905 = vmatpush1.bf16.msra.mxu0 %v2885
    %2906 = vmatprep.subr.bf16.mxu0 0
    %2907 = vmatpush1.bf16.msra.mxu0 %v2886
    %2908 = vmatprep.subr.bf16.mxu0 0
    %2909 = vmatpush1.bf16.msra.mxu0 %v2887
    %2910 = vmatprep.subr.bf16.mxu0 0
    %2911 = vmatpush1.bf16.msra.mxu0 %v2888
    %2912 = vmatprep.subr.bf16.mxu0 0
    %2913 = vmatpush1.bf16.msra.mxu0 %v2889
    %2914 = vmatprep.subr.bf16.mxu0 0
    %2915 = vmatpush1.bf16.msra.mxu0 0
    %2916 = vmatprep.subr.bf16.mxu0 0
    %2917 = vmatpush1.bf16.msra.mxu0 0
    %2918 = vmatprep.subr.bf16.mxu0 0
    %2919 = vmatpush1.bf16.msra.mxu0 0
    %2920 = vmatprep.subr.bf16.mxu0 0
    %2921 = vmatpush1.bf16.msra.mxu0 0
    %2922 = vmatprep.subr.bf16.mxu0 0
    %2923 = vmatpush1.bf16.msra.mxu0 0
    %2924 = vmatprep.subr.bf16.mxu0 0
    %2925 = vmatpush1.bf16.msra.mxu0 0
    %2926 = vmatprep.subr.bf16.mxu0 0
    %2927 = vmatpush1.bf16.msra.mxu0 0
    %2928 = vmatprep.subr.bf16.mxu0 0
    %2929 = vmatpush1.bf16.msra.mxu0 0
    %2930 = vmatprep.mubr.bf16.mxu0 0
    %2931 = vmatmul.mubr.bf16.gmra.mrb[0].mxu0 %v2833
    %v2932 = vpop.f32.mrb[0].mxu0
    %v2933 = vadd.f32 0.0, %v2932
    %v2934 = vpop.f32.mrb[0].mxu0
    %v2935 = vpop.f32.mrb[0].mxu0
    %v2936 = vpop.f32.mrb[0].mxu0
    %2937 = vdwg.mxu0
    %v2954 = vunpack.c.l.b16 %v2817
    %v2955 = vunpack.c.l.b16 %v2818
    %v2956 = vunpack.c.l.b16 %v2819
    %v2957 = vunpack.c.l.b16 %v2820
    %v2958 = vunpack.c.l.b16 %v2821
    %v2959 = vunpack.c.l.b16 %v2822
    %v2960 = vunpack.c.l.b16 %v2823
    %v2961 = vunpack.c.l.b16 %v2824
    %v2962 = vunpack.c.l.b16 %v2825
    %v2963 = vunpack.c.l.b16 %v2826
    %v2964 = vunpack.c.l.b16 %v2827
    %v2965 = vunpack.c.l.b16 %v2828
    %v2966 = vunpack.c.l.b16 %v2829
    %v2967 = vunpack.c.l.b16 %v2830
    %v2968 = vunpack.c.l.b16 %v2831
    %v2969 = vunpack.c.l.b16 %v2832
    %v2970 = vpack.c.b16 %v2955, %v2954
    %v2971 = vpack.c.b16 %v2957, %v2956
    %v2972 = vpack.c.b16 %v2959, %v2958
    %v2973 = vpack.c.b16 %v2961, %v2960
    %v2974 = vpack.c.b16 %v2963, %v2962
    %v2975 = vpack.c.b16 %v2965, %v2964
    %v2976 = vpack.c.b16 %v2967, %v2966
    %v2977 = vpack.c.b16 %v2969, %v2968
    %2986 = vmatprep.subr.bf16.mxu0 0
    %2987 = vmatpush1.bf16.msra.mxu0 %v2970
    %2988 = vmatprep.subr.bf16.mxu0 0
    %2989 = vmatpush1.bf16.msra.mxu0 %v2971
    %2990 = vmatprep.subr.bf16.mxu0 0
    %2991 = vmatpush1.bf16.msra.mxu0 %v2972
    %2992 = vmatprep.subr.bf16.mxu0 0
    %2993 = vmatpush1.bf16.msra.mxu0 %v2973
    %2994 = vmatprep.subr.bf16.mxu0 0
    %2995 = vmatpush1.bf16.msra.mxu0 %v2974
    %2996 = vmatprep.subr.bf16.mxu0 0
    %2997 = vmatpush1.bf16.msra.mxu0 %v2975
    %2998 = vmatprep.subr.bf16.mxu0 0
    %2999 = vmatpush1.bf16.msra.mxu0 %v2976
    %3000 = vmatprep.subr.bf16.mxu0 0
    %3001 = vmatpush1.bf16.msra.mxu0 %v2977
    %3002 = vmatprep.subr.bf16.mxu0 0
    %3003 = vmatpush1.bf16.msra.mxu0 0
    %3004 = vmatprep.subr.bf16.mxu0 0
    %3005 = vmatpush1.bf16.msra.mxu0 0
    %3006 = vmatprep.subr.bf16.mxu0 0
    %3007 = vmatpush1.bf16.msra.mxu0 0
    %3008 = vmatprep.subr.bf16.mxu0 0
    %3009 = vmatpush1.bf16.msra.mxu0 0
    %3010 = vmatprep.subr.bf16.mxu0 0
    %3011 = vmatpush1.bf16.msra.mxu0 0
    %3012 = vmatprep.subr.bf16.mxu0 0
    %3013 = vmatpush1.bf16.msra.mxu0 0
    %3014 = vmatprep.subr.bf16.mxu0 0
    %3015 = vmatpush1.bf16.msra.mxu0 0
    %3016 = vmatprep.subr.bf16.mxu0 0
    %3017 = vmatpush1.bf16.msra.mxu0 0
    %3018 = vmatprep.mubr.bf16.mxu0 0
    %3019 = vmatmul.mubr.bf16.gmra.mrb[0].mxu0 %v2816
    %v3020 = vpop.f32.mrb[0].mxu0
    %v3021 = vadd.f32 %v2933, %v3020
    %v3022 = vpop.f32.mrb[0].mxu0
    %v3023 = vpop.f32.mrb[0].mxu0
    %v3024 = vpop.f32.mrb[0].mxu0
    %3025 = vdwg.mxu0
    %v3026 = vld [vmem:[%s6] sm:$0x1]
    %v3028 = vlaneseq
    %v3029 = vshrl.u32 %v3028, 7
    %v3030 = vsub.s32 0, %v3029
    %v3031 = vrot.slane %v3026, %v3030
    %v3033 = vadd.f32 %v3021, %v3031
    %v3034 = vmul.f32 %v3033, 0.5
    %v3035 = vsel %vm61, %v3033, %v3034
    %v3036 = vtanh.pop %v3035
    %v3037 = vmul.f32 %v3036, 0.5
    %v3038 = vadd.f32 %v3037, 0.5
    %v3039 = vsel %vm61, %v3036, %v3038
    %3040 = vrot.lane.b32.xlu0 %v3039, 96
    %v3041 = vpop.permute.xlu0 %3040
    %3042 = vrot.lane.b32.xlu0 %v3039, 64
    %v3043 = vpop.permute.xlu0 %3042
    %3044 = vrot.lane.b32.xlu0 %v3039, 32
    %v3045 = vpop.permute.xlu0 %3044
    %v3046 = vmul.f32 %v3041, %v2688
    %v3047 = vmul.f32 %v3039, %v3043
    %v3048 = vadd.f32 %v3046, %v3047
    %v3049 = vtanh.pop %v3048
    %v3050 = vmul.f32 %v3045, %v3049
    %s3051 = scalar_lea.vmem [#allocation3], 56
    %3052 = vst [vmem:[%s3051] sm:$0xff] %v3050
    %v3053 = vld [vmem:[#allocation3] sm:$0xff]
    %v3054 = vld [vmem:[#allocation3 + $0x8] sm:$0xff]
    %v3055 = vld [vmem:[#allocation3 + $0x10] sm:$0xff]
    %v3056 = vld [vmem:[#allocation3 + $0x18] sm:$0xff]
    %v3057 = vld [vmem:[#allocation3 + $0x20] sm:$0xff]
    %v3058 = vld [vmem:[#allocation3 + $0x28] sm:$0xff]
    %v3059 = vld [vmem:[#allocation3 + $0x30] sm:$0xff]
    %v3060 = vld [vmem:[#allocation3 + $0x38] sm:$0xff]
    %v3061 = vld [vmem:[%s7] sm:$0x1]
    %v3063 = vlaneseq
    %v3064 = vshrl.u32 %v3063, 7
    %v3065 = vsub.s32 0, %v3064
    %v3066 = vrot.slane %v3061, %v3065
    %v3068 = vmul.f32 %v3053, %v3066
    %v3069 = vmul.f32 %v3054, %v3066
    %v3070 = vmul.f32 %v3055, %v3066
    %v3071 = vmul.f32 %v3056, %v3066
    %v3072 = vmul.f32 %v3057, %v3066
    %v3073 = vmul.f32 %v3058, %v3066
    %v3074 = vmul.f32 %v3059, %v3066
    %v3075 = vmul.f32 %v3060, %v3066
    %3076 = vadd.xlane.f32.xlu0 %v3068
    %v3077 = vpop.xlane.xlu0 %3076
    %3078 = vadd.xlane.f32.xlu0 %v3069
    %v3079 = vpop.xlane.xlu0 %3078
    %3080 = vadd.xlane.f32.xlu0 %v3070
    %v3081 = vpop.xlane.xlu0 %3080
    %3082 = vadd.xlane.f32.xlu0 %v3071
    %v3083 = vpop.xlane.xlu0 %3082
    %3084 = vadd.xlane.f32.xlu0 %v3072
    %v3085 = vpop.xlane.xlu0 %3084
    %3086 = vadd.xlane.f32.xlu0 %v3073
    %v3087 = vpop.xlane.xlu0 %3086
    %3088 = vadd.xlane.f32.xlu0 %v3074
    %v3089 = vpop.xlane.xlu0 %3088
    %3090 = vadd.xlane.f32.xlu0 %v3075
    %v3091 = vpop.xlane.xlu0 %3090
    %v3092 = vld [vmem:[#allocation4] sm:$0x1]
    %v3094 = vlaneseq
    %v3095 = vshrl.u32 %v3094, 7
    %v3096 = vsub.s32 0, %v3095
    %v3097 = vrot.slane %v3092, %v3096
    %v3099 = vadd.f32 %v3077, %v3097
    %v3100 = vadd.f32 %v3079, %v3097
    %v3101 = vadd.f32 %v3081, %v3097
    %v3102 = vadd.f32 %v3083, %v3097
    %v3103 = vadd.f32 %v3085, %v3097
    %v3104 = vadd.f32 %v3087, %v3097
    %v3105 = vadd.f32 %v3089, %v3097
    %v3106 = vadd.f32 %v3091, %v3097
    %vm3107 = vcmask 7168
    %v3108 = vsel %vm3107, %v3099, -inf
    %v3109 = vsel %vm3107, %v3100, -inf
    %v3110 = vsel %vm3107, %v3101, -inf
    %v3111 = vsel %vm3107, %v3102, -inf
    %v3112 = vsel %vm3107, %v3103, -inf
    %v3113 = vmax.f32 %v3108, %v3112
    %v3114 = vsel %vm3107, %v3104, -inf
    %v3115 = vmax.f32 %v3109, %v3114
    %v3116 = vsel %vm3107, %v3105, -inf
    %v3117 = vmax.f32 %v3110, %v3116
    %v3118 = vsel %vm3107, %v3106, -inf
    %v3119 = vmax.f32 %v3111, %v3118
    %v3120 = vmax.f32 %v3113, %v3115
    %v3121 = vmax.f32 %v3117, %v3119
    %v3122 = vmax.f32 %v3120, %v3121
    %v3123 = vsub.f32 %v3099, %v3122
    %v3124 = vsub.f32 %v3100, %v3122
    %v3125 = vsub.f32 %v3101, %v3122
    %v3126 = vsub.f32 %v3102, %v3122
    %v3127 = vsub.f32 %v3103, %v3122
    %v3128 = vsub.f32 %v3104, %v3122
    %v3129 = vsub.f32 %v3105, %v3122
    %v3130 = vsub.f32 %v3106, %v3122
    %v3131 = vmul.f32 %v3123, 1.442695
    %v3132 = vpow.pop %v3131
    %v3133 = vmul.f32 %v3124, 1.442695
    %v3134 = vpow.pop %v3133
    %v3135 = vmul.f32 %v3125, 1.442695
    %v3136 = vpow.pop %v3135
    %v3137 = vmul.f32 %v3126, 1.442695
    %v3138 = vpow.pop %v3137
    %v3139 = vmul.f32 %v3127, 1.442695
    %v3140 = vpow.pop %v3139
    %v3141 = vmul.f32 %v3128, 1.442695
    %v3142 = vpow.pop %v3141
    %v3143 = vmul.f32 %v3129, 1.442695
    %v3144 = vpow.pop %v3143
    %v3145 = vmul.f32 %v3130, 1.442695
    %v3146 = vpow.pop %v3145
    %v3147 = vsel %vm3107, %v3132, 0.0
    %v3148 = vsel %vm3107, %v3134, 0.0
    %v3149 = vadd.f32 %v3147, %v3148
    %v3150 = vsel %vm3107, %v3136, 0.0
    %v3151 = vadd.f32 %v3149, %v3150
    %v3152 = vsel %vm3107, %v3138, 0.0
    %v3153 = vadd.f32 %v3151, %v3152
    %v3154 = vsel %vm3107, %v3140, 0.0
    %v3155 = vadd.f32 %v3153, %v3154
    %v3156 = vsel %vm3107, %v3142, 0.0
    %v3157 = vadd.f32 %v3155, %v3156
    %v3158 = vsel %vm3107, %v3144, 0.0
    %v3159 = vadd.f32 %v3157, %v3158
    %v3160 = vsel %vm3107, %v3146, 0.0
    %v3161 = vadd.f32 %v3159, %v3160
    %v3162 = vrcp.pop %v3161
    %v3163 = vmul.f32 %v3132, %v3162
    %v3164 = vmul.f32 %v3134, %v3162
    %v3165 = vmul.f32 %v3136, %v3162
    %v3166 = vmul.f32 %v3138, %v3162
    %v3167 = vmul.f32 %v3140, %v3162
    %v3168 = vmul.f32 %v3142, %v3162
    %v3169 = vmul.f32 %v3144, %v3162
    %v3170 = vmul.f32 %v3146, %v3162
    %3172 = vset.pattern.permute.xlu0 0
    %3173 = vperm.xlu0 %3172, %v3163
    %v3174 = vpop.permute.xlu0 %3173
    %3177 = vset.pattern.permute.xlu0 0
    %3178 = vperm.xlu0 %3177, %v3164
    %v3179 = vpop.permute.xlu0 %3178
    %3182 = vset.pattern.permute.xlu0 0
    %3183 = vperm.xlu0 %3182, %v3165
    %v3184 = vpop.permute.xlu0 %3183
    %3187 = vset.pattern.permute.xlu0 0
    %3188 = vperm.xlu0 %3187, %v3166
    %v3189 = vpop.permute.xlu0 %3188
    %3192 = vset.pattern.permute.xlu0 0
    %3193 = vperm.xlu0 %3192, %v3167
    %v3194 = vpop.permute.xlu0 %3193
    %3197 = vset.pattern.permute.xlu0 0
    %3198 = vperm.xlu0 %3197, %v3168
    %v3199 = vpop.permute.xlu0 %3198
    %3202 = vset.pattern.permute.xlu0 0
    %3203 = vperm.xlu0 %3202, %v3169
    %v3204 = vpop.permute.xlu0 %3203
    %3207 = vset.pattern.permute.xlu0 0
    %3208 = vperm.xlu0 %3207, %v3170
    %v3209 = vpop.permute.xlu0 %3208
    %v3211 = vmul.f32 %v3174, %v3053
    %v3212 = vmul.f32 %v3179, %v3054
    %v3213 = vmul.f32 %v3184, %v3055
    %v3214 = vmul.f32 %v3189, %v3056
    %v3215 = vmul.f32 %v3194, %v3057
    %v3216 = vmul.f32 %v3199, %v3058
    %v3217 = vmul.f32 %v3204, %v3059
    %v3218 = vmul.f32 %v3209, %v3060
    %v3219 = vadd.f32 %v3211, %v3212
    %v3220 = vadd.f32 %v3219, %v3213
    %v3221 = vadd.f32 %v3220, %v3214
    %v3222 = vadd.f32 %v3221, %v3215
    %v3223 = vadd.f32 %v3222, %v3216
    %v3224 = vadd.f32 %v3223, %v3217
    %v3225 = vadd.f32 %v3224, %v3218
    %v3226 = vld [vmem:[%s9] sm:$0x1]
    %v3228 = vlaneseq
    %v3229 = vshrl.u32 %v3228, 7
    %v3230 = vsub.s32 0, %v3229
    %v3231 = vrot.slane %v3226, %v3230
    %v3233 = vmul.f32 %v3225, %v3231
    %3234 = vadd.xlane.f32.xlu0 %v3233
    %v3235 = vpop.xlane.xlu0 %3234
    %v3236 = vld [vmem:[#allocation5] sm:$0x1]
    %v3238 = vlaneseq
    %v3239 = vshrl.u32 %v3238, 7
    %v3240 = vsub.s32 0, %v3239
    %v3241 = vrot.slane %v3236, %v3240
    %v3243 = vadd.f32 %v3235, %v3241
    %3244 = vst.msk [vmem:[%s11] sm:$0xff] %vm3107, %v3243
    // Predicated region
    $region50: #{lstm_with_attention_forward.1} parent=1 // pred_check
      _
    $region51: #{lstm_with_attention_forward.1} parent=1 // pred_check_branch
      %3246 = sbr.rel (0) target = $region53
    $region52: #{lstm_with_attention_forward.1} parent=1 // pred_region
      _
    $region53: #{lstm_with_attention_forward.1} parent=1 // pred_fallthru
      _
    // Predicated region
    $region54: #{lstm_with_attention_forward.1} parent=1 // pred_check
      _
    $region55: #{lstm_with_attention_forward.1} parent=1 // pred_check_branch
      %3248 = sbr.rel (0) target = $region57
    $region56: #{lstm_with_attention_forward.1} parent=1 // pred_region
      _
    $region57: #{lstm_with_attention_forward.1} parent=1 // pred_fallthru
      _
    %3249 = vsyncpa [#allocation7], 1

</llo_original>
